<compile_context>
chip_gen: v6e
topology: v6e:2x2x1
jax: 0.10.0
libtpu: 0.0.40
codegen_flags: <defaults>
</compile_context>

<pallas_src>
import functools

import jax
import jax.numpy as jnp
import numpy as np
from jax.experimental import pallas as pl
from jax.experimental.pallas import tpu as pltpu

HEATMAP_SIZE = 3          # hyp.flow_heatmap_size
TEMPERATURE = 0.07


def _acc(acc, alpha, e, d):
    """Unnormalized soft-argmax marginal update; skip/simplify trivial offsets."""
    if d == 0:
        return acc * alpha
    if d == 1:
        return acc * alpha + e
    if d == -1:
        return acc * alpha - e
    return acc * alpha + jnp.float32(d) * e


def _flow_kernel(f0_ref, f1_ref, mask_ref, o_ref, *, hs, W, HW, N):
    """Correlation + online softmax + factored soft-argmax for one batch item.

    f0_ref, f1_ref: (1, C, N) VMEM tiles, N = D*H*W on the lane axis.
    mask_ref:       (1, 1, N) interior mask (border of max_disp zeroed).
    o_ref:          (1, 3, N) flow output, channel order (z, y, x).
    """
    half = hs // 2
    inv_t = jnp.float32(1.0 / TEMPERATURE)

    # Fold the temperature into feat0 once (C*N mults) instead of scaling each
    # of the hs^3 score volumes (hs^3 * N mults).
    f0 = f0_ref[0] * inv_t          # (C, N)
    f1 = f1_ref[0]                  # (C, N)

    # Online-softmax state (the only live (1, N) volumes across the k-loop).
    m = jnp.full((1, N), -jnp.inf, dtype=jnp.float32)   # running max
    den = jnp.zeros((1, N), dtype=jnp.float32)          # running sum of exps
    sz = jnp.zeros((1, N), dtype=jnp.float32)           # unnormalized E[dz]
    sy = jnp.zeros((1, N), dtype=jnp.float32)           # unnormalized E[dy]
    sx = jnp.zeros((1, N), dtype=jnp.float32)           # unnormalized E[dx]

    for dz in range(-half, half + 1):
        for dy in range(-half, half + 1):
            for dx in range(-half, half + 1):
                off = dz * HW + dy * W + dx
                # Flat roll == zero-padded shifted sample for every interior
                # voxel; border voxels (where wrap differs) are masked to 0.
                if off == 0:
                    f1s = f1
                else:
                    f1s = pltpu.roll(f1, (-off) % N, axis=1)
                # Per-voxel correlation: VPU multiply + XLU cross-sublane reduce.
                s = jnp.sum(f0 * f1s, axis=0, keepdims=True)     # (1, N)

                m_new = jnp.maximum(m, s)
                alpha = jnp.exp(m - m_new)      # rescale factor (EUP)
                e = jnp.exp(s - m_new)          # unnormalized prob (EUP)

                den = den * alpha + e
                sz = _acc(sz, alpha, e, dz)
                sy = _acc(sy, alpha, e, dy)
                sx = _acc(sx, alpha, e, dx)
                m = m_new

    # Single normalization per axis: reciprocal (EUP, approx) fused with the mask.
    scale = pl.reciprocal(den, approx=True) * mask_ref[0]        # (1, N)
    o_ref[0, 0:1, :] = sz * scale
    o_ref[0, 1:2, :] = sy * scale
    o_ref[0, 2:3, :] = sx * scale


def flownet_forward(feat0, feat1, heatmap_size=HEATMAP_SIZE):
    """Returns (total_loss, flow_total) like FlowNet.forward(feat0, feat1)."""
    B, C, D, H, W = feat0.shape
    assert feat1.shape == feat0.shape
    hs = int(heatmap_size)
    assert hs % 2 == 1, "flow_heatmap_size must be odd"
    md = (hs - 1) // 2                      # max_disp (dilation = 1)
    N = D * H * W
    HW = H * W

    # Lane-dense views: spatial dims folded onto the lane axis (free reshapes).
    f0 = feat0.astype(jnp.float32).reshape(B, C, N)
    f1 = feat1.astype(jnp.float32).reshape(B, C, N)

    # Interior mask, built exactly like the PyTorch module (md==0 -> all zeros).
    mask_np = np.zeros((D, H, W), np.float32)
    if md > 0:
        mask_np[md:-md, md:-md, md:-md] = 1.0
    mask = jnp.asarray(mask_np.reshape(1, 1, N))

    kernel = functools.partial(_flow_kernel, hs=hs, W=W, HW=HW, N=N)

    flow_flat = pl.pallas_call(
        kernel,
        out_shape=jax.ShapeDtypeStruct((B, 3, N), jnp.float32),
        grid=(B,),
        in_specs=[
            pl.BlockSpec((1, C, N), lambda b: (b, 0, 0)),
            pl.BlockSpec((1, C, N), lambda b: (b, 0, 0)),
            pl.BlockSpec((1, 1, N), lambda b: (0, 0, 0)),
        ],
        out_specs=pl.BlockSpec((1, 3, N), lambda b: (b, 0, 0)),
        compiler_params=pltpu.CompilerParams(
            dimension_semantics=("parallel",),
            vmem_limit_bytes=32 * 1024 * 1024),
    )(f0, f1, mask)

    flow_total = flow_flat.reshape(B, 3, D, H, W)
    total_loss = jnp.zeros((), jnp.float32)   # flow_g is None -> loss stays 0
    return total_loss, flow_total


def _flownet_ref(feat0, feat1, heatmap_size=HEATMAP_SIZE):
    """Pure-JAX reference (zero-padded correlation, like the PyTorch sampler)."""
    B, C, D, H, W = feat0.shape
    hs = heatmap_size
    md = (hs - 1) // 2
    half = hs // 2
    f0 = feat0.astype(jnp.float32)
    f1p = jnp.pad(feat1.astype(jnp.float32),
                  ((0, 0), (0, 0), (md, md), (md, md), (md, md)))
    ccs, offs = [], []
    for dz in range(hs):
        for dy in range(hs):
            for dx in range(hs):
                sl = jax.lax.dynamic_slice(f1p, (0, 0, dz, dy, dx),
                                           (B, C, D, H, W))
                ccs.append(jnp.sum(f0 * sl, axis=1))
                offs.append([dz - half, dy - half, dx - half])
    cc = jnp.stack(ccs, axis=1) / TEMPERATURE               # (B, K, D, H, W)
    p = jax.nn.softmax(cc, axis=1)
    offs = jnp.asarray(np.array(offs, np.float32))          # (K, 3)
    flow = jnp.einsum('bkdhw,kc->bcdhw', p, offs)
    mask = np.zeros((1, 1, D, H, W), np.float32)
    mask[:, :, md:-md, md:-md, md:-md] = 1.0
    return flow * jnp.asarray(mask)


if __name__ == "__main__":
    key = jax.random.PRNGKey(0)
    k0, k1 = jax.random.split(key)
    B, C, D, H, W = 2, 4, 8, 8, 8
    feat0 = jax.random.normal(k0, (B, C, D, H, W), dtype=jnp.float32)
    feat1 = jax.random.normal(k1, (B, C, D, H, W), dtype=jnp.float32)

    total_loss, flow_total = jax.jit(flownet_forward)(feat0, feat1)
    jax.block_until_ready(flow_total)

    ref = _flownet_ref(feat0, feat1)
    # Tolerance accounts for pl.reciprocal(approx=True) and online-softmax
    # accumulation order; flow values are in [-1, 1], so 5e-3 is still a tight
    # structural check (sign / offset / mask errors would be O(0.1-1)).
    np.testing.assert_allclose(np.asarray(flow_total), np.asarray(ref),
                               rtol=5e-3, atol=5e-3)
    assert float(total_loss) == 0.0
    print("KERNEL_OK")
</pallas_src>

<mosaic_0001>
module attributes {stable_mosaic.version = 11 : i64} {
  func.func @_flow_kernel(%arg0: i32, %arg1: memref<1x4x512xf32, #tpu.memory_space<vmem>>, %arg2: memref<1x4x512xf32, #tpu.memory_space<vmem>>, %arg3: memref<1x1x512xf32, #tpu.memory_space<vmem>>, %arg4: memref<1x3x512xf32, #tpu.memory_space<vmem>>) attributes {dimension_semantics = [#tpu.dimension_semantics<parallel>], iteration_bounds = array<i64: 2>, scalar_prefetch = 0 : i64, scratch_operands = 0 : i64, tpu.core_type = #tpu.core_type<tc>, window_params = [{transform_indices = @transform_0, window_bounds = array<i64: 1, 4, 512>}, {transform_indices = @transform_1, window_bounds = array<i64: 1, 4, 512>}, {pipeline_mode = #tpu.pipeline_mode<synchronous>, transform_indices = @transform_2, window_bounds = array<i64: 1, 1, 512>}, {transform_indices = @transform_3, window_bounds = array<i64: 1, 3, 512>}]} {
    %c0 = arith.constant 0 : index
    %c0_0 = arith.constant 0 : index
    %c0_1 = arith.constant 0 : index
    %0 = vector.load %arg1[%c0, %c0_0, %c0_1] : memref<1x4x512xf32, #tpu.memory_space<vmem>>, vector<1x4x512xf32>
    %1 = vector.shape_cast %0 : vector<1x4x512xf32> to vector<4x512xf32>
    %cst = arith.constant 14.2857141 : f32
    %2 = vector.broadcast %cst : f32 to vector<4x512xf32>
    %3 = arith.mulf %1, %2 : vector<4x512xf32>
    %c0_2 = arith.constant 0 : index
    %c0_3 = arith.constant 0 : index
    %c0_4 = arith.constant 0 : index
    %4 = vector.load %arg2[%c0_2, %c0_3, %c0_4] : memref<1x4x512xf32, #tpu.memory_space<vmem>>, vector<1x4x512xf32>
    %5 = vector.shape_cast %4 : vector<1x4x512xf32> to vector<4x512xf32>
    %cst_5 = arith.constant 0xFF800000 : f32
    %6 = vector.broadcast %cst_5 : f32 to vector<1x512xf32>
    %cst_6 = arith.constant 0.000000e+00 : f32
    %7 = vector.broadcast %cst_6 : f32 to vector<1x512xf32>
    %cst_7 = arith.constant 0.000000e+00 : f32
    %8 = vector.broadcast %cst_7 : f32 to vector<1x512xf32>
    %cst_8 = arith.constant 0.000000e+00 : f32
    %9 = vector.broadcast %cst_8 : f32 to vector<1x512xf32>
    %cst_9 = arith.constant 0.000000e+00 : f32
    %10 = vector.broadcast %cst_9 : f32 to vector<1x512xf32>
    %c73_i32 = arith.constant 73 : i32
    %11 = tpu.dynamic_rotate %5 by %c73_i32 dim 1 : vector<4x512xf32>, i32 -> vector<4x512xf32>
    %12 = arith.mulf %3, %11 : vector<4x512xf32>
    %cst_10 = arith.constant dense<0.000000e+00> : vector<512xf32>
    %13 = vector.multi_reduction <add>, %12, %cst_10 [0] : vector<4x512xf32> to vector<512xf32>
    %14 = vector.shape_cast %13 : vector<512xf32> to vector<1x512xf32>
    %15 = arith.maximumf %6, %14 : vector<1x512xf32>
    %16 = arith.subf %6, %15 : vector<1x512xf32>
    %17 = math.exp %16 : vector<1x512xf32>
    %18 = arith.subf %14, %15 : vector<1x512xf32>
    %19 = math.exp %18 : vector<1x512xf32>
    %20 = arith.mulf %7, %17 : vector<1x512xf32>
    %21 = arith.addf %20, %19 : vector<1x512xf32>
    %22 = arith.mulf %8, %17 : vector<1x512xf32>
    %23 = arith.subf %22, %19 : vector<1x512xf32>
    %24 = arith.mulf %9, %17 : vector<1x512xf32>
    %25 = arith.subf %24, %19 : vector<1x512xf32>
    %26 = arith.mulf %10, %17 : vector<1x512xf32>
    %27 = arith.subf %26, %19 : vector<1x512xf32>
    %c72_i32 = arith.constant 72 : i32
    %28 = tpu.dynamic_rotate %5 by %c72_i32 dim 1 : vector<4x512xf32>, i32 -> vector<4x512xf32>
    %29 = arith.mulf %3, %28 : vector<4x512xf32>
    %cst_11 = arith.constant dense<0.000000e+00> : vector<512xf32>
    %30 = vector.multi_reduction <add>, %29, %cst_11 [0] : vector<4x512xf32> to vector<512xf32>
    %31 = vector.shape_cast %30 : vector<512xf32> to vector<1x512xf32>
    %32 = arith.maximumf %15, %31 : vector<1x512xf32>
    %33 = arith.subf %15, %32 : vector<1x512xf32>
    %34 = math.exp %33 : vector<1x512xf32>
    %35 = arith.subf %31, %32 : vector<1x512xf32>
    %36 = math.exp %35 : vector<1x512xf32>
    %37 = arith.mulf %21, %34 : vector<1x512xf32>
    %38 = arith.addf %37, %36 : vector<1x512xf32>
    %39 = arith.mulf %23, %34 : vector<1x512xf32>
    %40 = arith.subf %39, %36 : vector<1x512xf32>
    %41 = arith.mulf %25, %34 : vector<1x512xf32>
    %42 = arith.subf %41, %36 : vector<1x512xf32>
    %43 = arith.mulf %27, %34 : vector<1x512xf32>
    %c71_i32 = arith.constant 71 : i32
    %44 = tpu.dynamic_rotate %5 by %c71_i32 dim 1 : vector<4x512xf32>, i32 -> vector<4x512xf32>
    %45 = arith.mulf %3, %44 : vector<4x512xf32>
    %cst_12 = arith.constant dense<0.000000e+00> : vector<512xf32>
    %46 = vector.multi_reduction <add>, %45, %cst_12 [0] : vector<4x512xf32> to vector<512xf32>
    %47 = vector.shape_cast %46 : vector<512xf32> to vector<1x512xf32>
    %48 = arith.maximumf %32, %47 : vector<1x512xf32>
    %49 = arith.subf %32, %48 : vector<1x512xf32>
    %50 = math.exp %49 : vector<1x512xf32>
    %51 = arith.subf %47, %48 : vector<1x512xf32>
    %52 = math.exp %51 : vector<1x512xf32>
    %53 = arith.mulf %38, %50 : vector<1x512xf32>
    %54 = arith.addf %53, %52 : vector<1x512xf32>
    %55 = arith.mulf %40, %50 : vector<1x512xf32>
    %56 = arith.subf %55, %52 : vector<1x512xf32>
    %57 = arith.mulf %42, %50 : vector<1x512xf32>
    %58 = arith.subf %57, %52 : vector<1x512xf32>
    %59 = arith.mulf %43, %50 : vector<1x512xf32>
    %60 = arith.addf %59, %52 : vector<1x512xf32>
    %c65_i32 = arith.constant 65 : i32
    %61 = tpu.dynamic_rotate %5 by %c65_i32 dim 1 : vector<4x512xf32>, i32 -> vector<4x512xf32>
    %62 = arith.mulf %3, %61 : vector<4x512xf32>
    %cst_13 = arith.constant dense<0.000000e+00> : vector<512xf32>
    %63 = vector.multi_reduction <add>, %62, %cst_13 [0] : vector<4x512xf32> to vector<512xf32>
    %64 = vector.shape_cast %63 : vector<512xf32> to vector<1x512xf32>
    %65 = arith.maximumf %48, %64 : vector<1x512xf32>
    %66 = arith.subf %48, %65 : vector<1x512xf32>
    %67 = math.exp %66 : vector<1x512xf32>
    %68 = arith.subf %64, %65 : vector<1x512xf32>
    %69 = math.exp %68 : vector<1x512xf32>
    %70 = arith.mulf %54, %67 : vector<1x512xf32>
    %71 = arith.addf %70, %69 : vector<1x512xf32>
    %72 = arith.mulf %56, %67 : vector<1x512xf32>
    %73 = arith.subf %72, %69 : vector<1x512xf32>
    %74 = arith.mulf %58, %67 : vector<1x512xf32>
    %75 = arith.mulf %60, %67 : vector<1x512xf32>
    %76 = arith.subf %75, %69 : vector<1x512xf32>
    %c64_i32 = arith.constant 64 : i32
    %77 = tpu.dynamic_rotate %5 by %c64_i32 dim 1 : vector<4x512xf32>, i32 -> vector<4x512xf32>
    %78 = arith.mulf %3, %77 : vector<4x512xf32>
    %cst_14 = arith.constant dense<0.000000e+00> : vector<512xf32>
    %79 = vector.multi_reduction <add>, %78, %cst_14 [0] : vector<4x512xf32> to vector<512xf32>
    %80 = vector.shape_cast %79 : vector<512xf32> to vector<1x512xf32>
    %81 = arith.maximumf %65, %80 : vector<1x512xf32>
    %82 = arith.subf %65, %81 : vector<1x512xf32>
    %83 = math.exp %82 : vector<1x512xf32>
    %84 = arith.subf %80, %81 : vector<1x512xf32>
    %85 = math.exp %84 : vector<1x512xf32>
    %86 = arith.mulf %71, %83 : vector<1x512xf32>
    %87 = arith.addf %86, %85 : vector<1x512xf32>
    %88 = arith.mulf %73, %83 : vector<1x512xf32>
    %89 = arith.subf %88, %85 : vector<1x512xf32>
    %90 = arith.mulf %74, %83 : vector<1x512xf32>
    %91 = arith.mulf %76, %83 : vector<1x512xf32>
    %c63_i32 = arith.constant 63 : i32
    %92 = tpu.dynamic_rotate %5 by %c63_i32 dim 1 : vector<4x512xf32>, i32 -> vector<4x512xf32>
    %93 = arith.mulf %3, %92 : vector<4x512xf32>
    %cst_15 = arith.constant dense<0.000000e+00> : vector<512xf32>
    %94 = vector.multi_reduction <add>, %93, %cst_15 [0] : vector<4x512xf32> to vector<512xf32>
    %95 = vector.shape_cast %94 : vector<512xf32> to vector<1x512xf32>
    %96 = arith.maximumf %81, %95 : vector<1x512xf32>
    %97 = arith.subf %81, %96 : vector<1x512xf32>
    %98 = math.exp %97 : vector<1x512xf32>
    %99 = arith.subf %95, %96 : vector<1x512xf32>
    %100 = math.exp %99 : vector<1x512xf32>
    %101 = arith.mulf %87, %98 : vector<1x512xf32>
    %102 = arith.addf %101, %100 : vector<1x512xf32>
    %103 = arith.mulf %89, %98 : vector<1x512xf32>
    %104 = arith.subf %103, %100 : vector<1x512xf32>
    %105 = arith.mulf %90, %98 : vector<1x512xf32>
    %106 = arith.mulf %91, %98 : vector<1x512xf32>
    %107 = arith.addf %106, %100 : vector<1x512xf32>
    %c57_i32 = arith.constant 57 : i32
    %108 = tpu.dynamic_rotate %5 by %c57_i32 dim 1 : vector<4x512xf32>, i32 -> vector<4x512xf32>
    %109 = arith.mulf %3, %108 : vector<4x512xf32>
    %cst_16 = arith.constant dense<0.000000e+00> : vector<512xf32>
    %110 = vector.multi_reduction <add>, %109, %cst_16 [0] : vector<4x512xf32> to vector<512xf32>
    %111 = vector.shape_cast %110 : vector<512xf32> to vector<1x512xf32>
    %112 = arith.maximumf %96, %111 : vector<1x512xf32>
    %113 = arith.subf %96, %112 : vector<1x512xf32>
    %114 = math.exp %113 : vector<1x512xf32>
    %115 = arith.subf %111, %112 : vector<1x512xf32>
    %116 = math.exp %115 : vector<1x512xf32>
    %117 = arith.mulf %102, %114 : vector<1x512xf32>
    %118 = arith.addf %117, %116 : vector<1x512xf32>
    %119 = arith.mulf %104, %114 : vector<1x512xf32>
    %120 = arith.subf %119, %116 : vector<1x512xf32>
    %121 = arith.mulf %105, %114 : vector<1x512xf32>
    %122 = arith.addf %121, %116 : vector<1x512xf32>
    %123 = arith.mulf %107, %114 : vector<1x512xf32>
    %124 = arith.subf %123, %116 : vector<1x512xf32>
    %c56_i32 = arith.constant 56 : i32
    %125 = tpu.dynamic_rotate %5 by %c56_i32 dim 1 : vector<4x512xf32>, i32 -> vector<4x512xf32>
    %126 = arith.mulf %3, %125 : vector<4x512xf32>
    %cst_17 = arith.constant dense<0.000000e+00> : vector<512xf32>
    %127 = vector.multi_reduction <add>, %126, %cst_17 [0] : vector<4x512xf32> to vector<512xf32>
    %128 = vector.shape_cast %127 : vector<512xf32> to vector<1x512xf32>
    %129 = arith.maximumf %112, %128 : vector<1x512xf32>
    %130 = arith.subf %112, %129 : vector<1x512xf32>
    %131 = math.exp %130 : vector<1x512xf32>
    %132 = arith.subf %128, %129 : vector<1x512xf32>
    %133 = math.exp %132 : vector<1x512xf32>
    %134 = arith.mulf %118, %131 : vector<1x512xf32>
    %135 = arith.addf %134, %133 : vector<1x512xf32>
    %136 = arith.mulf %120, %131 : vector<1x512xf32>
    %137 = arith.subf %136, %133 : vector<1x512xf32>
    %138 = arith.mulf %122, %131 : vector<1x512xf32>
    %139 = arith.addf %138, %133 : vector<1x512xf32>
    %140 = arith.mulf %124, %131 : vector<1x512xf32>
    %c55_i32 = arith.constant 55 : i32
    %141 = tpu.dynamic_rotate %5 by %c55_i32 dim 1 : vector<4x512xf32>, i32 -> vector<4x512xf32>
    %142 = arith.mulf %3, %141 : vector<4x512xf32>
    %cst_18 = arith.constant dense<0.000000e+00> : vector<512xf32>
    %143 = vector.multi_reduction <add>, %142, %cst_18 [0] : vector<4x512xf32> to vector<512xf32>
    %144 = vector.shape_cast %143 : vector<512xf32> to vector<1x512xf32>
    %145 = arith.maximumf %129, %144 : vector<1x512xf32>
    %146 = arith.subf %129, %145 : vector<1x512xf32>
    %147 = math.exp %146 : vector<1x512xf32>
    %148 = arith.subf %144, %145 : vector<1x512xf32>
    %149 = math.exp %148 : vector<1x512xf32>
    %150 = arith.mulf %135, %147 : vector<1x512xf32>
    %151 = arith.addf %150, %149 : vector<1x512xf32>
    %152 = arith.mulf %137, %147 : vector<1x512xf32>
    %153 = arith.subf %152, %149 : vector<1x512xf32>
    %154 = arith.mulf %139, %147 : vector<1x512xf32>
    %155 = arith.addf %154, %149 : vector<1x512xf32>
    %156 = arith.mulf %140, %147 : vector<1x512xf32>
    %157 = arith.addf %156, %149 : vector<1x512xf32>
    %c9_i32 = arith.constant 9 : i32
    %158 = tpu.dynamic_rotate %5 by %c9_i32 dim 1 : vector<4x512xf32>, i32 -> vector<4x512xf32>
    %159 = arith.mulf %3, %158 : vector<4x512xf32>
    %cst_19 = arith.constant dense<0.000000e+00> : vector<512xf32>
    %160 = vector.multi_reduction <add>, %159, %cst_19 [0] : vector<4x512xf32> to vector<512xf32>
    %161 = vector.shape_cast %160 : vector<512xf32> to vector<1x512xf32>
    %162 = arith.maximumf %145, %161 : vector<1x512xf32>
    %163 = arith.subf %145, %162 : vector<1x512xf32>
    %164 = math.exp %163 : vector<1x512xf32>
    %165 = arith.subf %161, %162 : vector<1x512xf32>
    %166 = math.exp %165 : vector<1x512xf32>
    %167 = arith.mulf %151, %164 : vector<1x512xf32>
    %168 = arith.addf %167, %166 : vector<1x512xf32>
    %169 = arith.mulf %153, %164 : vector<1x512xf32>
    %170 = arith.mulf %155, %164 : vector<1x512xf32>
    %171 = arith.subf %170, %166 : vector<1x512xf32>
    %172 = arith.mulf %157, %164 : vector<1x512xf32>
    %173 = arith.subf %172, %166 : vector<1x512xf32>
    %c8_i32 = arith.constant 8 : i32
    %174 = tpu.dynamic_rotate %5 by %c8_i32 dim 1 : vector<4x512xf32>, i32 -> vector<4x512xf32>
    %175 = arith.mulf %3, %174 : vector<4x512xf32>
    %cst_20 = arith.constant dense<0.000000e+00> : vector<512xf32>
    %176 = vector.multi_reduction <add>, %175, %cst_20 [0] : vector<4x512xf32> to vector<512xf32>
    %177 = vector.shape_cast %176 : vector<512xf32> to vector<1x512xf32>
    %178 = arith.maximumf %162, %177 : vector<1x512xf32>
    %179 = arith.subf %162, %178 : vector<1x512xf32>
    %180 = math.exp %179 : vector<1x512xf32>
    %181 = arith.subf %177, %178 : vector<1x512xf32>
    %182 = math.exp %181 : vector<1x512xf32>
    %183 = arith.mulf %168, %180 : vector<1x512xf32>
    %184 = arith.addf %183, %182 : vector<1x512xf32>
    %185 = arith.mulf %169, %180 : vector<1x512xf32>
    %186 = arith.mulf %171, %180 : vector<1x512xf32>
    %187 = arith.subf %186, %182 : vector<1x512xf32>
    %188 = arith.mulf %173, %180 : vector<1x512xf32>
    %c7_i32 = arith.constant 7 : i32
    %189 = tpu.dynamic_rotate %5 by %c7_i32 dim 1 : vector<4x512xf32>, i32 -> vector<4x512xf32>
    %190 = arith.mulf %3, %189 : vector<4x512xf32>
    %cst_21 = arith.constant dense<0.000000e+00> : vector<512xf32>
    %191 = vector.multi_reduction <add>, %190, %cst_21 [0] : vector<4x512xf32> to vector<512xf32>
    %192 = vector.shape_cast %191 : vector<512xf32> to vector<1x512xf32>
    %193 = arith.maximumf %178, %192 : vector<1x512xf32>
    %194 = arith.subf %178, %193 : vector<1x512xf32>
    %195 = math.exp %194 : vector<1x512xf32>
    %196 = arith.subf %192, %193 : vector<1x512xf32>
    %197 = math.exp %196 : vector<1x512xf32>
    %198 = arith.mulf %184, %195 : vector<1x512xf32>
    %199 = arith.addf %198, %197 : vector<1x512xf32>
    %200 = arith.mulf %185, %195 : vector<1x512xf32>
    %201 = arith.mulf %187, %195 : vector<1x512xf32>
    %202 = arith.subf %201, %197 : vector<1x512xf32>
    %203 = arith.mulf %188, %195 : vector<1x512xf32>
    %204 = arith.addf %203, %197 : vector<1x512xf32>
    %c1_i32 = arith.constant 1 : i32
    %205 = tpu.dynamic_rotate %5 by %c1_i32 dim 1 : vector<4x512xf32>, i32 -> vector<4x512xf32>
    %206 = arith.mulf %3, %205 : vector<4x512xf32>
    %cst_22 = arith.constant dense<0.000000e+00> : vector<512xf32>
    %207 = vector.multi_reduction <add>, %206, %cst_22 [0] : vector<4x512xf32> to vector<512xf32>
    %208 = vector.shape_cast %207 : vector<512xf32> to vector<1x512xf32>
    %209 = arith.maximumf %193, %208 : vector<1x512xf32>
    %210 = arith.subf %193, %209 : vector<1x512xf32>
    %211 = math.exp %210 : vector<1x512xf32>
    %212 = arith.subf %208, %209 : vector<1x512xf32>
    %213 = math.exp %212 : vector<1x512xf32>
    %214 = arith.mulf %199, %211 : vector<1x512xf32>
    %215 = arith.addf %214, %213 : vector<1x512xf32>
    %216 = arith.mulf %200, %211 : vector<1x512xf32>
    %217 = arith.mulf %202, %211 : vector<1x512xf32>
    %218 = arith.mulf %204, %211 : vector<1x512xf32>
    %219 = arith.subf %218, %213 : vector<1x512xf32>
    %220 = arith.mulf %3, %5 : vector<4x512xf32>
    %cst_23 = arith.constant dense<0.000000e+00> : vector<512xf32>
    %221 = vector.multi_reduction <add>, %220, %cst_23 [0] : vector<4x512xf32> to vector<512xf32>
    %222 = vector.shape_cast %221 : vector<512xf32> to vector<1x512xf32>
    %223 = arith.maximumf %209, %222 : vector<1x512xf32>
    %224 = arith.subf %209, %223 : vector<1x512xf32>
    %225 = math.exp %224 : vector<1x512xf32>
    %226 = arith.subf %222, %223 : vector<1x512xf32>
    %227 = math.exp %226 : vector<1x512xf32>
    %228 = arith.mulf %215, %225 : vector<1x512xf32>
    %229 = arith.addf %228, %227 : vector<1x512xf32>
    %230 = arith.mulf %216, %225 : vector<1x512xf32>
    %231 = arith.mulf %217, %225 : vector<1x512xf32>
    %232 = arith.mulf %219, %225 : vector<1x512xf32>
    %c511_i32 = arith.constant 511 : i32
    %233 = tpu.dynamic_rotate %5 by %c511_i32 dim 1 : vector<4x512xf32>, i32 -> vector<4x512xf32>
    %234 = arith.mulf %3, %233 : vector<4x512xf32>
    %cst_24 = arith.constant dense<0.000000e+00> : vector<512xf32>
    %235 = vector.multi_reduction <add>, %234, %cst_24 [0] : vector<4x512xf32> to vector<512xf32>
    %236 = vector.shape_cast %235 : vector<512xf32> to vector<1x512xf32>
    %237 = arith.maximumf %223, %236 : vector<1x512xf32>
    %238 = arith.subf %223, %237 : vector<1x512xf32>
    %239 = math.exp %238 : vector<1x512xf32>
    %240 = arith.subf %236, %237 : vector<1x512xf32>
    %241 = math.exp %240 : vector<1x512xf32>
    %242 = arith.mulf %229, %239 : vector<1x512xf32>
    %243 = arith.addf %242, %241 : vector<1x512xf32>
    %244 = arith.mulf %230, %239 : vector<1x512xf32>
    %245 = arith.mulf %231, %239 : vector<1x512xf32>
    %246 = arith.mulf %232, %239 : vector<1x512xf32>
    %247 = arith.addf %246, %241 : vector<1x512xf32>
    %c505_i32 = arith.constant 505 : i32
    %248 = tpu.dynamic_rotate %5 by %c505_i32 dim 1 : vector<4x512xf32>, i32 -> vector<4x512xf32>
    %249 = arith.mulf %3, %248 : vector<4x512xf32>
    %cst_25 = arith.constant dense<0.000000e+00> : vector<512xf32>
    %250 = vector.multi_reduction <add>, %249, %cst_25 [0] : vector<4x512xf32> to vector<512xf32>
    %251 = vector.shape_cast %250 : vector<512xf32> to vector<1x512xf32>
    %252 = arith.maximumf %237, %251 : vector<1x512xf32>
    %253 = arith.subf %237, %252 : vector<1x512xf32>
    %254 = math.exp %253 : vector<1x512xf32>
    %255 = arith.subf %251, %252 : vector<1x512xf32>
    %256 = math.exp %255 : vector<1x512xf32>
    %257 = arith.mulf %243, %254 : vector<1x512xf32>
    %258 = arith.addf %257, %256 : vector<1x512xf32>
    %259 = arith.mulf %244, %254 : vector<1x512xf32>
    %260 = arith.mulf %245, %254 : vector<1x512xf32>
    %261 = arith.addf %260, %256 : vector<1x512xf32>
    %262 = arith.mulf %247, %254 : vector<1x512xf32>
    %263 = arith.subf %262, %256 : vector<1x512xf32>
    %c504_i32 = arith.constant 504 : i32
    %264 = tpu.dynamic_rotate %5 by %c504_i32 dim 1 : vector<4x512xf32>, i32 -> vector<4x512xf32>
    %265 = arith.mulf %3, %264 : vector<4x512xf32>
    %cst_26 = arith.constant dense<0.000000e+00> : vector<512xf32>
    %266 = vector.multi_reduction <add>, %265, %cst_26 [0] : vector<4x512xf32> to vector<512xf32>
    %267 = vector.shape_cast %266 : vector<512xf32> to vector<1x512xf32>
    %268 = arith.maximumf %252, %267 : vector<1x512xf32>
    %269 = arith.subf %252, %268 : vector<1x512xf32>
    %270 = math.exp %269 : vector<1x512xf32>
    %271 = arith.subf %267, %268 : vector<1x512xf32>
    %272 = math.exp %271 : vector<1x512xf32>
    %273 = arith.mulf %258, %270 : vector<1x512xf32>
    %274 = arith.addf %273, %272 : vector<1x512xf32>
    %275 = arith.mulf %259, %270 : vector<1x512xf32>
    %276 = arith.mulf %261, %270 : vector<1x512xf32>
    %277 = arith.addf %276, %272 : vector<1x512xf32>
    %278 = arith.mulf %263, %270 : vector<1x512xf32>
    %c503_i32 = arith.constant 503 : i32
    %279 = tpu.dynamic_rotate %5 by %c503_i32 dim 1 : vector<4x512xf32>, i32 -> vector<4x512xf32>
    %280 = arith.mulf %3, %279 : vector<4x512xf32>
    %cst_27 = arith.constant dense<0.000000e+00> : vector<512xf32>
    %281 = vector.multi_reduction <add>, %280, %cst_27 [0] : vector<4x512xf32> to vector<512xf32>
    %282 = vector.shape_cast %281 : vector<512xf32> to vector<1x512xf32>
    %283 = arith.maximumf %268, %282 : vector<1x512xf32>
    %284 = arith.subf %268, %283 : vector<1x512xf32>
    %285 = math.exp %284 : vector<1x512xf32>
    %286 = arith.subf %282, %283 : vector<1x512xf32>
    %287 = math.exp %286 : vector<1x512xf32>
    %288 = arith.mulf %274, %285 : vector<1x512xf32>
    %289 = arith.addf %288, %287 : vector<1x512xf32>
    %290 = arith.mulf %275, %285 : vector<1x512xf32>
    %291 = arith.mulf %277, %285 : vector<1x512xf32>
    %292 = arith.addf %291, %287 : vector<1x512xf32>
    %293 = arith.mulf %278, %285 : vector<1x512xf32>
    %294 = arith.addf %293, %287 : vector<1x512xf32>
    %c457_i32 = arith.constant 457 : i32
    %295 = tpu.dynamic_rotate %5 by %c457_i32 dim 1 : vector<4x512xf32>, i32 -> vector<4x512xf32>
    %296 = arith.mulf %3, %295 : vector<4x512xf32>
    %cst_28 = arith.constant dense<0.000000e+00> : vector<512xf32>
    %297 = vector.multi_reduction <add>, %296, %cst_28 [0] : vector<4x512xf32> to vector<512xf32>
    %298 = vector.shape_cast %297 : vector<512xf32> to vector<1x512xf32>
    %299 = arith.maximumf %283, %298 : vector<1x512xf32>
    %300 = arith.subf %283, %299 : vector<1x512xf32>
    %301 = math.exp %300 : vector<1x512xf32>
    %302 = arith.subf %298, %299 : vector<1x512xf32>
    %303 = math.exp %302 : vector<1x512xf32>
    %304 = arith.mulf %289, %301 : vector<1x512xf32>
    %305 = arith.addf %304, %303 : vector<1x512xf32>
    %306 = arith.mulf %290, %301 : vector<1x512xf32>
    %307 = arith.addf %306, %303 : vector<1x512xf32>
    %308 = arith.mulf %292, %301 : vector<1x512xf32>
    %309 = arith.subf %308, %303 : vector<1x512xf32>
    %310 = arith.mulf %294, %301 : vector<1x512xf32>
    %311 = arith.subf %310, %303 : vector<1x512xf32>
    %c456_i32 = arith.constant 456 : i32
    %312 = tpu.dynamic_rotate %5 by %c456_i32 dim 1 : vector<4x512xf32>, i32 -> vector<4x512xf32>
    %313 = arith.mulf %3, %312 : vector<4x512xf32>
    %cst_29 = arith.constant dense<0.000000e+00> : vector<512xf32>
    %314 = vector.multi_reduction <add>, %313, %cst_29 [0] : vector<4x512xf32> to vector<512xf32>
    %315 = vector.shape_cast %314 : vector<512xf32> to vector<1x512xf32>
    %316 = arith.maximumf %299, %315 : vector<1x512xf32>
    %317 = arith.subf %299, %316 : vector<1x512xf32>
    %318 = math.exp %317 : vector<1x512xf32>
    %319 = arith.subf %315, %316 : vector<1x512xf32>
    %320 = math.exp %319 : vector<1x512xf32>
    %321 = arith.mulf %305, %318 : vector<1x512xf32>
    %322 = arith.addf %321, %320 : vector<1x512xf32>
    %323 = arith.mulf %307, %318 : vector<1x512xf32>
    %324 = arith.addf %323, %320 : vector<1x512xf32>
    %325 = arith.mulf %309, %318 : vector<1x512xf32>
    %326 = arith.subf %325, %320 : vector<1x512xf32>
    %327 = arith.mulf %311, %318 : vector<1x512xf32>
    %c455_i32 = arith.constant 455 : i32
    %328 = tpu.dynamic_rotate %5 by %c455_i32 dim 1 : vector<4x512xf32>, i32 -> vector<4x512xf32>
    %329 = arith.mulf %3, %328 : vector<4x512xf32>
    %cst_30 = arith.constant dense<0.000000e+00> : vector<512xf32>
    %330 = vector.multi_reduction <add>, %329, %cst_30 [0] : vector<4x512xf32> to vector<512xf32>
    %331 = vector.shape_cast %330 : vector<512xf32> to vector<1x512xf32>
    %332 = arith.maximumf %316, %331 : vector<1x512xf32>
    %333 = arith.subf %316, %332 : vector<1x512xf32>
    %334 = math.exp %333 : vector<1x512xf32>
    %335 = arith.subf %331, %332 : vector<1x512xf32>
    %336 = math.exp %335 : vector<1x512xf32>
    %337 = arith.mulf %322, %334 : vector<1x512xf32>
    %338 = arith.addf %337, %336 : vector<1x512xf32>
    %339 = arith.mulf %324, %334 : vector<1x512xf32>
    %340 = arith.addf %339, %336 : vector<1x512xf32>
    %341 = arith.mulf %326, %334 : vector<1x512xf32>
    %342 = arith.subf %341, %336 : vector<1x512xf32>
    %343 = arith.mulf %327, %334 : vector<1x512xf32>
    %344 = arith.addf %343, %336 : vector<1x512xf32>
    %c449_i32 = arith.constant 449 : i32
    %345 = tpu.dynamic_rotate %5 by %c449_i32 dim 1 : vector<4x512xf32>, i32 -> vector<4x512xf32>
    %346 = arith.mulf %3, %345 : vector<4x512xf32>
    %cst_31 = arith.constant dense<0.000000e+00> : vector<512xf32>
    %347 = vector.multi_reduction <add>, %346, %cst_31 [0] : vector<4x512xf32> to vector<512xf32>
    %348 = vector.shape_cast %347 : vector<512xf32> to vector<1x512xf32>
    %349 = arith.maximumf %332, %348 : vector<1x512xf32>
    %350 = arith.subf %332, %349 : vector<1x512xf32>
    %351 = math.exp %350 : vector<1x512xf32>
    %352 = arith.subf %348, %349 : vector<1x512xf32>
    %353 = math.exp %352 : vector<1x512xf32>
    %354 = arith.mulf %338, %351 : vector<1x512xf32>
    %355 = arith.addf %354, %353 : vector<1x512xf32>
    %356 = arith.mulf %340, %351 : vector<1x512xf32>
    %357 = arith.addf %356, %353 : vector<1x512xf32>
    %358 = arith.mulf %342, %351 : vector<1x512xf32>
    %359 = arith.mulf %344, %351 : vector<1x512xf32>
    %360 = arith.subf %359, %353 : vector<1x512xf32>
    %c448_i32 = arith.constant 448 : i32
    %361 = tpu.dynamic_rotate %5 by %c448_i32 dim 1 : vector<4x512xf32>, i32 -> vector<4x512xf32>
    %362 = arith.mulf %3, %361 : vector<4x512xf32>
    %cst_32 = arith.constant dense<0.000000e+00> : vector<512xf32>
    %363 = vector.multi_reduction <add>, %362, %cst_32 [0] : vector<4x512xf32> to vector<512xf32>
    %364 = vector.shape_cast %363 : vector<512xf32> to vector<1x512xf32>
    %365 = arith.maximumf %349, %364 : vector<1x512xf32>
    %366 = arith.subf %349, %365 : vector<1x512xf32>
    %367 = math.exp %366 : vector<1x512xf32>
    %368 = arith.subf %364, %365 : vector<1x512xf32>
    %369 = math.exp %368 : vector<1x512xf32>
    %370 = arith.mulf %355, %367 : vector<1x512xf32>
    %371 = arith.addf %370, %369 : vector<1x512xf32>
    %372 = arith.mulf %357, %367 : vector<1x512xf32>
    %373 = arith.addf %372, %369 : vector<1x512xf32>
    %374 = arith.mulf %358, %367 : vector<1x512xf32>
    %375 = arith.mulf %360, %367 : vector<1x512xf32>
    %c447_i32 = arith.constant 447 : i32
    %376 = tpu.dynamic_rotate %5 by %c447_i32 dim 1 : vector<4x512xf32>, i32 -> vector<4x512xf32>
    %377 = arith.mulf %3, %376 : vector<4x512xf32>
    %cst_33 = arith.constant dense<0.000000e+00> : vector<512xf32>
    %378 = vector.multi_reduction <add>, %377, %cst_33 [0] : vector<4x512xf32> to vector<512xf32>
    %379 = vector.shape_cast %378 : vector<512xf32> to vector<1x512xf32>
    %380 = arith.maximumf %365, %379 : vector<1x512xf32>
    %381 = arith.subf %365, %380 : vector<1x512xf32>
    %382 = math.exp %381 : vector<1x512xf32>
    %383 = arith.subf %379, %380 : vector<1x512xf32>
    %384 = math.exp %383 : vector<1x512xf32>
    %385 = arith.mulf %371, %382 : vector<1x512xf32>
    %386 = arith.addf %385, %384 : vector<1x512xf32>
    %387 = arith.mulf %373, %382 : vector<1x512xf32>
    %388 = arith.addf %387, %384 : vector<1x512xf32>
    %389 = arith.mulf %374, %382 : vector<1x512xf32>
    %390 = arith.mulf %375, %382 : vector<1x512xf32>
    %391 = arith.addf %390, %384 : vector<1x512xf32>
    %c441_i32 = arith.constant 441 : i32
    %392 = tpu.dynamic_rotate %5 by %c441_i32 dim 1 : vector<4x512xf32>, i32 -> vector<4x512xf32>
    %393 = arith.mulf %3, %392 : vector<4x512xf32>
    %cst_34 = arith.constant dense<0.000000e+00> : vector<512xf32>
    %394 = vector.multi_reduction <add>, %393, %cst_34 [0] : vector<4x512xf32> to vector<512xf32>
    %395 = vector.shape_cast %394 : vector<512xf32> to vector<1x512xf32>
    %396 = arith.maximumf %380, %395 : vector<1x512xf32>
    %397 = arith.subf %380, %396 : vector<1x512xf32>
    %398 = math.exp %397 : vector<1x512xf32>
    %399 = arith.subf %395, %396 : vector<1x512xf32>
    %400 = math.exp %399 : vector<1x512xf32>
    %401 = arith.mulf %386, %398 : vector<1x512xf32>
    %402 = arith.addf %401, %400 : vector<1x512xf32>
    %403 = arith.mulf %388, %398 : vector<1x512xf32>
    %404 = arith.addf %403, %400 : vector<1x512xf32>
    %405 = arith.mulf %389, %398 : vector<1x512xf32>
    %406 = arith.addf %405, %400 : vector<1x512xf32>
    %407 = arith.mulf %391, %398 : vector<1x512xf32>
    %408 = arith.subf %407, %400 : vector<1x512xf32>
    %c440_i32 = arith.constant 440 : i32
    %409 = tpu.dynamic_rotate %5 by %c440_i32 dim 1 : vector<4x512xf32>, i32 -> vector<4x512xf32>
    %410 = arith.mulf %3, %409 : vector<4x512xf32>
    %cst_35 = arith.constant dense<0.000000e+00> : vector<512xf32>
    %411 = vector.multi_reduction <add>, %410, %cst_35 [0] : vector<4x512xf32> to vector<512xf32>
    %412 = vector.shape_cast %411 : vector<512xf32> to vector<1x512xf32>
    %413 = arith.maximumf %396, %412 : vector<1x512xf32>
    %414 = arith.subf %396, %413 : vector<1x512xf32>
    %415 = math.exp %414 : vector<1x512xf32>
    %416 = arith.subf %412, %413 : vector<1x512xf32>
    %417 = math.exp %416 : vector<1x512xf32>
    %418 = arith.mulf %402, %415 : vector<1x512xf32>
    %419 = arith.addf %418, %417 : vector<1x512xf32>
    %420 = arith.mulf %404, %415 : vector<1x512xf32>
    %421 = arith.addf %420, %417 : vector<1x512xf32>
    %422 = arith.mulf %406, %415 : vector<1x512xf32>
    %423 = arith.addf %422, %417 : vector<1x512xf32>
    %424 = arith.mulf %408, %415 : vector<1x512xf32>
    %c439_i32 = arith.constant 439 : i32
    %425 = tpu.dynamic_rotate %5 by %c439_i32 dim 1 : vector<4x512xf32>, i32 -> vector<4x512xf32>
    %426 = arith.mulf %3, %425 : vector<4x512xf32>
    %cst_36 = arith.constant dense<0.000000e+00> : vector<512xf32>
    %427 = vector.multi_reduction <add>, %426, %cst_36 [0] : vector<4x512xf32> to vector<512xf32>
    %428 = vector.shape_cast %427 : vector<512xf32> to vector<1x512xf32>
    %429 = arith.maximumf %413, %428 : vector<1x512xf32>
    %430 = arith.subf %413, %429 : vector<1x512xf32>
    %431 = math.exp %430 : vector<1x512xf32>
    %432 = arith.subf %428, %429 : vector<1x512xf32>
    %433 = math.exp %432 : vector<1x512xf32>
    %434 = arith.mulf %419, %431 : vector<1x512xf32>
    %435 = arith.addf %434, %433 : vector<1x512xf32>
    %436 = arith.mulf %421, %431 : vector<1x512xf32>
    %437 = arith.addf %436, %433 : vector<1x512xf32>
    %438 = arith.mulf %423, %431 : vector<1x512xf32>
    %439 = arith.addf %438, %433 : vector<1x512xf32>
    %440 = arith.mulf %424, %431 : vector<1x512xf32>
    %441 = arith.addf %440, %433 : vector<1x512xf32>
    %442 = tpu.reciprocal %435 {approx = true} : vector<1x512xf32> -> vector<1x512xf32>
    %c0_37 = arith.constant 0 : index
    %c0_38 = arith.constant 0 : index
    %c0_39 = arith.constant 0 : index
    %443 = vector.load %arg3[%c0_37, %c0_38, %c0_39] : memref<1x1x512xf32, #tpu.memory_space<vmem>>, vector<1x1x512xf32>
    %444 = vector.shape_cast %443 : vector<1x1x512xf32> to vector<1x512xf32>
    %445 = arith.mulf %442, %444 : vector<1x512xf32>
    %446 = arith.mulf %437, %445 : vector<1x512xf32>
    %c0_40 = arith.constant 0 : index
    %c0_41 = arith.constant 0 : index
    %c0_42 = arith.constant 0 : index
    %447 = vector.load %arg4[%c0_40, %c0_41, %c0_42] : memref<1x3x512xf32, #tpu.memory_space<vmem>>, vector<1x1x512xf32>
    %448 = vector.shape_cast %447 : vector<1x1x512xf32> to vector<1x512xf32>
    %449 = vector.shape_cast %446 : vector<1x512xf32> to vector<1x1x512xf32>
    tpu.vector_store %arg4[%c0_40, %c0_41, %c0_42], %449 {strides = array<i32>} : memref<1x3x512xf32, #tpu.memory_space<vmem>>, vector<1x1x512xf32>,
    %450 = arith.mulf %439, %445 : vector<1x512xf32>
    %c0_43 = arith.constant 0 : index
    %c1 = arith.constant 1 : index
    %c0_44 = arith.constant 0 : index
    %451 = vector.load %arg4[%c0_43, %c1, %c0_44] : memref<1x3x512xf32, #tpu.memory_space<vmem>>, vector<1x1x512xf32>
    %452 = vector.shape_cast %451 : vector<1x1x512xf32> to vector<1x512xf32>
    %453 = vector.shape_cast %450 : vector<1x512xf32> to vector<1x1x512xf32>
    tpu.vector_store %arg4[%c0_43, %c1, %c0_44], %453 {strides = array<i32>} : memref<1x3x512xf32, #tpu.memory_space<vmem>>, vector<1x1x512xf32>,
    %454 = arith.mulf %441, %445 : vector<1x512xf32>
    %c0_45 = arith.constant 0 : index
    %c2 = arith.constant 2 : index
    %c0_46 = arith.constant 0 : index
    %455 = vector.load %arg4[%c0_45, %c2, %c0_46] : memref<1x3x512xf32, #tpu.memory_space<vmem>>, vector<1x1x512xf32>
    %456 = vector.shape_cast %455 : vector<1x1x512xf32> to vector<1x512xf32>
    %457 = vector.shape_cast %454 : vector<1x512xf32> to vector<1x1x512xf32>
    tpu.vector_store %arg4[%c0_45, %c2, %c0_46], %457 {strides = array<i32>} : memref<1x3x512xf32, #tpu.memory_space<vmem>>, vector<1x1x512xf32>,
    return
  }
  func.func @transform_0(%arg0: i32) -> (i32, i32, i32) {
    %c0_i32 = arith.constant 0 : i32
    %c0_i32_0 = arith.constant 0 : i32
    %c0_i32_1 = arith.constant 0 : i32
    return %arg0, %c0_i32, %c0_i32_0 : i32, i32, i32
  }
  func.func @transform_1(%arg0: i32) -> (i32, i32, i32) {
    %c0_i32 = arith.constant 0 : i32
    %c0_i32_0 = arith.constant 0 : i32
    %c0_i32_1 = arith.constant 0 : i32
    return %arg0, %c0_i32, %c0_i32_0 : i32, i32, i32
  }
  func.func @transform_2(%arg0: i32) -> (i32, i32, i32) {
    %c0_i32 = arith.constant 0 : i32
    %c0_i32_0 = arith.constant 0 : i32
    %c0_i32_1 = arith.constant 0 : i32
    %c0_i32_2 = arith.constant 0 : i32
    return %c0_i32, %c0_i32_0, %c0_i32_1 : i32, i32, i32
  }
  func.func @transform_3(%arg0: i32) -> (i32, i32, i32) {
    %c0_i32 = arith.constant 0 : i32
    %c0_i32_0 = arith.constant 0 : i32
    %c0_i32_1 = arith.constant 0 : i32
    return %arg0, %c0_i32, %c0_i32_0 : i32, i32, i32
  }
}

</mosaic_0001>

<llo_original>
// kernel: flownet_forward.1
$region0: #{flownet_forward.1}
  #allocation0 [shape = 'u32[]', space=smem, size = 0x4, offset = 0x4, fixed_abs, tag = 'smem constant byte address 0x4 - core index']
  #allocation1 [shape = 'u32[144,128]{1,0:T(1,128)}', space=vmem, size = 0x12000, scoped, tag = 'internal scratch']
  %s0 = inlined_call_operand.vmem [shape: f32[2,4,512], index: 0, kind: input, shape index: {}]
  %s1 = inlined_call_operand.vmem [shape: f32[2,4,512], index: 1, kind: input, shape index: {}]
  %s2 = inlined_call_operand.vmem [shape: f32[1,1,512], index: 2, kind: input, shape index: {}]
  %s3 = inlined_call_operand.vmem [shape: f32[2,3,512], index: 3, kind: output, shape index: {}]
  %s4 = sld [smem:[#allocation0]]
  $region45: #{flownet_forward.1} parent=0
    _
  %s6 = ssub.s32 1, %s4
  %s7 = scalar_select 0, %s6, %s4
  loop: start=0, step=1, limit=4
  $region2: #{flownet_forward.1} parent=0 // loop_pre_header
    _
  $region3: #{flownet_forward.1} parent=0 // loop_header
    %s9 = sphi 0, %s13
    %p10 = scmp.ge.s32.totalorder %s9, 4
    %s19 = sphi 0, %s21
    %s22 = sphi 0, %s19
    %s23 = sphi 0, %s22
    %s39 = sphi 0, %s23
    %s45 = sphi 0, %s47
    %s48 = sphi 0, %s45
    %s49 = sphi 0, %s48
    %s65 = sphi 0, %s49
    %s69 = sphi 0, %s69
    %s71 = sphi 0, %s69
    %s72 = sphi 0, %s71
    %s86 = sphi 0, %s72
    %s92 = sphi 0, %s94
    %s95 = sphi 0, %s92
    %s96 = sphi 0, %s95
    %s112 = sphi 0, %s96
  $region4: #{flownet_forward.1} parent=0 // loop_header_branch
    %12 = sbr.rel (%p10) target = $region8
  $region5: #{flownet_forward.1} parent=0 // loop_body
    %s14 = ssub.s32 %s9, 1
    %s15 = ssub.s32 %s9, 2
    %s16 = sadd.s32 %s9, 1
    %s17 = ssub.s32 %s9, %s16
    %p18 = scmp.eq.s32.totalorder %s17, 0
    %s20 = sadd.s32 %s19, 1
    %s21 = scalar_select %p18, %s19, %s20
    %p24 = pneg %p18
    %p25 = scmp.eq.s32.totalorder %s9, 1
    %p26 = por %p24, %p25
    %p27 = scmp.ne.s32.totalorder %s19, %s22
    %p28 = scmp.eq.s32.totalorder %s9, 0
    %p29 = por %p27, %p28
    %p30 = scmp.ne.s32.totalorder %s19, %s22
    %p31 = scmp.eq.s32.totalorder %s14, 1
    %p32 = por %p30, %p31
    %p33 = scmp.ne.s32.totalorder %s22, %s23
    %p34 = scmp.eq.s32.totalorder %s14, 0
    %p35 = por %p33, %p34
    %p36 = scmp.ne.s32.totalorder %s22, %s23
    %p37 = scmp.eq.s32.totalorder %s15, 1
    %p38 = por %p36, %p37
    %p40 = scmp.ne.s32.totalorder %s23, %s39
    %p41 = scmp.eq.s32.totalorder %s15, 0
    %p42 = por %p40, %p41
    %s43 = ssub.s32 %s9, %s16
    %p44 = scmp.eq.s32.totalorder %s43, 0
    %s46 = sadd.s32 %s45, 1
    %s47 = scalar_select %p44, %s45, %s46
    %p50 = pneg %p44
    %p51 = scmp.eq.s32.totalorder %s9, 1
    %p52 = por %p50, %p51
    %p53 = scmp.ne.s32.totalorder %s45, %s48
    %p54 = scmp.eq.s32.totalorder %s9, 0
    %p55 = por %p53, %p54
    %p56 = scmp.ne.s32.totalorder %s45, %s48
    %p57 = scmp.eq.s32.totalorder %s14, 1
    %p58 = por %p56, %p57
    %p59 = scmp.ne.s32.totalorder %s48, %s49
    %p60 = scmp.eq.s32.totalorder %s14, 0
    %p61 = por %p59, %p60
    %p62 = scmp.ne.s32.totalorder %s48, %s49
    %p63 = scmp.eq.s32.totalorder %s15, 1
    %p64 = por %p62, %p63
    %p66 = scmp.ne.s32.totalorder %s49, %s65
    %p67 = scmp.eq.s32.totalorder %s15, 0
    %p68 = por %p66, %p67
    %s70 = sadd.s32 %s69, 1
    %p73 = scmp.eq.s32.totalorder %s9, 1
    %p74 = scmp.ne.s32.totalorder %s69, %s71
    %p75 = scmp.eq.s32.totalorder %s9, 0
    %p76 = por %p74, %p75
    %p77 = scmp.ne.s32.totalorder %s69, %s71
    %p78 = scmp.eq.s32.totalorder %s14, 1
    %p79 = por %p77, %p78
    %p80 = scmp.ne.s32.totalorder %s71, %s72
    %p81 = scmp.eq.s32.totalorder %s14, 0
    %p82 = por %p80, %p81
    %p83 = scmp.ne.s32.totalorder %s71, %s72
    %p84 = scmp.eq.s32.totalorder %s15, 1
    %p85 = por %p83, %p84
    %p87 = scmp.ne.s32.totalorder %s72, %s86
    %p88 = scmp.eq.s32.totalorder %s15, 0
    %p89 = por %p87, %p88
    %s90 = ssub.s32 %s9, %s16
    %p91 = scmp.eq.s32.totalorder %s90, 0
    %s93 = sadd.s32 %s92, 1
    %s94 = scalar_select %p91, %s92, %s93
    %p97 = pneg %p91
    %p98 = scmp.eq.s32.totalorder %s9, 1
    %p99 = por %p97, %p98
    %p100 = scmp.ne.s32.totalorder %s92, %s95
    %p101 = scmp.eq.s32.totalorder %s9, 0
    %p102 = por %p100, %p101
    %p103 = scmp.ne.s32.totalorder %s92, %s95
    %p104 = scmp.eq.s32.totalorder %s14, 1
    %p105 = por %p103, %p104
    %p106 = scmp.ne.s32.totalorder %s95, %s96
    %p107 = scmp.eq.s32.totalorder %s14, 0
    %p108 = por %p106, %p107
    %p109 = scmp.ne.s32.totalorder %s95, %s96
    %p110 = scmp.eq.s32.totalorder %s15, 1
    %p111 = por %p109, %p110
    %p113 = scmp.ne.s32.totalorder %s96, %s112
    %p114 = scmp.eq.s32.totalorder %s15, 0
    %p115 = por %p113, %p114
    %p116 = scmp.le.s32.totalorder 1, %s9
    %p117 = scmp.lt.s32.totalorder %s9, 3
    %p118 = pnand %p116, %p117
    %p119 = pneg %p118
    // Predicated region
    $region9: #{flownet_forward.1} parent=5 // pred_check
      _
    $region10: #{flownet_forward.1} parent=5 // pred_check_branch
      %121 = sbr.rel (%p118) target = $region12
    $region11: #{flownet_forward.1} parent=5 // pred_region
      %s122 = ssub.s32 %s9, 1
      // Predicated region
      $region13: #{flownet_forward.1} parent=11 // pred_check
        %p123 = pneg %p82
      $region14: #{flownet_forward.1} parent=11 // pred_check_branch
        %125 = sbr.rel (%p123) target = $region16
      $region15: #{flownet_forward.1} parent=11 // pred_region
        _
      $region16: #{flownet_forward.1} parent=11 // pred_fallthru
        _
    $region12: #{flownet_forward.1} parent=5 // pred_fallthru
      _
    %p126 = scmp.lt.s32.totalorder %s9, 2
    // Predicated region
    $region17: #{flownet_forward.1} parent=5 // pred_check
      %p127 = pneg %p126
    $region18: #{flownet_forward.1} parent=5 // pred_check_branch
      %129 = sbr.rel (%p127) target = $region20
    $region19: #{flownet_forward.1} parent=5 // pred_region
      // Predicated region
      $region21: #{flownet_forward.1} parent=19 // pred_check
        %p130 = pneg %p29
      $region22: #{flownet_forward.1} parent=19 // pred_check_branch
        %132 = sbr.rel (%p130) target = $region24
      $region23: #{flownet_forward.1} parent=19 // pred_region
        %p133 = scmp.lt.s32.totalorder %s9, 1
        %s134 = scalar_select %p133, %s9, 1
        %s135 = smul.addr %s134, 4
        %s136 = smul.addr %s135, 4
        %s137 = scalar_lea.vmem %s0, %s136
      $region24: #{flownet_forward.1} parent=19 // pred_fallthru
        _
      // Predicated region
      $region25: #{flownet_forward.1} parent=19 // pred_check
        %p138 = pneg %p55
      $region26: #{flownet_forward.1} parent=19 // pred_check_branch
        %140 = sbr.rel (%p138) target = $region28
      $region27: #{flownet_forward.1} parent=19 // pred_region
        %p141 = scmp.lt.s32.totalorder %s9, 1
        %s142 = scalar_select %p141, %s9, 1
        %s143 = smul.addr %s142, 4
        %s144 = smul.addr %s143, 4
        %s145 = scalar_lea.vmem %s1, %s144
      $region28: #{flownet_forward.1} parent=19 // pred_fallthru
        _
    $region20: #{flownet_forward.1} parent=5 // pred_fallthru
      _
    %p146 = scmp.le.s32.totalorder 1, %s9
    %p147 = scmp.lt.s32.totalorder %s9, 3
    %p148 = pnand %p146, %p147
    %p149 = pneg %p148
    // Predicated region
    $region29: #{flownet_forward.1} parent=5 // pred_check
      _
    $region30: #{flownet_forward.1} parent=5 // pred_check_branch
      %151 = sbr.rel (%p148) target = $region32
    $region31: #{flownet_forward.1} parent=5 // pred_region
      %s152 = ssub.s32 %s9, 1
      %p153 = scmp.lt.s32.totalorder %s14, 1
      %s154 = scalar_select %p153, %s14, 1
      %s155 = smul.addr %s154, 4
      %s156 = smul.addr %s155, 4
      %s157 = scalar_lea.vmem %s0, %s156
      %p158 = pneg %p35
      %p159 = pneg %p32
      %p160 = scmp.lt.s32.totalorder %s14, 1
      %s161 = scalar_select %p160, %s14, 1
      %s162 = smul.addr %s161, 4
      %s163 = smul.addr %s162, 4
      %s164 = scalar_lea.vmem %s1, %s163
      %p165 = pneg %p61
      %p166 = pneg %p58
      %p167 = pneg %p82
      %p168 = pneg %p79
      %p169 = pneg %p108
      %p170 = pneg %p105
      %p171 = scmp.lt.s32.totalorder %s14, 1
      %s172 = scalar_select %p171, %s14, 1
      %s173 = smul.addr %s172, 4
      %s174 = smul.addr %s173, 4
      %s175 = scalar_lea.vmem %s3, %s174
      %p176 = scmp.lt.s32.totalorder %s14, 1
      %s177 = scalar_select %p176, %s14, 1
      %s178 = smul.addr %s177, 4
      %s179 = smul.addr %s178, 4
      %s180 = scalar_lea.vmem %s0, %s179
      %p181 = scmp.lt.s32.totalorder %s14, 1
      %s182 = scalar_select %p181, %s14, 1
      %s183 = smul.addr %s182, 4
      %s184 = smul.addr %s183, 4
      %s185 = scalar_lea.vmem %s1, %s184
      %p186 = scmp.lt.s32.totalorder %s14, 1
      %s187 = scalar_select %p186, %s14, 1
      %s188 = smul.addr %s187, 4
      %s189 = smul.addr %s188, 4
      %s190 = scalar_lea.vmem %s3, %s189
      %v191 = vld [vmem:[%s180] sm:$0xff]
      %v192 = vld [vmem:[%s180 + $0x8] sm:$0xff]
      %v193 = vmul.f32 %v191, 14.285714
      %v194 = vmul.f32 %v192, 14.285714
      %v195 = vld [vmem:[%s185] sm:$0xff]
      %v196 = vld [vmem:[%s185 + $0x8] sm:$0xff]
      %v199 = vcombine.high %v195, %v195
      %v200 = vcombine.high %v196, %v196
      %203 = vrot.lane.b32.xlu0 %v195, 73
      %v204 = vpop.permute.xlu0 %203
      %205 = vrot.lane.b32.xlu0 %v199, 73
      %v206 = vpop.permute.xlu0 %205
      %207 = vrot.lane.b32.xlu0 %v196, 73
      %v208 = vpop.permute.xlu0 %207
      %209 = vrot.lane.b32.xlu0 %v200, 73
      %v210 = vpop.permute.xlu0 %209
      %v211 = vlaneseq
      %v212 = vand.u32 %v211, 127
      %vm213 = vcmp.lt.s32.totalorder %v212, 73
      %v214 = vsel %vm213, %v208, %v210
      %v215 = vsel %vm213, %v206, %v208
      %v216 = vsel %vm213, %v204, %v206
      %v217 = vsel %vm213, %v210, %v204
      %v222 = vcombine.low %v217, %v216
      %v223 = vcombine.low %v215, %v214
      %v226 = vmul.f32 %v193, %v222
      %v227 = vmul.f32 %v194, %v223
      %v230 = vcombine.high %v226, %v226
      %v231 = vcombine.high %v227, %v227
      %vm234 = vcmask 1043456
      %v235 = vsel %vm234, %v226, 0.0
      %v236 = vrot.slane %v235, 4
      %v237 = vadd.f32 %v235, %v236
      %v238 = vrot.slane %v237, 2
      %v239 = vadd.f32 %v237, %v238
      %v240 = vrot.slane %v239, 1
      %v241 = vadd.f32 %v239, %v240
      %v242 = vsel %vm234, %v230, 0.0
      %v243 = vrot.slane %v242, 4
      %v244 = vadd.f32 %v242, %v243
      %v245 = vrot.slane %v244, 2
      %v246 = vadd.f32 %v244, %v245
      %v247 = vrot.slane %v246, 1
      %v248 = vadd.f32 %v246, %v247
      %v249 = vsel %vm234, %v227, 0.0
      %v250 = vrot.slane %v249, 4
      %v251 = vadd.f32 %v249, %v250
      %v252 = vrot.slane %v251, 2
      %v253 = vadd.f32 %v251, %v252
      %v254 = vrot.slane %v253, 1
      %v255 = vadd.f32 %v253, %v254
      %v256 = vsel %vm234, %v231, 0.0
      %v257 = vrot.slane %v256, 4
      %v258 = vadd.f32 %v256, %v257
      %v259 = vrot.slane %v258, 2
      %v260 = vadd.f32 %v258, %v259
      %v261 = vrot.slane %v260, 1
      %v262 = vadd.f32 %v260, %v261
      %v263 = vsub.f32 -inf, %v241
      %v264 = vsub.f32 -inf, %v248
      %v265 = vsub.f32 -inf, %v255
      %v266 = vsub.f32 -inf, %v262
      %v267 = vmul.f32 %v263, 1.442695
      %v268 = vpow.pop %v267
      %v269 = vmul.f32 %v264, 1.442695
      %v270 = vpow.pop %v269
      %v271 = vmul.f32 %v265, 1.442695
      %v272 = vpow.pop %v271
      %v273 = vmul.f32 %v266, 1.442695
      %v274 = vpow.pop %v273
      %v275 = vsub.f32 %v241, %v241
      %v276 = vsub.f32 %v248, %v248
      %v277 = vsub.f32 %v255, %v255
      %v278 = vsub.f32 %v262, %v262
      %v279 = vmul.f32 %v275, 1.442695
      %v280 = vpow.pop %v279
      %v281 = vmul.f32 %v276, 1.442695
      %v282 = vpow.pop %v281
      %v283 = vmul.f32 %v277, 1.442695
      %v284 = vpow.pop %v283
      %v285 = vmul.f32 %v278, 1.442695
      %v286 = vpow.pop %v285
      %v287 = vmul.f32 %v268, 0.0
      %v288 = vmul.f32 %v270, 0.0
      %v289 = vmul.f32 %v272, 0.0
      %v290 = vmul.f32 %v274, 0.0
      %v291 = vadd.f32 %v287, %v280
      %v292 = vadd.f32 %v288, %v282
      %v293 = vadd.f32 %v289, %v284
      %v294 = vadd.f32 %v290, %v286
      %v295 = vsub.f32 %v287, %v280
      %v296 = vsub.f32 %v288, %v282
      %v297 = vsub.f32 %v289, %v284
      %v298 = vsub.f32 %v290, %v286
      %299 = vrot.lane.b32.xlu0 %v195, 72
      %v300 = vpop.permute.xlu0 %299
      %301 = vrot.lane.b32.xlu0 %v199, 72
      %v302 = vpop.permute.xlu0 %301
      %303 = vrot.lane.b32.xlu0 %v196, 72
      %v304 = vpop.permute.xlu0 %303
      %305 = vrot.lane.b32.xlu0 %v200, 72
      %v306 = vpop.permute.xlu0 %305
      %vm307 = vcmp.lt.s32.totalorder %v212, 72
      %v308 = vsel %vm307, %v304, %v306
      %v309 = vsel %vm307, %v302, %v304
      %v310 = vsel %vm307, %v300, %v302
      %v311 = vsel %vm307, %v306, %v300
      %v316 = vcombine.low %v311, %v310
      %v317 = vcombine.low %v309, %v308
      %v320 = vmul.f32 %v193, %v316
      %v321 = vmul.f32 %v194, %v317
      %v324 = vcombine.high %v320, %v320
      %v325 = vcombine.high %v321, %v321
      %v328 = vsel %vm234, %v320, 0.0
      %v329 = vrot.slane %v328, 4
      %v330 = vadd.f32 %v328, %v329
      %v331 = vrot.slane %v330, 2
      %v332 = vadd.f32 %v330, %v331
      %v333 = vrot.slane %v332, 1
      %v334 = vadd.f32 %v332, %v333
      %v335 = vsel %vm234, %v324, 0.0
      %v336 = vrot.slane %v335, 4
      %v337 = vadd.f32 %v335, %v336
      %v338 = vrot.slane %v337, 2
      %v339 = vadd.f32 %v337, %v338
      %v340 = vrot.slane %v339, 1
      %v341 = vadd.f32 %v339, %v340
      %v342 = vsel %vm234, %v321, 0.0
      %v343 = vrot.slane %v342, 4
      %v344 = vadd.f32 %v342, %v343
      %v345 = vrot.slane %v344, 2
      %v346 = vadd.f32 %v344, %v345
      %v347 = vrot.slane %v346, 1
      %v348 = vadd.f32 %v346, %v347
      %v349 = vsel %vm234, %v325, 0.0
      %v350 = vrot.slane %v349, 4
      %v351 = vadd.f32 %v349, %v350
      %v352 = vrot.slane %v351, 2
      %v353 = vadd.f32 %v351, %v352
      %v354 = vrot.slane %v353, 1
      %v355 = vadd.f32 %v353, %v354
      %v356 = vmax.f32 %v241, %v334
      %v357 = vmax.f32 %v248, %v341
      %v358 = vmax.f32 %v255, %v348
      %v359 = vmax.f32 %v262, %v355
      %v360 = vsub.f32 %v241, %v356
      %v361 = vsub.f32 %v248, %v357
      %v362 = vsub.f32 %v255, %v358
      %v363 = vsub.f32 %v262, %v359
      %v364 = vmul.f32 %v360, 1.442695
      %v365 = vpow.pop %v364
      %v366 = vmul.f32 %v361, 1.442695
      %v367 = vpow.pop %v366
      %v368 = vmul.f32 %v362, 1.442695
      %v369 = vpow.pop %v368
      %v370 = vmul.f32 %v363, 1.442695
      %v371 = vpow.pop %v370
      %v372 = vsub.f32 %v334, %v356
      %v373 = vsub.f32 %v341, %v357
      %v374 = vsub.f32 %v348, %v358
      %v375 = vsub.f32 %v355, %v359
      %v376 = vmul.f32 %v372, 1.442695
      %v377 = vpow.pop %v376
      %v378 = vmul.f32 %v373, 1.442695
      %v379 = vpow.pop %v378
      %v380 = vmul.f32 %v374, 1.442695
      %v381 = vpow.pop %v380
      %v382 = vmul.f32 %v375, 1.442695
      %v383 = vpow.pop %v382
      %v384 = vmul.f32 %v291, %v365
      %v385 = vmul.f32 %v292, %v367
      %v386 = vmul.f32 %v293, %v369
      %v387 = vmul.f32 %v294, %v371
      %v388 = vadd.f32 %v384, %v377
      %v389 = vadd.f32 %v385, %v379
      %v390 = vadd.f32 %v386, %v381
      %v391 = vadd.f32 %v387, %v383
      %v392 = vmul.f32 %v295, %v365
      %v393 = vmul.f32 %v296, %v367
      %v394 = vmul.f32 %v297, %v369
      %v395 = vmul.f32 %v298, %v371
      %v396 = vsub.f32 %v392, %v377
      %v397 = vsub.f32 %v393, %v379
      %v398 = vsub.f32 %v394, %v381
      %v399 = vsub.f32 %v395, %v383
      %400 = vrot.lane.b32.xlu0 %v195, 71
      %v401 = vpop.permute.xlu0 %400
      %402 = vrot.lane.b32.xlu0 %v199, 71
      %v403 = vpop.permute.xlu0 %402
      %404 = vrot.lane.b32.xlu0 %v196, 71
      %v405 = vpop.permute.xlu0 %404
      %406 = vrot.lane.b32.xlu0 %v200, 71
      %v407 = vpop.permute.xlu0 %406
      %vm408 = vcmp.lt.s32.totalorder %v212, 71
      %v409 = vsel %vm408, %v405, %v407
      %v410 = vsel %vm408, %v403, %v405
      %v411 = vsel %vm408, %v401, %v403
      %v412 = vsel %vm408, %v407, %v401
      %v417 = vcombine.low %v412, %v411
      %v418 = vcombine.low %v410, %v409
      %v421 = vmul.f32 %v193, %v417
      %v422 = vmul.f32 %v194, %v418
      %v425 = vcombine.high %v421, %v421
      %v426 = vcombine.high %v422, %v422
      %v429 = vsel %vm234, %v421, 0.0
      %v430 = vrot.slane %v429, 4
      %v431 = vadd.f32 %v429, %v430
      %v432 = vrot.slane %v431, 2
      %v433 = vadd.f32 %v431, %v432
      %v434 = vrot.slane %v433, 1
      %v435 = vadd.f32 %v433, %v434
      %v436 = vsel %vm234, %v425, 0.0
      %v437 = vrot.slane %v436, 4
      %v438 = vadd.f32 %v436, %v437
      %v439 = vrot.slane %v438, 2
      %v440 = vadd.f32 %v438, %v439
      %v441 = vrot.slane %v440, 1
      %v442 = vadd.f32 %v440, %v441
      %v443 = vsel %vm234, %v422, 0.0
      %v444 = vrot.slane %v443, 4
      %v445 = vadd.f32 %v443, %v444
      %v446 = vrot.slane %v445, 2
      %v447 = vadd.f32 %v445, %v446
      %v448 = vrot.slane %v447, 1
      %v449 = vadd.f32 %v447, %v448
      %v450 = vsel %vm234, %v426, 0.0
      %v451 = vrot.slane %v450, 4
      %v452 = vadd.f32 %v450, %v451
      %v453 = vrot.slane %v452, 2
      %v454 = vadd.f32 %v452, %v453
      %v455 = vrot.slane %v454, 1
      %v456 = vadd.f32 %v454, %v455
      %v457 = vmax.f32 %v356, %v435
      %v458 = vmax.f32 %v357, %v442
      %v459 = vmax.f32 %v358, %v449
      %v460 = vmax.f32 %v359, %v456
      %v461 = vsub.f32 %v356, %v457
      %v462 = vsub.f32 %v357, %v458
      %v463 = vsub.f32 %v358, %v459
      %v464 = vsub.f32 %v359, %v460
      %v465 = vmul.f32 %v461, 1.442695
      %v466 = vpow.pop %v465
      %v467 = vmul.f32 %v462, 1.442695
      %v468 = vpow.pop %v467
      %v469 = vmul.f32 %v463, 1.442695
      %v470 = vpow.pop %v469
      %v471 = vmul.f32 %v464, 1.442695
      %v472 = vpow.pop %v471
      %v473 = vsub.f32 %v435, %v457
      %v474 = vsub.f32 %v442, %v458
      %v475 = vsub.f32 %v449, %v459
      %v476 = vsub.f32 %v456, %v460
      %v477 = vmul.f32 %v473, 1.442695
      %v478 = vpow.pop %v477
      %v479 = vmul.f32 %v474, 1.442695
      %v480 = vpow.pop %v479
      %v481 = vmul.f32 %v475, 1.442695
      %v482 = vpow.pop %v481
      %v483 = vmul.f32 %v476, 1.442695
      %v484 = vpow.pop %v483
      %v485 = vmul.f32 %v388, %v466
      %v486 = vmul.f32 %v389, %v468
      %v487 = vmul.f32 %v390, %v470
      %v488 = vmul.f32 %v391, %v472
      %v489 = vadd.f32 %v485, %v478
      %v490 = vadd.f32 %v486, %v480
      %v491 = vadd.f32 %v487, %v482
      %v492 = vadd.f32 %v488, %v484
      %v493 = vmul.f32 %v396, %v466
      %v494 = vmul.f32 %v397, %v468
      %v495 = vmul.f32 %v398, %v470
      %v496 = vmul.f32 %v399, %v472
      %v497 = vsub.f32 %v493, %v478
      %v498 = vsub.f32 %v494, %v480
      %v499 = vsub.f32 %v495, %v482
      %v500 = vsub.f32 %v496, %v484
      %v501 = vmul.f32 %v392, %v466
      %v502 = vmul.f32 %v393, %v468
      %v503 = vmul.f32 %v394, %v470
      %v504 = vmul.f32 %v395, %v472
      %v505 = vadd.f32 %v501, %v478
      %v506 = vadd.f32 %v502, %v480
      %v507 = vadd.f32 %v503, %v482
      %v508 = vadd.f32 %v504, %v484
      %509 = vrot.lane.b32.xlu0 %v195, 65
      %v510 = vpop.permute.xlu0 %509
      %511 = vrot.lane.b32.xlu0 %v199, 65
      %v512 = vpop.permute.xlu0 %511
      %513 = vrot.lane.b32.xlu0 %v196, 65
      %v514 = vpop.permute.xlu0 %513
      %515 = vrot.lane.b32.xlu0 %v200, 65
      %v516 = vpop.permute.xlu0 %515
      %vm517 = vcmp.lt.s32.totalorder %v212, 65
      %v518 = vsel %vm517, %v514, %v516
      %v519 = vsel %vm517, %v512, %v514
      %v520 = vsel %vm517, %v510, %v512
      %v521 = vsel %vm517, %v516, %v510
      %v526 = vcombine.low %v521, %v520
      %v527 = vcombine.low %v519, %v518
      %v530 = vmul.f32 %v193, %v526
      %v531 = vmul.f32 %v194, %v527
      %v534 = vcombine.high %v530, %v530
      %v535 = vcombine.high %v531, %v531
      %v538 = vsel %vm234, %v530, 0.0
      %v539 = vrot.slane %v538, 4
      %v540 = vadd.f32 %v538, %v539
      %v541 = vrot.slane %v540, 2
      %v542 = vadd.f32 %v540, %v541
      %v543 = vrot.slane %v542, 1
      %v544 = vadd.f32 %v542, %v543
      %v545 = vsel %vm234, %v534, 0.0
      %v546 = vrot.slane %v545, 4
      %v547 = vadd.f32 %v545, %v546
      %v548 = vrot.slane %v547, 2
      %v549 = vadd.f32 %v547, %v548
      %v550 = vrot.slane %v549, 1
      %v551 = vadd.f32 %v549, %v550
      %v552 = vsel %vm234, %v531, 0.0
      %v553 = vrot.slane %v552, 4
      %v554 = vadd.f32 %v552, %v553
      %v555 = vrot.slane %v554, 2
      %v556 = vadd.f32 %v554, %v555
      %v557 = vrot.slane %v556, 1
      %v558 = vadd.f32 %v556, %v557
      %v559 = vsel %vm234, %v535, 0.0
      %v560 = vrot.slane %v559, 4
      %v561 = vadd.f32 %v559, %v560
      %v562 = vrot.slane %v561, 2
      %v563 = vadd.f32 %v561, %v562
      %v564 = vrot.slane %v563, 1
      %v565 = vadd.f32 %v563, %v564
      %v566 = vmax.f32 %v457, %v544
      %v567 = vmax.f32 %v458, %v551
      %v568 = vmax.f32 %v459, %v558
      %v569 = vmax.f32 %v460, %v565
      %v570 = vsub.f32 %v457, %v566
      %v571 = vsub.f32 %v458, %v567
      %v572 = vsub.f32 %v459, %v568
      %v573 = vsub.f32 %v460, %v569
      %v574 = vmul.f32 %v570, 1.442695
      %v575 = vpow.pop %v574
      %v576 = vmul.f32 %v571, 1.442695
      %v577 = vpow.pop %v576
      %v578 = vmul.f32 %v572, 1.442695
      %v579 = vpow.pop %v578
      %v580 = vmul.f32 %v573, 1.442695
      %v581 = vpow.pop %v580
      %v582 = vsub.f32 %v544, %v566
      %v583 = vsub.f32 %v551, %v567
      %v584 = vsub.f32 %v558, %v568
      %v585 = vsub.f32 %v565, %v569
      %v586 = vmul.f32 %v582, 1.442695
      %v587 = vpow.pop %v586
      %v588 = vmul.f32 %v583, 1.442695
      %v589 = vpow.pop %v588
      %v590 = vmul.f32 %v584, 1.442695
      %v591 = vpow.pop %v590
      %v592 = vmul.f32 %v585, 1.442695
      %v593 = vpow.pop %v592
      %v594 = vmul.f32 %v489, %v575
      %v595 = vmul.f32 %v490, %v577
      %v596 = vmul.f32 %v491, %v579
      %v597 = vmul.f32 %v492, %v581
      %v598 = vadd.f32 %v594, %v587
      %v599 = vadd.f32 %v595, %v589
      %v600 = vadd.f32 %v596, %v591
      %v601 = vadd.f32 %v597, %v593
      %v602 = vmul.f32 %v497, %v575
      %v603 = vmul.f32 %v498, %v577
      %v604 = vmul.f32 %v499, %v579
      %v605 = vmul.f32 %v500, %v581
      %v606 = vsub.f32 %v602, %v587
      %v607 = vsub.f32 %v603, %v589
      %v608 = vsub.f32 %v604, %v591
      %v609 = vsub.f32 %v605, %v593
      %v610 = vmul.f32 %v505, %v575
      %v611 = vmul.f32 %v506, %v577
      %v612 = vmul.f32 %v507, %v579
      %v613 = vmul.f32 %v508, %v581
      %v614 = vsub.f32 %v610, %v587
      %v615 = vsub.f32 %v611, %v589
      %v616 = vsub.f32 %v612, %v591
      %v617 = vsub.f32 %v613, %v593
      %618 = vrot.lane.b32.xlu0 %v195, 64
      %v619 = vpop.permute.xlu0 %618
      %620 = vrot.lane.b32.xlu0 %v199, 64
      %v621 = vpop.permute.xlu0 %620
      %622 = vrot.lane.b32.xlu0 %v196, 64
      %v623 = vpop.permute.xlu0 %622
      %624 = vrot.lane.b32.xlu0 %v200, 64
      %v625 = vpop.permute.xlu0 %624
      %vm626 = vcmp.lt.s32.totalorder %v212, 64
      %v627 = vsel %vm626, %v623, %v625
      %v628 = vsel %vm626, %v621, %v623
      %v629 = vsel %vm626, %v619, %v621
      %v630 = vsel %vm626, %v625, %v619
      %v635 = vcombine.low %v630, %v629
      %v636 = vcombine.low %v628, %v627
      %v639 = vmul.f32 %v193, %v635
      %v640 = vmul.f32 %v194, %v636
      %v643 = vcombine.high %v639, %v639
      %v644 = vcombine.high %v640, %v640
      %v647 = vsel %vm234, %v639, 0.0
      %v648 = vrot.slane %v647, 4
      %v649 = vadd.f32 %v647, %v648
      %v650 = vrot.slane %v649, 2
      %v651 = vadd.f32 %v649, %v650
      %v652 = vrot.slane %v651, 1
      %v653 = vadd.f32 %v651, %v652
      %v654 = vsel %vm234, %v643, 0.0
      %v655 = vrot.slane %v654, 4
      %v656 = vadd.f32 %v654, %v655
      %v657 = vrot.slane %v656, 2
      %v658 = vadd.f32 %v656, %v657
      %v659 = vrot.slane %v658, 1
      %v660 = vadd.f32 %v658, %v659
      %v661 = vsel %vm234, %v640, 0.0
      %v662 = vrot.slane %v661, 4
      %v663 = vadd.f32 %v661, %v662
      %v664 = vrot.slane %v663, 2
      %v665 = vadd.f32 %v663, %v664
      %v666 = vrot.slane %v665, 1
      %v667 = vadd.f32 %v665, %v666
      %v668 = vsel %vm234, %v644, 0.0
      %v669 = vrot.slane %v668, 4
      %v670 = vadd.f32 %v668, %v669
      %v671 = vrot.slane %v670, 2
      %v672 = vadd.f32 %v670, %v671
      %v673 = vrot.slane %v672, 1
      %v674 = vadd.f32 %v672, %v673
      %v675 = vmax.f32 %v566, %v653
      %v676 = vmax.f32 %v567, %v660
      %v677 = vmax.f32 %v568, %v667
      %v678 = vmax.f32 %v569, %v674
      %v679 = vsub.f32 %v566, %v675
      %v680 = vsub.f32 %v567, %v676
      %v681 = vsub.f32 %v568, %v677
      %v682 = vsub.f32 %v569, %v678
      %v683 = vmul.f32 %v679, 1.442695
      %v684 = vpow.pop %v683
      %v685 = vmul.f32 %v680, 1.442695
      %v686 = vpow.pop %v685
      %v687 = vmul.f32 %v681, 1.442695
      %v688 = vpow.pop %v687
      %v689 = vmul.f32 %v682, 1.442695
      %v690 = vpow.pop %v689
      %v691 = vsub.f32 %v653, %v675
      %v692 = vsub.f32 %v660, %v676
      %v693 = vsub.f32 %v667, %v677
      %v694 = vsub.f32 %v674, %v678
      %v695 = vmul.f32 %v691, 1.442695
      %v696 = vpow.pop %v695
      %v697 = vmul.f32 %v692, 1.442695
      %v698 = vpow.pop %v697
      %v699 = vmul.f32 %v693, 1.442695
      %v700 = vpow.pop %v699
      %v701 = vmul.f32 %v694, 1.442695
      %v702 = vpow.pop %v701
      %v703 = vmul.f32 %v598, %v684
      %v704 = vmul.f32 %v599, %v686
      %v705 = vmul.f32 %v600, %v688
      %v706 = vmul.f32 %v601, %v690
      %v707 = vadd.f32 %v703, %v696
      %v708 = vadd.f32 %v704, %v698
      %v709 = vadd.f32 %v705, %v700
      %v710 = vadd.f32 %v706, %v702
      %v711 = vmul.f32 %v606, %v684
      %v712 = vmul.f32 %v607, %v686
      %v713 = vmul.f32 %v608, %v688
      %v714 = vmul.f32 %v609, %v690
      %v715 = vsub.f32 %v711, %v696
      %v716 = vsub.f32 %v712, %v698
      %v717 = vsub.f32 %v713, %v700
      %v718 = vsub.f32 %v714, %v702
      %v719 = vmul.f32 %v602, %v684
      %v720 = vmul.f32 %v603, %v686
      %v721 = vmul.f32 %v604, %v688
      %v722 = vmul.f32 %v605, %v690
      %v723 = vmul.f32 %v614, %v684
      %v724 = vmul.f32 %v615, %v686
      %v725 = vmul.f32 %v616, %v688
      %v726 = vmul.f32 %v617, %v690
      %727 = vrot.lane.b32.xlu0 %v195, 63
      %v728 = vpop.permute.xlu0 %727
      %729 = vrot.lane.b32.xlu0 %v199, 63
      %v730 = vpop.permute.xlu0 %729
      %731 = vrot.lane.b32.xlu0 %v196, 63
      %v732 = vpop.permute.xlu0 %731
      %733 = vrot.lane.b32.xlu0 %v200, 63
      %v734 = vpop.permute.xlu0 %733
      %vm735 = vcmp.lt.s32.totalorder %v212, 63
      %v736 = vsel %vm735, %v732, %v734
      %v737 = vsel %vm735, %v730, %v732
      %v738 = vsel %vm735, %v728, %v730
      %v739 = vsel %vm735, %v734, %v728
      %v744 = vcombine.low %v739, %v738
      %v745 = vcombine.low %v737, %v736
      %v748 = vmul.f32 %v193, %v744
      %v749 = vmul.f32 %v194, %v745
      %v752 = vcombine.high %v748, %v748
      %v753 = vcombine.high %v749, %v749
      %v756 = vsel %vm234, %v748, 0.0
      %v757 = vrot.slane %v756, 4
      %v758 = vadd.f32 %v756, %v757
      %v759 = vrot.slane %v758, 2
      %v760 = vadd.f32 %v758, %v759
      %v761 = vrot.slane %v760, 1
      %v762 = vadd.f32 %v760, %v761
      %v763 = vsel %vm234, %v752, 0.0
      %v764 = vrot.slane %v763, 4
      %v765 = vadd.f32 %v763, %v764
      %v766 = vrot.slane %v765, 2
      %v767 = vadd.f32 %v765, %v766
      %v768 = vrot.slane %v767, 1
      %v769 = vadd.f32 %v767, %v768
      %v770 = vsel %vm234, %v749, 0.0
      %v771 = vrot.slane %v770, 4
      %v772 = vadd.f32 %v770, %v771
      %v773 = vrot.slane %v772, 2
      %v774 = vadd.f32 %v772, %v773
      %v775 = vrot.slane %v774, 1
      %v776 = vadd.f32 %v774, %v775
      %v777 = vsel %vm234, %v753, 0.0
      %v778 = vrot.slane %v777, 4
      %v779 = vadd.f32 %v777, %v778
      %v780 = vrot.slane %v779, 2
      %v781 = vadd.f32 %v779, %v780
      %v782 = vrot.slane %v781, 1
      %v783 = vadd.f32 %v781, %v782
      %v784 = vmax.f32 %v675, %v762
      %v785 = vmax.f32 %v676, %v769
      %v786 = vmax.f32 %v677, %v776
      %v787 = vmax.f32 %v678, %v783
      %v788 = vsub.f32 %v675, %v784
      %v789 = vsub.f32 %v676, %v785
      %v790 = vsub.f32 %v677, %v786
      %v791 = vsub.f32 %v678, %v787
      %v792 = vmul.f32 %v788, 1.442695
      %v793 = vpow.pop %v792
      %v794 = vmul.f32 %v789, 1.442695
      %v795 = vpow.pop %v794
      %v796 = vmul.f32 %v790, 1.442695
      %v797 = vpow.pop %v796
      %v798 = vmul.f32 %v791, 1.442695
      %v799 = vpow.pop %v798
      %v800 = vsub.f32 %v762, %v784
      %v801 = vsub.f32 %v769, %v785
      %v802 = vsub.f32 %v776, %v786
      %v803 = vsub.f32 %v783, %v787
      %v804 = vmul.f32 %v800, 1.442695
      %v805 = vpow.pop %v804
      %v806 = vmul.f32 %v801, 1.442695
      %v807 = vpow.pop %v806
      %v808 = vmul.f32 %v802, 1.442695
      %v809 = vpow.pop %v808
      %v810 = vmul.f32 %v803, 1.442695
      %v811 = vpow.pop %v810
      %v812 = vmul.f32 %v707, %v793
      %v813 = vmul.f32 %v708, %v795
      %v814 = vmul.f32 %v709, %v797
      %v815 = vmul.f32 %v710, %v799
      %v816 = vadd.f32 %v812, %v805
      %v817 = vadd.f32 %v813, %v807
      %v818 = vadd.f32 %v814, %v809
      %v819 = vadd.f32 %v815, %v811
      %v820 = vmul.f32 %v715, %v793
      %v821 = vmul.f32 %v716, %v795
      %v822 = vmul.f32 %v717, %v797
      %v823 = vmul.f32 %v718, %v799
      %v824 = vsub.f32 %v820, %v805
      %v825 = vsub.f32 %v821, %v807
      %v826 = vsub.f32 %v822, %v809
      %v827 = vsub.f32 %v823, %v811
      %v828 = vmul.f32 %v719, %v793
      %v829 = vmul.f32 %v720, %v795
      %v830 = vmul.f32 %v721, %v797
      %v831 = vmul.f32 %v722, %v799
      %v832 = vmul.f32 %v723, %v793
      %v833 = vmul.f32 %v724, %v795
      %v834 = vmul.f32 %v725, %v797
      %v835 = vmul.f32 %v726, %v799
      %v836 = vadd.f32 %v832, %v805
      %v837 = vadd.f32 %v833, %v807
      %v838 = vadd.f32 %v834, %v809
      %v839 = vadd.f32 %v835, %v811
      %840 = vrot.lane.b32.xlu0 %v195, 57
      %v841 = vpop.permute.xlu0 %840
      %842 = vrot.lane.b32.xlu0 %v199, 57
      %v843 = vpop.permute.xlu0 %842
      %844 = vrot.lane.b32.xlu0 %v196, 57
      %v845 = vpop.permute.xlu0 %844
      %846 = vrot.lane.b32.xlu0 %v200, 57
      %v847 = vpop.permute.xlu0 %846
      %vm848 = vcmp.lt.s32.totalorder %v212, 57
      %v849 = vsel %vm848, %v845, %v847
      %v850 = vsel %vm848, %v843, %v845
      %v851 = vsel %vm848, %v841, %v843
      %v852 = vsel %vm848, %v847, %v841
      %v857 = vcombine.low %v852, %v851
      %v858 = vcombine.low %v850, %v849
      %v861 = vmul.f32 %v193, %v857
      %v862 = vmul.f32 %v194, %v858
      %v865 = vcombine.high %v861, %v861
      %v866 = vcombine.high %v862, %v862
      %v869 = vsel %vm234, %v861, 0.0
      %v870 = vrot.slane %v869, 4
      %v871 = vadd.f32 %v869, %v870
      %v872 = vrot.slane %v871, 2
      %v873 = vadd.f32 %v871, %v872
      %v874 = vrot.slane %v873, 1
      %v875 = vadd.f32 %v873, %v874
      %v876 = vsel %vm234, %v865, 0.0
      %v877 = vrot.slane %v876, 4
      %v878 = vadd.f32 %v876, %v877
      %v879 = vrot.slane %v878, 2
      %v880 = vadd.f32 %v878, %v879
      %v881 = vrot.slane %v880, 1
      %v882 = vadd.f32 %v880, %v881
      %v883 = vsel %vm234, %v862, 0.0
      %v884 = vrot.slane %v883, 4
      %v885 = vadd.f32 %v883, %v884
      %v886 = vrot.slane %v885, 2
      %v887 = vadd.f32 %v885, %v886
      %v888 = vrot.slane %v887, 1
      %v889 = vadd.f32 %v887, %v888
      %v890 = vsel %vm234, %v866, 0.0
      %v891 = vrot.slane %v890, 4
      %v892 = vadd.f32 %v890, %v891
      %v893 = vrot.slane %v892, 2
      %v894 = vadd.f32 %v892, %v893
      %v895 = vrot.slane %v894, 1
      %v896 = vadd.f32 %v894, %v895
      %v897 = vmax.f32 %v784, %v875
      %v898 = vmax.f32 %v785, %v882
      %v899 = vmax.f32 %v786, %v889
      %v900 = vmax.f32 %v787, %v896
      %v901 = vsub.f32 %v784, %v897
      %v902 = vsub.f32 %v785, %v898
      %v903 = vsub.f32 %v786, %v899
      %v904 = vsub.f32 %v787, %v900
      %v905 = vmul.f32 %v901, 1.442695
      %v906 = vpow.pop %v905
      %v907 = vmul.f32 %v902, 1.442695
      %v908 = vpow.pop %v907
      %v909 = vmul.f32 %v903, 1.442695
      %v910 = vpow.pop %v909
      %v911 = vmul.f32 %v904, 1.442695
      %v912 = vpow.pop %v911
      %v913 = vsub.f32 %v875, %v897
      %v914 = vsub.f32 %v882, %v898
      %v915 = vsub.f32 %v889, %v899
      %v916 = vsub.f32 %v896, %v900
      %v917 = vmul.f32 %v913, 1.442695
      %v918 = vpow.pop %v917
      %v919 = vmul.f32 %v914, 1.442695
      %v920 = vpow.pop %v919
      %v921 = vmul.f32 %v915, 1.442695
      %v922 = vpow.pop %v921
      %v923 = vmul.f32 %v916, 1.442695
      %v924 = vpow.pop %v923
      %v925 = vmul.f32 %v816, %v906
      %v926 = vmul.f32 %v817, %v908
      %v927 = vmul.f32 %v818, %v910
      %v928 = vmul.f32 %v819, %v912
      %v929 = vadd.f32 %v925, %v918
      %v930 = vadd.f32 %v926, %v920
      %v931 = vadd.f32 %v927, %v922
      %v932 = vadd.f32 %v928, %v924
      %v933 = vmul.f32 %v824, %v906
      %v934 = vmul.f32 %v825, %v908
      %v935 = vmul.f32 %v826, %v910
      %v936 = vmul.f32 %v827, %v912
      %v937 = vsub.f32 %v933, %v918
      %v938 = vsub.f32 %v934, %v920
      %v939 = vsub.f32 %v935, %v922
      %v940 = vsub.f32 %v936, %v924
      %v941 = vmul.f32 %v828, %v906
      %v942 = vmul.f32 %v829, %v908
      %v943 = vmul.f32 %v830, %v910
      %v944 = vmul.f32 %v831, %v912
      %v945 = vadd.f32 %v941, %v918
      %v946 = vadd.f32 %v942, %v920
      %v947 = vadd.f32 %v943, %v922
      %v948 = vadd.f32 %v944, %v924
      %v949 = vmul.f32 %v836, %v906
      %v950 = vmul.f32 %v837, %v908
      %v951 = vmul.f32 %v838, %v910
      %v952 = vmul.f32 %v839, %v912
      %v953 = vsub.f32 %v949, %v918
      %v954 = vsub.f32 %v950, %v920
      %v955 = vsub.f32 %v951, %v922
      %v956 = vsub.f32 %v952, %v924
      %957 = vrot.lane.b32.xlu0 %v195, 56
      %v958 = vpop.permute.xlu0 %957
      %959 = vrot.lane.b32.xlu0 %v199, 56
      %v960 = vpop.permute.xlu0 %959
      %961 = vrot.lane.b32.xlu0 %v196, 56
      %v962 = vpop.permute.xlu0 %961
      %963 = vrot.lane.b32.xlu0 %v200, 56
      %v964 = vpop.permute.xlu0 %963
      %vm965 = vcmp.lt.s32.totalorder %v212, 56
      %v966 = vsel %vm965, %v962, %v964
      %v967 = vsel %vm965, %v960, %v962
      %v968 = vsel %vm965, %v958, %v960
      %v969 = vsel %vm965, %v964, %v958
      %v974 = vcombine.low %v969, %v968
      %v975 = vcombine.low %v967, %v966
      %v978 = vmul.f32 %v193, %v974
      %v979 = vmul.f32 %v194, %v975
      %v982 = vcombine.high %v978, %v978
      %v983 = vcombine.high %v979, %v979
      %v986 = vsel %vm234, %v978, 0.0
      %v987 = vrot.slane %v986, 4
      %v988 = vadd.f32 %v986, %v987
      %v989 = vrot.slane %v988, 2
      %v990 = vadd.f32 %v988, %v989
      %v991 = vrot.slane %v990, 1
      %v992 = vadd.f32 %v990, %v991
      %v993 = vsel %vm234, %v982, 0.0
      %v994 = vrot.slane %v993, 4
      %v995 = vadd.f32 %v993, %v994
      %v996 = vrot.slane %v995, 2
      %v997 = vadd.f32 %v995, %v996
      %v998 = vrot.slane %v997, 1
      %v999 = vadd.f32 %v997, %v998
      %v1000 = vsel %vm234, %v979, 0.0
      %v1001 = vrot.slane %v1000, 4
      %v1002 = vadd.f32 %v1000, %v1001
      %v1003 = vrot.slane %v1002, 2
      %v1004 = vadd.f32 %v1002, %v1003
      %v1005 = vrot.slane %v1004, 1
      %v1006 = vadd.f32 %v1004, %v1005
      %v1007 = vsel %vm234, %v983, 0.0
      %v1008 = vrot.slane %v1007, 4
      %v1009 = vadd.f32 %v1007, %v1008
      %v1010 = vrot.slane %v1009, 2
      %v1011 = vadd.f32 %v1009, %v1010
      %v1012 = vrot.slane %v1011, 1
      %v1013 = vadd.f32 %v1011, %v1012
      %v1014 = vmax.f32 %v897, %v992
      %v1015 = vmax.f32 %v898, %v999
      %v1016 = vmax.f32 %v899, %v1006
      %v1017 = vmax.f32 %v900, %v1013
      %v1018 = vsub.f32 %v897, %v1014
      %v1019 = vsub.f32 %v898, %v1015
      %v1020 = vsub.f32 %v899, %v1016
      %v1021 = vsub.f32 %v900, %v1017
      %v1022 = vmul.f32 %v1018, 1.442695
      %v1023 = vpow.pop %v1022
      %v1024 = vmul.f32 %v1019, 1.442695
      %v1025 = vpow.pop %v1024
      %v1026 = vmul.f32 %v1020, 1.442695
      %v1027 = vpow.pop %v1026
      %v1028 = vmul.f32 %v1021, 1.442695
      %v1029 = vpow.pop %v1028
      %v1030 = vsub.f32 %v992, %v1014
      %v1031 = vsub.f32 %v999, %v1015
      %v1032 = vsub.f32 %v1006, %v1016
      %v1033 = vsub.f32 %v1013, %v1017
      %v1034 = vmul.f32 %v1030, 1.442695
      %v1035 = vpow.pop %v1034
      %v1036 = vmul.f32 %v1031, 1.442695
      %v1037 = vpow.pop %v1036
      %v1038 = vmul.f32 %v1032, 1.442695
      %v1039 = vpow.pop %v1038
      %v1040 = vmul.f32 %v1033, 1.442695
      %v1041 = vpow.pop %v1040
      %v1042 = vmul.f32 %v929, %v1023
      %v1043 = vmul.f32 %v930, %v1025
      %v1044 = vmul.f32 %v931, %v1027
      %v1045 = vmul.f32 %v932, %v1029
      %v1046 = vadd.f32 %v1042, %v1035
      %v1047 = vadd.f32 %v1043, %v1037
      %v1048 = vadd.f32 %v1044, %v1039
      %v1049 = vadd.f32 %v1045, %v1041
      %v1050 = vmul.f32 %v937, %v1023
      %v1051 = vmul.f32 %v938, %v1025
      %v1052 = vmul.f32 %v939, %v1027
      %v1053 = vmul.f32 %v940, %v1029
      %v1054 = vsub.f32 %v1050, %v1035
      %v1055 = vsub.f32 %v1051, %v1037
      %v1056 = vsub.f32 %v1052, %v1039
      %v1057 = vsub.f32 %v1053, %v1041
      %v1058 = vmul.f32 %v945, %v1023
      %v1059 = vmul.f32 %v946, %v1025
      %v1060 = vmul.f32 %v947, %v1027
      %v1061 = vmul.f32 %v948, %v1029
      %v1062 = vadd.f32 %v1058, %v1035
      %v1063 = vadd.f32 %v1059, %v1037
      %v1064 = vadd.f32 %v1060, %v1039
      %v1065 = vadd.f32 %v1061, %v1041
      %v1066 = vmul.f32 %v953, %v1023
      %v1067 = vmul.f32 %v954, %v1025
      %v1068 = vmul.f32 %v955, %v1027
      %v1069 = vmul.f32 %v956, %v1029
      %1070 = vrot.lane.b32.xlu0 %v195, 55
      %v1071 = vpop.permute.xlu0 %1070
      %1072 = vrot.lane.b32.xlu0 %v199, 55
      %v1073 = vpop.permute.xlu0 %1072
      %1074 = vrot.lane.b32.xlu0 %v196, 55
      %v1075 = vpop.permute.xlu0 %1074
      %1076 = vrot.lane.b32.xlu0 %v200, 55
      %v1077 = vpop.permute.xlu0 %1076
      %vm1078 = vcmp.lt.s32.totalorder %v212, 55
      %v1079 = vsel %vm1078, %v1075, %v1077
      %v1080 = vsel %vm1078, %v1073, %v1075
      %v1081 = vsel %vm1078, %v1071, %v1073
      %v1082 = vsel %vm1078, %v1077, %v1071
      %v1087 = vcombine.low %v1082, %v1081
      %v1088 = vcombine.low %v1080, %v1079
      %v1091 = vmul.f32 %v193, %v1087
      %v1092 = vmul.f32 %v194, %v1088
      %v1095 = vcombine.high %v1091, %v1091
      %v1096 = vcombine.high %v1092, %v1092
      %v1099 = vsel %vm234, %v1091, 0.0
      %v1100 = vrot.slane %v1099, 4
      %v1101 = vadd.f32 %v1099, %v1100
      %v1102 = vrot.slane %v1101, 2
      %v1103 = vadd.f32 %v1101, %v1102
      %v1104 = vrot.slane %v1103, 1
      %v1105 = vadd.f32 %v1103, %v1104
      %v1106 = vsel %vm234, %v1095, 0.0
      %v1107 = vrot.slane %v1106, 4
      %v1108 = vadd.f32 %v1106, %v1107
      %v1109 = vrot.slane %v1108, 2
      %v1110 = vadd.f32 %v1108, %v1109
      %v1111 = vrot.slane %v1110, 1
      %v1112 = vadd.f32 %v1110, %v1111
      %v1113 = vsel %vm234, %v1092, 0.0
      %v1114 = vrot.slane %v1113, 4
      %v1115 = vadd.f32 %v1113, %v1114
      %v1116 = vrot.slane %v1115, 2
      %v1117 = vadd.f32 %v1115, %v1116
      %v1118 = vrot.slane %v1117, 1
      %v1119 = vadd.f32 %v1117, %v1118
      %v1120 = vsel %vm234, %v1096, 0.0
      %v1121 = vrot.slane %v1120, 4
      %v1122 = vadd.f32 %v1120, %v1121
      %v1123 = vrot.slane %v1122, 2
      %v1124 = vadd.f32 %v1122, %v1123
      %v1125 = vrot.slane %v1124, 1
      %v1126 = vadd.f32 %v1124, %v1125
      %v1127 = vmax.f32 %v1014, %v1105
      %v1128 = vmax.f32 %v1015, %v1112
      %v1129 = vmax.f32 %v1016, %v1119
      %v1130 = vmax.f32 %v1017, %v1126
      %v1131 = vsub.f32 %v1014, %v1127
      %v1132 = vsub.f32 %v1015, %v1128
      %v1133 = vsub.f32 %v1016, %v1129
      %v1134 = vsub.f32 %v1017, %v1130
      %v1135 = vmul.f32 %v1131, 1.442695
      %v1136 = vpow.pop %v1135
      %v1137 = vmul.f32 %v1132, 1.442695
      %v1138 = vpow.pop %v1137
      %v1139 = vmul.f32 %v1133, 1.442695
      %v1140 = vpow.pop %v1139
      %v1141 = vmul.f32 %v1134, 1.442695
      %v1142 = vpow.pop %v1141
      %v1143 = vsub.f32 %v1105, %v1127
      %v1144 = vsub.f32 %v1112, %v1128
      %v1145 = vsub.f32 %v1119, %v1129
      %v1146 = vsub.f32 %v1126, %v1130
      %v1147 = vmul.f32 %v1143, 1.442695
      %v1148 = vpow.pop %v1147
      %v1149 = vmul.f32 %v1144, 1.442695
      %v1150 = vpow.pop %v1149
      %v1151 = vmul.f32 %v1145, 1.442695
      %v1152 = vpow.pop %v1151
      %v1153 = vmul.f32 %v1146, 1.442695
      %v1154 = vpow.pop %v1153
      %v1155 = vmul.f32 %v1046, %v1136
      %v1156 = vmul.f32 %v1047, %v1138
      %v1157 = vmul.f32 %v1048, %v1140
      %v1158 = vmul.f32 %v1049, %v1142
      %v1159 = vadd.f32 %v1155, %v1148
      %v1160 = vadd.f32 %v1156, %v1150
      %v1161 = vadd.f32 %v1157, %v1152
      %v1162 = vadd.f32 %v1158, %v1154
      %v1163 = vmul.f32 %v1054, %v1136
      %v1164 = vmul.f32 %v1055, %v1138
      %v1165 = vmul.f32 %v1056, %v1140
      %v1166 = vmul.f32 %v1057, %v1142
      %v1167 = vsub.f32 %v1163, %v1148
      %v1168 = vsub.f32 %v1164, %v1150
      %v1169 = vsub.f32 %v1165, %v1152
      %v1170 = vsub.f32 %v1166, %v1154
      %v1171 = vmul.f32 %v1062, %v1136
      %v1172 = vmul.f32 %v1063, %v1138
      %v1173 = vmul.f32 %v1064, %v1140
      %v1174 = vmul.f32 %v1065, %v1142
      %v1175 = vadd.f32 %v1171, %v1148
      %v1176 = vadd.f32 %v1172, %v1150
      %v1177 = vadd.f32 %v1173, %v1152
      %v1178 = vadd.f32 %v1174, %v1154
      %v1179 = vmul.f32 %v1066, %v1136
      %v1180 = vmul.f32 %v1067, %v1138
      %v1181 = vmul.f32 %v1068, %v1140
      %v1182 = vmul.f32 %v1069, %v1142
      %v1183 = vadd.f32 %v1179, %v1148
      %v1184 = vadd.f32 %v1180, %v1150
      %v1185 = vadd.f32 %v1181, %v1152
      %v1186 = vadd.f32 %v1182, %v1154
      %1187 = vrot.lane.b32.xlu0 %v195, 9
      %v1188 = vpop.permute.xlu0 %1187
      %1189 = vrot.lane.b32.xlu0 %v199, 9
      %v1190 = vpop.permute.xlu0 %1189
      %1191 = vrot.lane.b32.xlu0 %v196, 9
      %v1192 = vpop.permute.xlu0 %1191
      %1193 = vrot.lane.b32.xlu0 %v200, 9
      %v1194 = vpop.permute.xlu0 %1193
      %vm1195 = vcmp.lt.s32.totalorder %v212, 9
      %v1196 = vsel %vm1195, %v1192, %v1194
      %v1197 = vsel %vm1195, %v1190, %v1192
      %v1198 = vsel %vm1195, %v1188, %v1190
      %v1199 = vsel %vm1195, %v1194, %v1188
      %v1204 = vcombine.low %v1199, %v1198
      %v1205 = vcombine.low %v1197, %v1196
      %v1208 = vmul.f32 %v193, %v1204
      %v1209 = vmul.f32 %v194, %v1205
      %v1212 = vcombine.high %v1208, %v1208
      %v1213 = vcombine.high %v1209, %v1209
      %v1216 = vsel %vm234, %v1208, 0.0
      %v1217 = vrot.slane %v1216, 4
      %v1218 = vadd.f32 %v1216, %v1217
      %v1219 = vrot.slane %v1218, 2
      %v1220 = vadd.f32 %v1218, %v1219
      %v1221 = vrot.slane %v1220, 1
      %v1222 = vadd.f32 %v1220, %v1221
      %v1223 = vsel %vm234, %v1212, 0.0
      %v1224 = vrot.slane %v1223, 4
      %v1225 = vadd.f32 %v1223, %v1224
      %v1226 = vrot.slane %v1225, 2
      %v1227 = vadd.f32 %v1225, %v1226
      %v1228 = vrot.slane %v1227, 1
      %v1229 = vadd.f32 %v1227, %v1228
      %v1230 = vsel %vm234, %v1209, 0.0
      %v1231 = vrot.slane %v1230, 4
      %v1232 = vadd.f32 %v1230, %v1231
      %v1233 = vrot.slane %v1232, 2
      %v1234 = vadd.f32 %v1232, %v1233
      %v1235 = vrot.slane %v1234, 1
      %v1236 = vadd.f32 %v1234, %v1235
      %v1237 = vsel %vm234, %v1213, 0.0
      %v1238 = vrot.slane %v1237, 4
      %v1239 = vadd.f32 %v1237, %v1238
      %v1240 = vrot.slane %v1239, 2
      %v1241 = vadd.f32 %v1239, %v1240
      %v1242 = vrot.slane %v1241, 1
      %v1243 = vadd.f32 %v1241, %v1242
      %v1244 = vmax.f32 %v1127, %v1222
      %v1245 = vmax.f32 %v1128, %v1229
      %v1246 = vmax.f32 %v1129, %v1236
      %v1247 = vmax.f32 %v1130, %v1243
      %v1248 = vsub.f32 %v1127, %v1244
      %v1249 = vsub.f32 %v1128, %v1245
      %v1250 = vsub.f32 %v1129, %v1246
      %v1251 = vsub.f32 %v1130, %v1247
      %v1252 = vmul.f32 %v1248, 1.442695
      %v1253 = vpow.pop %v1252
      %v1254 = vmul.f32 %v1249, 1.442695
      %v1255 = vpow.pop %v1254
      %v1256 = vmul.f32 %v1250, 1.442695
      %v1257 = vpow.pop %v1256
      %v1258 = vmul.f32 %v1251, 1.442695
      %v1259 = vpow.pop %v1258
      %v1260 = vsub.f32 %v1222, %v1244
      %v1261 = vsub.f32 %v1229, %v1245
      %v1262 = vsub.f32 %v1236, %v1246
      %v1263 = vsub.f32 %v1243, %v1247
      %v1264 = vmul.f32 %v1260, 1.442695
      %v1265 = vpow.pop %v1264
      %v1266 = vmul.f32 %v1261, 1.442695
      %v1267 = vpow.pop %v1266
      %v1268 = vmul.f32 %v1262, 1.442695
      %v1269 = vpow.pop %v1268
      %v1270 = vmul.f32 %v1263, 1.442695
      %v1271 = vpow.pop %v1270
      %v1272 = vmul.f32 %v1159, %v1253
      %v1273 = vmul.f32 %v1160, %v1255
      %v1274 = vmul.f32 %v1161, %v1257
      %v1275 = vmul.f32 %v1162, %v1259
      %v1276 = vadd.f32 %v1272, %v1265
      %v1277 = vadd.f32 %v1273, %v1267
      %v1278 = vadd.f32 %v1274, %v1269
      %v1279 = vadd.f32 %v1275, %v1271
      %v1280 = vmul.f32 %v1167, %v1253
      %v1281 = vmul.f32 %v1168, %v1255
      %v1282 = vmul.f32 %v1169, %v1257
      %v1283 = vmul.f32 %v1170, %v1259
      %v1284 = vmul.f32 %v1175, %v1253
      %v1285 = vmul.f32 %v1176, %v1255
      %v1286 = vmul.f32 %v1177, %v1257
      %v1287 = vmul.f32 %v1178, %v1259
      %v1288 = vsub.f32 %v1284, %v1265
      %v1289 = vsub.f32 %v1285, %v1267
      %v1290 = vsub.f32 %v1286, %v1269
      %v1291 = vsub.f32 %v1287, %v1271
      %v1292 = vmul.f32 %v1183, %v1253
      %v1293 = vmul.f32 %v1184, %v1255
      %v1294 = vmul.f32 %v1185, %v1257
      %v1295 = vmul.f32 %v1186, %v1259
      %v1296 = vsub.f32 %v1292, %v1265
      %v1297 = vsub.f32 %v1293, %v1267
      %v1298 = vsub.f32 %v1294, %v1269
      %v1299 = vsub.f32 %v1295, %v1271
      %1300 = vrot.lane.b32.xlu0 %v195, 8
      %v1301 = vpop.permute.xlu0 %1300
      %1302 = vrot.lane.b32.xlu0 %v199, 8
      %v1303 = vpop.permute.xlu0 %1302
      %1304 = vrot.lane.b32.xlu0 %v196, 8
      %v1305 = vpop.permute.xlu0 %1304
      %1306 = vrot.lane.b32.xlu0 %v200, 8
      %v1307 = vpop.permute.xlu0 %1306
      %vm1308 = vcmp.lt.s32.totalorder %v212, 8
      %v1309 = vsel %vm1308, %v1305, %v1307
      %v1310 = vsel %vm1308, %v1303, %v1305
      %v1311 = vsel %vm1308, %v1301, %v1303
      %v1312 = vsel %vm1308, %v1307, %v1301
      %v1317 = vcombine.low %v1312, %v1311
      %v1318 = vcombine.low %v1310, %v1309
      %v1321 = vmul.f32 %v193, %v1317
      %v1322 = vmul.f32 %v194, %v1318
      %v1325 = vcombine.high %v1321, %v1321
      %v1326 = vcombine.high %v1322, %v1322
      %v1329 = vsel %vm234, %v1321, 0.0
      %v1330 = vrot.slane %v1329, 4
      %v1331 = vadd.f32 %v1329, %v1330
      %v1332 = vrot.slane %v1331, 2
      %v1333 = vadd.f32 %v1331, %v1332
      %v1334 = vrot.slane %v1333, 1
      %v1335 = vadd.f32 %v1333, %v1334
      %v1336 = vsel %vm234, %v1325, 0.0
      %v1337 = vrot.slane %v1336, 4
      %v1338 = vadd.f32 %v1336, %v1337
      %v1339 = vrot.slane %v1338, 2
      %v1340 = vadd.f32 %v1338, %v1339
      %v1341 = vrot.slane %v1340, 1
      %v1342 = vadd.f32 %v1340, %v1341
      %v1343 = vsel %vm234, %v1322, 0.0
      %v1344 = vrot.slane %v1343, 4
      %v1345 = vadd.f32 %v1343, %v1344
      %v1346 = vrot.slane %v1345, 2
      %v1347 = vadd.f32 %v1345, %v1346
      %v1348 = vrot.slane %v1347, 1
      %v1349 = vadd.f32 %v1347, %v1348
      %v1350 = vsel %vm234, %v1326, 0.0
      %v1351 = vrot.slane %v1350, 4
      %v1352 = vadd.f32 %v1350, %v1351
      %v1353 = vrot.slane %v1352, 2
      %v1354 = vadd.f32 %v1352, %v1353
      %v1355 = vrot.slane %v1354, 1
      %v1356 = vadd.f32 %v1354, %v1355
      %v1357 = vmax.f32 %v1244, %v1335
      %v1358 = vmax.f32 %v1245, %v1342
      %v1359 = vmax.f32 %v1246, %v1349
      %v1360 = vmax.f32 %v1247, %v1356
      %v1361 = vsub.f32 %v1244, %v1357
      %v1362 = vsub.f32 %v1245, %v1358
      %v1363 = vsub.f32 %v1246, %v1359
      %v1364 = vsub.f32 %v1247, %v1360
      %v1365 = vmul.f32 %v1361, 1.442695
      %v1366 = vpow.pop %v1365
      %v1367 = vmul.f32 %v1362, 1.442695
      %v1368 = vpow.pop %v1367
      %v1369 = vmul.f32 %v1363, 1.442695
      %v1370 = vpow.pop %v1369
      %v1371 = vmul.f32 %v1364, 1.442695
      %v1372 = vpow.pop %v1371
      %v1373 = vsub.f32 %v1335, %v1357
      %v1374 = vsub.f32 %v1342, %v1358
      %v1375 = vsub.f32 %v1349, %v1359
      %v1376 = vsub.f32 %v1356, %v1360
      %v1377 = vmul.f32 %v1373, 1.442695
      %v1378 = vpow.pop %v1377
      %v1379 = vmul.f32 %v1374, 1.442695
      %v1380 = vpow.pop %v1379
      %v1381 = vmul.f32 %v1375, 1.442695
      %v1382 = vpow.pop %v1381
      %v1383 = vmul.f32 %v1376, 1.442695
      %v1384 = vpow.pop %v1383
      %v1385 = vmul.f32 %v1276, %v1366
      %v1386 = vmul.f32 %v1277, %v1368
      %v1387 = vmul.f32 %v1278, %v1370
      %v1388 = vmul.f32 %v1279, %v1372
      %v1389 = vadd.f32 %v1385, %v1378
      %v1390 = vadd.f32 %v1386, %v1380
      %v1391 = vadd.f32 %v1387, %v1382
      %v1392 = vadd.f32 %v1388, %v1384
      %v1393 = vmul.f32 %v1280, %v1366
      %v1394 = vmul.f32 %v1281, %v1368
      %v1395 = vmul.f32 %v1282, %v1370
      %v1396 = vmul.f32 %v1283, %v1372
      %v1397 = vmul.f32 %v1288, %v1366
      %v1398 = vmul.f32 %v1289, %v1368
      %v1399 = vmul.f32 %v1290, %v1370
      %v1400 = vmul.f32 %v1291, %v1372
      %v1401 = vsub.f32 %v1397, %v1378
      %v1402 = vsub.f32 %v1398, %v1380
      %v1403 = vsub.f32 %v1399, %v1382
      %v1404 = vsub.f32 %v1400, %v1384
      %v1405 = vmul.f32 %v1296, %v1366
      %v1406 = vmul.f32 %v1297, %v1368
      %v1407 = vmul.f32 %v1298, %v1370
      %v1408 = vmul.f32 %v1299, %v1372
      %1409 = vrot.lane.b32.xlu0 %v195, 7
      %v1410 = vpop.permute.xlu0 %1409
      %1411 = vrot.lane.b32.xlu0 %v199, 7
      %v1412 = vpop.permute.xlu0 %1411
      %1413 = vrot.lane.b32.xlu0 %v196, 7
      %v1414 = vpop.permute.xlu0 %1413
      %1415 = vrot.lane.b32.xlu0 %v200, 7
      %v1416 = vpop.permute.xlu0 %1415
      %vm1417 = vcmp.lt.s32.totalorder %v212, 7
      %v1418 = vsel %vm1417, %v1414, %v1416
      %v1419 = vsel %vm1417, %v1412, %v1414
      %v1420 = vsel %vm1417, %v1410, %v1412
      %v1421 = vsel %vm1417, %v1416, %v1410
      %v1426 = vcombine.low %v1421, %v1420
      %v1427 = vcombine.low %v1419, %v1418
      %v1430 = vmul.f32 %v193, %v1426
      %v1431 = vmul.f32 %v194, %v1427
      %v1434 = vcombine.high %v1430, %v1430
      %v1435 = vcombine.high %v1431, %v1431
      %v1438 = vsel %vm234, %v1430, 0.0
      %v1439 = vrot.slane %v1438, 4
      %v1440 = vadd.f32 %v1438, %v1439
      %v1441 = vrot.slane %v1440, 2
      %v1442 = vadd.f32 %v1440, %v1441
      %v1443 = vrot.slane %v1442, 1
      %v1444 = vadd.f32 %v1442, %v1443
      %v1445 = vsel %vm234, %v1434, 0.0
      %v1446 = vrot.slane %v1445, 4
      %v1447 = vadd.f32 %v1445, %v1446
      %v1448 = vrot.slane %v1447, 2
      %v1449 = vadd.f32 %v1447, %v1448
      %v1450 = vrot.slane %v1449, 1
      %v1451 = vadd.f32 %v1449, %v1450
      %v1452 = vsel %vm234, %v1431, 0.0
      %v1453 = vrot.slane %v1452, 4
      %v1454 = vadd.f32 %v1452, %v1453
      %v1455 = vrot.slane %v1454, 2
      %v1456 = vadd.f32 %v1454, %v1455
      %v1457 = vrot.slane %v1456, 1
      %v1458 = vadd.f32 %v1456, %v1457
      %v1459 = vsel %vm234, %v1435, 0.0
      %v1460 = vrot.slane %v1459, 4
      %v1461 = vadd.f32 %v1459, %v1460
      %v1462 = vrot.slane %v1461, 2
      %v1463 = vadd.f32 %v1461, %v1462
      %v1464 = vrot.slane %v1463, 1
      %v1465 = vadd.f32 %v1463, %v1464
      %v1466 = vmax.f32 %v1357, %v1444
      %v1467 = vmax.f32 %v1358, %v1451
      %v1468 = vmax.f32 %v1359, %v1458
      %v1469 = vmax.f32 %v1360, %v1465
      %v1470 = vsub.f32 %v1357, %v1466
      %v1471 = vsub.f32 %v1358, %v1467
      %v1472 = vsub.f32 %v1359, %v1468
      %v1473 = vsub.f32 %v1360, %v1469
      %v1474 = vmul.f32 %v1470, 1.442695
      %v1475 = vpow.pop %v1474
      %v1476 = vmul.f32 %v1471, 1.442695
      %v1477 = vpow.pop %v1476
      %v1478 = vmul.f32 %v1472, 1.442695
      %v1479 = vpow.pop %v1478
      %v1480 = vmul.f32 %v1473, 1.442695
      %v1481 = vpow.pop %v1480
      %v1482 = vsub.f32 %v1444, %v1466
      %v1483 = vsub.f32 %v1451, %v1467
      %v1484 = vsub.f32 %v1458, %v1468
      %v1485 = vsub.f32 %v1465, %v1469
      %v1486 = vmul.f32 %v1482, 1.442695
      %v1487 = vpow.pop %v1486
      %v1488 = vmul.f32 %v1483, 1.442695
      %v1489 = vpow.pop %v1488
      %v1490 = vmul.f32 %v1484, 1.442695
      %v1491 = vpow.pop %v1490
      %v1492 = vmul.f32 %v1485, 1.442695
      %v1493 = vpow.pop %v1492
      %v1494 = vmul.f32 %v1389, %v1475
      %v1495 = vmul.f32 %v1390, %v1477
      %v1496 = vmul.f32 %v1391, %v1479
      %v1497 = vmul.f32 %v1392, %v1481
      %v1498 = vadd.f32 %v1494, %v1487
      %v1499 = vadd.f32 %v1495, %v1489
      %v1500 = vadd.f32 %v1496, %v1491
      %v1501 = vadd.f32 %v1497, %v1493
      %v1502 = vmul.f32 %v1393, %v1475
      %v1503 = vmul.f32 %v1394, %v1477
      %v1504 = vmul.f32 %v1395, %v1479
      %v1505 = vmul.f32 %v1396, %v1481
      %v1506 = vmul.f32 %v1401, %v1475
      %v1507 = vmul.f32 %v1402, %v1477
      %v1508 = vmul.f32 %v1403, %v1479
      %v1509 = vmul.f32 %v1404, %v1481
      %v1510 = vsub.f32 %v1506, %v1487
      %v1511 = vsub.f32 %v1507, %v1489
      %v1512 = vsub.f32 %v1508, %v1491
      %v1513 = vsub.f32 %v1509, %v1493
      %v1514 = vmul.f32 %v1405, %v1475
      %v1515 = vmul.f32 %v1406, %v1477
      %v1516 = vmul.f32 %v1407, %v1479
      %v1517 = vmul.f32 %v1408, %v1481
      %v1518 = vadd.f32 %v1514, %v1487
      %v1519 = vadd.f32 %v1515, %v1489
      %v1520 = vadd.f32 %v1516, %v1491
      %v1521 = vadd.f32 %v1517, %v1493
      %1522 = vrot.lane.b32.xlu0 %v195, 1
      %v1523 = vpop.permute.xlu0 %1522
      %1524 = vrot.lane.b32.xlu0 %v199, 1
      %v1525 = vpop.permute.xlu0 %1524
      %1526 = vrot.lane.b32.xlu0 %v196, 1
      %v1527 = vpop.permute.xlu0 %1526
      %1528 = vrot.lane.b32.xlu0 %v200, 1
      %v1529 = vpop.permute.xlu0 %1528
      %vm1530 = vcmp.lt.s32.totalorder %v212, 1
      %v1531 = vsel %vm1530, %v1527, %v1529
      %v1532 = vsel %vm1530, %v1525, %v1527
      %v1533 = vsel %vm1530, %v1523, %v1525
      %v1534 = vsel %vm1530, %v1529, %v1523
      %v1539 = vcombine.low %v1534, %v1533
      %v1540 = vcombine.low %v1532, %v1531
      %v1543 = vmul.f32 %v193, %v1539
      %v1544 = vmul.f32 %v194, %v1540
      %v1547 = vcombine.high %v1543, %v1543
      %v1548 = vcombine.high %v1544, %v1544
      %v1551 = vsel %vm234, %v1543, 0.0
      %v1552 = vrot.slane %v1551, 4
      %v1553 = vadd.f32 %v1551, %v1552
      %v1554 = vrot.slane %v1553, 2
      %v1555 = vadd.f32 %v1553, %v1554
      %v1556 = vrot.slane %v1555, 1
      %v1557 = vadd.f32 %v1555, %v1556
      %v1558 = vsel %vm234, %v1547, 0.0
      %v1559 = vrot.slane %v1558, 4
      %v1560 = vadd.f32 %v1558, %v1559
      %v1561 = vrot.slane %v1560, 2
      %v1562 = vadd.f32 %v1560, %v1561
      %v1563 = vrot.slane %v1562, 1
      %v1564 = vadd.f32 %v1562, %v1563
      %v1565 = vsel %vm234, %v1544, 0.0
      %v1566 = vrot.slane %v1565, 4
      %v1567 = vadd.f32 %v1565, %v1566
      %v1568 = vrot.slane %v1567, 2
      %v1569 = vadd.f32 %v1567, %v1568
      %v1570 = vrot.slane %v1569, 1
      %v1571 = vadd.f32 %v1569, %v1570
      %v1572 = vsel %vm234, %v1548, 0.0
      %v1573 = vrot.slane %v1572, 4
      %v1574 = vadd.f32 %v1572, %v1573
      %v1575 = vrot.slane %v1574, 2
      %v1576 = vadd.f32 %v1574, %v1575
      %v1577 = vrot.slane %v1576, 1
      %v1578 = vadd.f32 %v1576, %v1577
      %v1579 = vmax.f32 %v1466, %v1557
      %v1580 = vmax.f32 %v1467, %v1564
      %v1581 = vmax.f32 %v1468, %v1571
      %v1582 = vmax.f32 %v1469, %v1578
      %v1583 = vsub.f32 %v1466, %v1579
      %v1584 = vsub.f32 %v1467, %v1580
      %v1585 = vsub.f32 %v1468, %v1581
      %v1586 = vsub.f32 %v1469, %v1582
      %v1587 = vmul.f32 %v1583, 1.442695
      %v1588 = vpow.pop %v1587
      %v1589 = vmul.f32 %v1584, 1.442695
      %v1590 = vpow.pop %v1589
      %v1591 = vmul.f32 %v1585, 1.442695
      %v1592 = vpow.pop %v1591
      %v1593 = vmul.f32 %v1586, 1.442695
      %v1594 = vpow.pop %v1593
      %v1595 = vsub.f32 %v1557, %v1579
      %v1596 = vsub.f32 %v1564, %v1580
      %v1597 = vsub.f32 %v1571, %v1581
      %v1598 = vsub.f32 %v1578, %v1582
      %v1599 = vmul.f32 %v1595, 1.442695
      %v1600 = vpow.pop %v1599
      %v1601 = vmul.f32 %v1596, 1.442695
      %v1602 = vpow.pop %v1601
      %v1603 = vmul.f32 %v1597, 1.442695
      %v1604 = vpow.pop %v1603
      %v1605 = vmul.f32 %v1598, 1.442695
      %v1606 = vpow.pop %v1605
      %v1607 = vmul.f32 %v1498, %v1588
      %v1608 = vmul.f32 %v1499, %v1590
      %v1609 = vmul.f32 %v1500, %v1592
      %v1610 = vmul.f32 %v1501, %v1594
      %v1611 = vadd.f32 %v1607, %v1600
      %v1612 = vadd.f32 %v1608, %v1602
      %v1613 = vadd.f32 %v1609, %v1604
      %v1614 = vadd.f32 %v1610, %v1606
      %v1615 = vmul.f32 %v1502, %v1588
      %v1616 = vmul.f32 %v1503, %v1590
      %v1617 = vmul.f32 %v1504, %v1592
      %v1618 = vmul.f32 %v1505, %v1594
      %v1619 = vmul.f32 %v1510, %v1588
      %v1620 = vmul.f32 %v1511, %v1590
      %v1621 = vmul.f32 %v1512, %v1592
      %v1622 = vmul.f32 %v1513, %v1594
      %v1623 = vmul.f32 %v1518, %v1588
      %v1624 = vmul.f32 %v1519, %v1590
      %v1625 = vmul.f32 %v1520, %v1592
      %v1626 = vmul.f32 %v1521, %v1594
      %v1627 = vsub.f32 %v1623, %v1600
      %v1628 = vsub.f32 %v1624, %v1602
      %v1629 = vsub.f32 %v1625, %v1604
      %v1630 = vsub.f32 %v1626, %v1606
      %v1631 = vmul.f32 %v193, %v195
      %v1632 = vmul.f32 %v194, %v196
      %v1635 = vcombine.high %v1631, %v1631
      %v1636 = vcombine.high %v1632, %v1632
      %v1639 = vsel %vm234, %v1631, 0.0
      %v1640 = vrot.slane %v1639, 4
      %v1641 = vadd.f32 %v1639, %v1640
      %v1642 = vrot.slane %v1641, 2
      %v1643 = vadd.f32 %v1641, %v1642
      %v1644 = vrot.slane %v1643, 1
      %v1645 = vadd.f32 %v1643, %v1644
      %v1646 = vsel %vm234, %v1635, 0.0
      %v1647 = vrot.slane %v1646, 4
      %v1648 = vadd.f32 %v1646, %v1647
      %v1649 = vrot.slane %v1648, 2
      %v1650 = vadd.f32 %v1648, %v1649
      %v1651 = vrot.slane %v1650, 1
      %v1652 = vadd.f32 %v1650, %v1651
      %v1653 = vsel %vm234, %v1632, 0.0
      %v1654 = vrot.slane %v1653, 4
      %v1655 = vadd.f32 %v1653, %v1654
      %v1656 = vrot.slane %v1655, 2
      %v1657 = vadd.f32 %v1655, %v1656
      %v1658 = vrot.slane %v1657, 1
      %v1659 = vadd.f32 %v1657, %v1658
      %v1660 = vsel %vm234, %v1636, 0.0
      %v1661 = vrot.slane %v1660, 4
      %v1662 = vadd.f32 %v1660, %v1661
      %v1663 = vrot.slane %v1662, 2
      %v1664 = vadd.f32 %v1662, %v1663
      %v1665 = vrot.slane %v1664, 1
      %v1666 = vadd.f32 %v1664, %v1665
      %v1667 = vmax.f32 %v1579, %v1645
      %v1668 = vmax.f32 %v1580, %v1652
      %v1669 = vmax.f32 %v1581, %v1659
      %v1670 = vmax.f32 %v1582, %v1666
      %v1671 = vsub.f32 %v1579, %v1667
      %v1672 = vsub.f32 %v1580, %v1668
      %v1673 = vsub.f32 %v1581, %v1669
      %v1674 = vsub.f32 %v1582, %v1670
      %v1675 = vmul.f32 %v1671, 1.442695
      %v1676 = vpow.pop %v1675
      %v1677 = vmul.f32 %v1672, 1.442695
      %v1678 = vpow.pop %v1677
      %v1679 = vmul.f32 %v1673, 1.442695
      %v1680 = vpow.pop %v1679
      %v1681 = vmul.f32 %v1674, 1.442695
      %v1682 = vpow.pop %v1681
      %v1683 = vsub.f32 %v1645, %v1667
      %v1684 = vsub.f32 %v1652, %v1668
      %v1685 = vsub.f32 %v1659, %v1669
      %v1686 = vsub.f32 %v1666, %v1670
      %v1687 = vmul.f32 %v1683, 1.442695
      %v1688 = vpow.pop %v1687
      %v1689 = vmul.f32 %v1684, 1.442695
      %v1690 = vpow.pop %v1689
      %v1691 = vmul.f32 %v1685, 1.442695
      %v1692 = vpow.pop %v1691
      %v1693 = vmul.f32 %v1686, 1.442695
      %v1694 = vpow.pop %v1693
      %v1695 = vmul.f32 %v1611, %v1676
      %v1696 = vmul.f32 %v1612, %v1678
      %v1697 = vmul.f32 %v1613, %v1680
      %v1698 = vmul.f32 %v1614, %v1682
      %v1699 = vadd.f32 %v1695, %v1688
      %v1700 = vadd.f32 %v1696, %v1690
      %v1701 = vadd.f32 %v1697, %v1692
      %v1702 = vadd.f32 %v1698, %v1694
      %v1703 = vmul.f32 %v1615, %v1676
      %v1704 = vmul.f32 %v1616, %v1678
      %v1705 = vmul.f32 %v1617, %v1680
      %v1706 = vmul.f32 %v1618, %v1682
      %v1707 = vmul.f32 %v1619, %v1676
      %v1708 = vmul.f32 %v1620, %v1678
      %v1709 = vmul.f32 %v1621, %v1680
      %v1710 = vmul.f32 %v1622, %v1682
      %v1711 = vmul.f32 %v1627, %v1676
      %v1712 = vmul.f32 %v1628, %v1678
      %v1713 = vmul.f32 %v1629, %v1680
      %v1714 = vmul.f32 %v1630, %v1682
      %1715 = vrot.lane.b32.xlu0 %v195, 127
      %v1716 = vpop.permute.xlu0 %1715
      %1717 = vrot.lane.b32.xlu0 %v199, 127
      %v1718 = vpop.permute.xlu0 %1717
      %1719 = vrot.lane.b32.xlu0 %v196, 127
      %v1720 = vpop.permute.xlu0 %1719
      %1721 = vrot.lane.b32.xlu0 %v200, 127
      %v1722 = vpop.permute.xlu0 %1721
      %vm1723 = vcmp.lt.s32.totalorder %v212, 127
      %v1724 = vsel %vm1723, %v1720, %v1722
      %v1725 = vsel %vm1723, %v1718, %v1720
      %v1726 = vsel %vm1723, %v1716, %v1718
      %v1727 = vsel %vm1723, %v1722, %v1716
      %v1732 = vcombine.low %v1726, %v1725
      %v1733 = vcombine.low %v1724, %v1727
      %v1736 = vmul.f32 %v193, %v1732
      %v1737 = vmul.f32 %v194, %v1733
      %v1740 = vcombine.high %v1736, %v1736
      %v1741 = vcombine.high %v1737, %v1737
      %v1744 = vsel %vm234, %v1736, 0.0
      %v1745 = vrot.slane %v1744, 4
      %v1746 = vadd.f32 %v1744, %v1745
      %v1747 = vrot.slane %v1746, 2
      %v1748 = vadd.f32 %v1746, %v1747
      %v1749 = vrot.slane %v1748, 1
      %v1750 = vadd.f32 %v1748, %v1749
      %v1751 = vsel %vm234, %v1740, 0.0
      %v1752 = vrot.slane %v1751, 4
      %v1753 = vadd.f32 %v1751, %v1752
      %v1754 = vrot.slane %v1753, 2
      %v1755 = vadd.f32 %v1753, %v1754
      %v1756 = vrot.slane %v1755, 1
      %v1757 = vadd.f32 %v1755, %v1756
      %v1758 = vsel %vm234, %v1737, 0.0
      %v1759 = vrot.slane %v1758, 4
      %v1760 = vadd.f32 %v1758, %v1759
      %v1761 = vrot.slane %v1760, 2
      %v1762 = vadd.f32 %v1760, %v1761
      %v1763 = vrot.slane %v1762, 1
      %v1764 = vadd.f32 %v1762, %v1763
      %v1765 = vsel %vm234, %v1741, 0.0
      %v1766 = vrot.slane %v1765, 4
      %v1767 = vadd.f32 %v1765, %v1766
      %v1768 = vrot.slane %v1767, 2
      %v1769 = vadd.f32 %v1767, %v1768
      %v1770 = vrot.slane %v1769, 1
      %v1771 = vadd.f32 %v1769, %v1770
      %v1772 = vmax.f32 %v1667, %v1750
      %v1773 = vmax.f32 %v1668, %v1757
      %v1774 = vmax.f32 %v1669, %v1764
      %v1775 = vmax.f32 %v1670, %v1771
      %v1776 = vsub.f32 %v1667, %v1772
      %v1777 = vsub.f32 %v1668, %v1773
      %v1778 = vsub.f32 %v1669, %v1774
      %v1779 = vsub.f32 %v1670, %v1775
      %v1780 = vmul.f32 %v1776, 1.442695
      %v1781 = vpow.pop %v1780
      %v1782 = vmul.f32 %v1777, 1.442695
      %v1783 = vpow.pop %v1782
      %v1784 = vmul.f32 %v1778, 1.442695
      %v1785 = vpow.pop %v1784
      %v1786 = vmul.f32 %v1779, 1.442695
      %v1787 = vpow.pop %v1786
      %v1788 = vsub.f32 %v1750, %v1772
      %v1789 = vsub.f32 %v1757, %v1773
      %v1790 = vsub.f32 %v1764, %v1774
      %v1791 = vsub.f32 %v1771, %v1775
      %v1792 = vmul.f32 %v1788, 1.442695
      %v1793 = vpow.pop %v1792
      %v1794 = vmul.f32 %v1789, 1.442695
      %v1795 = vpow.pop %v1794
      %v1796 = vmul.f32 %v1790, 1.442695
      %v1797 = vpow.pop %v1796
      %v1798 = vmul.f32 %v1791, 1.442695
      %v1799 = vpow.pop %v1798
      %v1800 = vmul.f32 %v1699, %v1781
      %v1801 = vmul.f32 %v1700, %v1783
      %v1802 = vmul.f32 %v1701, %v1785
      %v1803 = vmul.f32 %v1702, %v1787
      %v1804 = vadd.f32 %v1800, %v1793
      %v1805 = vadd.f32 %v1801, %v1795
      %v1806 = vadd.f32 %v1802, %v1797
      %v1807 = vadd.f32 %v1803, %v1799
      %v1808 = vmul.f32 %v1703, %v1781
      %v1809 = vmul.f32 %v1704, %v1783
      %v1810 = vmul.f32 %v1705, %v1785
      %v1811 = vmul.f32 %v1706, %v1787
      %v1812 = vmul.f32 %v1707, %v1781
      %v1813 = vmul.f32 %v1708, %v1783
      %v1814 = vmul.f32 %v1709, %v1785
      %v1815 = vmul.f32 %v1710, %v1787
      %v1816 = vmul.f32 %v1711, %v1781
      %v1817 = vmul.f32 %v1712, %v1783
      %v1818 = vmul.f32 %v1713, %v1785
      %v1819 = vmul.f32 %v1714, %v1787
      %v1820 = vadd.f32 %v1816, %v1793
      %v1821 = vadd.f32 %v1817, %v1795
      %v1822 = vadd.f32 %v1818, %v1797
      %v1823 = vadd.f32 %v1819, %v1799
      %1824 = vrot.lane.b32.xlu0 %v195, 121
      %v1825 = vpop.permute.xlu0 %1824
      %1826 = vrot.lane.b32.xlu0 %v199, 121
      %v1827 = vpop.permute.xlu0 %1826
      %1828 = vrot.lane.b32.xlu0 %v196, 121
      %v1829 = vpop.permute.xlu0 %1828
      %1830 = vrot.lane.b32.xlu0 %v200, 121
      %v1831 = vpop.permute.xlu0 %1830
      %vm1832 = vcmp.lt.s32.totalorder %v212, 121
      %v1833 = vsel %vm1832, %v1829, %v1831
      %v1834 = vsel %vm1832, %v1827, %v1829
      %v1835 = vsel %vm1832, %v1825, %v1827
      %v1836 = vsel %vm1832, %v1831, %v1825
      %v1841 = vcombine.low %v1835, %v1834
      %v1842 = vcombine.low %v1833, %v1836
      %v1845 = vmul.f32 %v193, %v1841
      %v1846 = vmul.f32 %v194, %v1842
      %v1849 = vcombine.high %v1845, %v1845
      %v1850 = vcombine.high %v1846, %v1846
      %v1853 = vsel %vm234, %v1845, 0.0
      %v1854 = vrot.slane %v1853, 4
      %v1855 = vadd.f32 %v1853, %v1854
      %v1856 = vrot.slane %v1855, 2
      %v1857 = vadd.f32 %v1855, %v1856
      %v1858 = vrot.slane %v1857, 1
      %v1859 = vadd.f32 %v1857, %v1858
      %v1860 = vsel %vm234, %v1849, 0.0
      %v1861 = vrot.slane %v1860, 4
      %v1862 = vadd.f32 %v1860, %v1861
      %v1863 = vrot.slane %v1862, 2
      %v1864 = vadd.f32 %v1862, %v1863
      %v1865 = vrot.slane %v1864, 1
      %v1866 = vadd.f32 %v1864, %v1865
      %v1867 = vsel %vm234, %v1846, 0.0
      %v1868 = vrot.slane %v1867, 4
      %v1869 = vadd.f32 %v1867, %v1868
      %v1870 = vrot.slane %v1869, 2
      %v1871 = vadd.f32 %v1869, %v1870
      %v1872 = vrot.slane %v1871, 1
      %v1873 = vadd.f32 %v1871, %v1872
      %v1874 = vsel %vm234, %v1850, 0.0
      %v1875 = vrot.slane %v1874, 4
      %v1876 = vadd.f32 %v1874, %v1875
      %v1877 = vrot.slane %v1876, 2
      %v1878 = vadd.f32 %v1876, %v1877
      %v1879 = vrot.slane %v1878, 1
      %v1880 = vadd.f32 %v1878, %v1879
      %v1881 = vmax.f32 %v1772, %v1859
      %v1882 = vmax.f32 %v1773, %v1866
      %v1883 = vmax.f32 %v1774, %v1873
      %v1884 = vmax.f32 %v1775, %v1880
      %v1885 = vsub.f32 %v1772, %v1881
      %v1886 = vsub.f32 %v1773, %v1882
      %v1887 = vsub.f32 %v1774, %v1883
      %v1888 = vsub.f32 %v1775, %v1884
      %v1889 = vmul.f32 %v1885, 1.442695
      %v1890 = vpow.pop %v1889
      %v1891 = vmul.f32 %v1886, 1.442695
      %v1892 = vpow.pop %v1891
      %v1893 = vmul.f32 %v1887, 1.442695
      %v1894 = vpow.pop %v1893
      %v1895 = vmul.f32 %v1888, 1.442695
      %v1896 = vpow.pop %v1895
      %v1897 = vsub.f32 %v1859, %v1881
      %v1898 = vsub.f32 %v1866, %v1882
      %v1899 = vsub.f32 %v1873, %v1883
      %v1900 = vsub.f32 %v1880, %v1884
      %v1901 = vmul.f32 %v1897, 1.442695
      %v1902 = vpow.pop %v1901
      %v1903 = vmul.f32 %v1898, 1.442695
      %v1904 = vpow.pop %v1903
      %v1905 = vmul.f32 %v1899, 1.442695
      %v1906 = vpow.pop %v1905
      %v1907 = vmul.f32 %v1900, 1.442695
      %v1908 = vpow.pop %v1907
      %v1909 = vmul.f32 %v1804, %v1890
      %v1910 = vmul.f32 %v1805, %v1892
      %v1911 = vmul.f32 %v1806, %v1894
      %v1912 = vmul.f32 %v1807, %v1896
      %v1913 = vadd.f32 %v1909, %v1902
      %v1914 = vadd.f32 %v1910, %v1904
      %v1915 = vadd.f32 %v1911, %v1906
      %v1916 = vadd.f32 %v1912, %v1908
      %v1917 = vmul.f32 %v1808, %v1890
      %v1918 = vmul.f32 %v1809, %v1892
      %v1919 = vmul.f32 %v1810, %v1894
      %v1920 = vmul.f32 %v1811, %v1896
      %v1921 = vmul.f32 %v1812, %v1890
      %v1922 = vmul.f32 %v1813, %v1892
      %v1923 = vmul.f32 %v1814, %v1894
      %v1924 = vmul.f32 %v1815, %v1896
      %v1925 = vadd.f32 %v1921, %v1902
      %v1926 = vadd.f32 %v1922, %v1904
      %v1927 = vadd.f32 %v1923, %v1906
      %v1928 = vadd.f32 %v1924, %v1908
      %v1929 = vmul.f32 %v1820, %v1890
      %v1930 = vmul.f32 %v1821, %v1892
      %v1931 = vmul.f32 %v1822, %v1894
      %v1932 = vmul.f32 %v1823, %v1896
      %v1933 = vsub.f32 %v1929, %v1902
      %v1934 = vsub.f32 %v1930, %v1904
      %v1935 = vsub.f32 %v1931, %v1906
      %v1936 = vsub.f32 %v1932, %v1908
      %1937 = vrot.lane.b32.xlu0 %v195, 120
      %v1938 = vpop.permute.xlu0 %1937
      %1939 = vrot.lane.b32.xlu0 %v199, 120
      %v1940 = vpop.permute.xlu0 %1939
      %1941 = vrot.lane.b32.xlu0 %v196, 120
      %v1942 = vpop.permute.xlu0 %1941
      %1943 = vrot.lane.b32.xlu0 %v200, 120
      %v1944 = vpop.permute.xlu0 %1943
      %vm1945 = vcmp.lt.s32.totalorder %v212, 120
      %v1946 = vsel %vm1945, %v1942, %v1944
      %v1947 = vsel %vm1945, %v1940, %v1942
      %v1948 = vsel %vm1945, %v1938, %v1940
      %v1949 = vsel %vm1945, %v1944, %v1938
      %v1954 = vcombine.low %v1948, %v1947
      %v1955 = vcombine.low %v1946, %v1949
      %v1958 = vmul.f32 %v193, %v1954
      %v1959 = vmul.f32 %v194, %v1955
      %v1962 = vcombine.high %v1958, %v1958
      %v1963 = vcombine.high %v1959, %v1959
      %v1966 = vsel %vm234, %v1958, 0.0
      %v1967 = vrot.slane %v1966, 4
      %v1968 = vadd.f32 %v1966, %v1967
      %v1969 = vrot.slane %v1968, 2
      %v1970 = vadd.f32 %v1968, %v1969
      %v1971 = vrot.slane %v1970, 1
      %v1972 = vadd.f32 %v1970, %v1971
      %v1973 = vsel %vm234, %v1962, 0.0
      %v1974 = vrot.slane %v1973, 4
      %v1975 = vadd.f32 %v1973, %v1974
      %v1976 = vrot.slane %v1975, 2
      %v1977 = vadd.f32 %v1975, %v1976
      %v1978 = vrot.slane %v1977, 1
      %v1979 = vadd.f32 %v1977, %v1978
      %v1980 = vsel %vm234, %v1959, 0.0
      %v1981 = vrot.slane %v1980, 4
      %v1982 = vadd.f32 %v1980, %v1981
      %v1983 = vrot.slane %v1982, 2
      %v1984 = vadd.f32 %v1982, %v1983
      %v1985 = vrot.slane %v1984, 1
      %v1986 = vadd.f32 %v1984, %v1985
      %v1987 = vsel %vm234, %v1963, 0.0
      %v1988 = vrot.slane %v1987, 4
      %v1989 = vadd.f32 %v1987, %v1988
      %v1990 = vrot.slane %v1989, 2
      %v1991 = vadd.f32 %v1989, %v1990
      %v1992 = vrot.slane %v1991, 1
      %v1993 = vadd.f32 %v1991, %v1992
      %v1994 = vmax.f32 %v1881, %v1972
      %v1995 = vmax.f32 %v1882, %v1979
      %v1996 = vmax.f32 %v1883, %v1986
      %v1997 = vmax.f32 %v1884, %v1993
      %v1998 = vsub.f32 %v1881, %v1994
      %v1999 = vsub.f32 %v1882, %v1995
      %v2000 = vsub.f32 %v1883, %v1996
      %v2001 = vsub.f32 %v1884, %v1997
      %v2002 = vmul.f32 %v1998, 1.442695
      %v2003 = vpow.pop %v2002
      %v2004 = vmul.f32 %v1999, 1.442695
      %v2005 = vpow.pop %v2004
      %v2006 = vmul.f32 %v2000, 1.442695
      %v2007 = vpow.pop %v2006
      %v2008 = vmul.f32 %v2001, 1.442695
      %v2009 = vpow.pop %v2008
      %v2010 = vsub.f32 %v1972, %v1994
      %v2011 = vsub.f32 %v1979, %v1995
      %v2012 = vsub.f32 %v1986, %v1996
      %v2013 = vsub.f32 %v1993, %v1997
      %v2014 = vmul.f32 %v2010, 1.442695
      %v2015 = vpow.pop %v2014
      %v2016 = vmul.f32 %v2011, 1.442695
      %v2017 = vpow.pop %v2016
      %v2018 = vmul.f32 %v2012, 1.442695
      %v2019 = vpow.pop %v2018
      %v2020 = vmul.f32 %v2013, 1.442695
      %v2021 = vpow.pop %v2020
      %v2022 = vmul.f32 %v1913, %v2003
      %v2023 = vmul.f32 %v1914, %v2005
      %v2024 = vmul.f32 %v1915, %v2007
      %v2025 = vmul.f32 %v1916, %v2009
      %v2026 = vadd.f32 %v2022, %v2015
      %v2027 = vadd.f32 %v2023, %v2017
      %v2028 = vadd.f32 %v2024, %v2019
      %v2029 = vadd.f32 %v2025, %v2021
      %v2030 = vmul.f32 %v1917, %v2003
      %v2031 = vmul.f32 %v1918, %v2005
      %v2032 = vmul.f32 %v1919, %v2007
      %v2033 = vmul.f32 %v1920, %v2009
      %v2034 = vmul.f32 %v1925, %v2003
      %v2035 = vmul.f32 %v1926, %v2005
      %v2036 = vmul.f32 %v1927, %v2007
      %v2037 = vmul.f32 %v1928, %v2009
      %v2038 = vadd.f32 %v2034, %v2015
      %v2039 = vadd.f32 %v2035, %v2017
      %v2040 = vadd.f32 %v2036, %v2019
      %v2041 = vadd.f32 %v2037, %v2021
      %v2042 = vmul.f32 %v1933, %v2003
      %v2043 = vmul.f32 %v1934, %v2005
      %v2044 = vmul.f32 %v1935, %v2007
      %v2045 = vmul.f32 %v1936, %v2009
      %2046 = vrot.lane.b32.xlu0 %v195, 119
      %v2047 = vpop.permute.xlu0 %2046
      %2048 = vrot.lane.b32.xlu0 %v199, 119
      %v2049 = vpop.permute.xlu0 %2048
      %2050 = vrot.lane.b32.xlu0 %v196, 119
      %v2051 = vpop.permute.xlu0 %2050
      %2052 = vrot.lane.b32.xlu0 %v200, 119
      %v2053 = vpop.permute.xlu0 %2052
      %vm2054 = vcmp.lt.s32.totalorder %v212, 119
      %v2055 = vsel %vm2054, %v2051, %v2053
      %v2056 = vsel %vm2054, %v2049, %v2051
      %v2057 = vsel %vm2054, %v2047, %v2049
      %v2058 = vsel %vm2054, %v2053, %v2047
      %v2063 = vcombine.low %v2057, %v2056
      %v2064 = vcombine.low %v2055, %v2058
      %v2067 = vmul.f32 %v193, %v2063
      %v2068 = vmul.f32 %v194, %v2064
      %v2071 = vcombine.high %v2067, %v2067
      %v2072 = vcombine.high %v2068, %v2068
      %v2075 = vsel %vm234, %v2067, 0.0
      %v2076 = vrot.slane %v2075, 4
      %v2077 = vadd.f32 %v2075, %v2076
      %v2078 = vrot.slane %v2077, 2
      %v2079 = vadd.f32 %v2077, %v2078
      %v2080 = vrot.slane %v2079, 1
      %v2081 = vadd.f32 %v2079, %v2080
      %v2082 = vsel %vm234, %v2071, 0.0
      %v2083 = vrot.slane %v2082, 4
      %v2084 = vadd.f32 %v2082, %v2083
      %v2085 = vrot.slane %v2084, 2
      %v2086 = vadd.f32 %v2084, %v2085
      %v2087 = vrot.slane %v2086, 1
      %v2088 = vadd.f32 %v2086, %v2087
      %v2089 = vsel %vm234, %v2068, 0.0
      %v2090 = vrot.slane %v2089, 4
      %v2091 = vadd.f32 %v2089, %v2090
      %v2092 = vrot.slane %v2091, 2
      %v2093 = vadd.f32 %v2091, %v2092
      %v2094 = vrot.slane %v2093, 1
      %v2095 = vadd.f32 %v2093, %v2094
      %v2096 = vsel %vm234, %v2072, 0.0
      %v2097 = vrot.slane %v2096, 4
      %v2098 = vadd.f32 %v2096, %v2097
      %v2099 = vrot.slane %v2098, 2
      %v2100 = vadd.f32 %v2098, %v2099
      %v2101 = vrot.slane %v2100, 1
      %v2102 = vadd.f32 %v2100, %v2101
      %v2103 = vmax.f32 %v1994, %v2081
      %v2104 = vmax.f32 %v1995, %v2088
      %v2105 = vmax.f32 %v1996, %v2095
      %v2106 = vmax.f32 %v1997, %v2102
      %v2107 = vsub.f32 %v1994, %v2103
      %v2108 = vsub.f32 %v1995, %v2104
      %v2109 = vsub.f32 %v1996, %v2105
      %v2110 = vsub.f32 %v1997, %v2106
      %v2111 = vmul.f32 %v2107, 1.442695
      %v2112 = vpow.pop %v2111
      %v2113 = vmul.f32 %v2108, 1.442695
      %v2114 = vpow.pop %v2113
      %v2115 = vmul.f32 %v2109, 1.442695
      %v2116 = vpow.pop %v2115
      %v2117 = vmul.f32 %v2110, 1.442695
      %v2118 = vpow.pop %v2117
      %v2119 = vsub.f32 %v2081, %v2103
      %v2120 = vsub.f32 %v2088, %v2104
      %v2121 = vsub.f32 %v2095, %v2105
      %v2122 = vsub.f32 %v2102, %v2106
      %v2123 = vmul.f32 %v2119, 1.442695
      %v2124 = vpow.pop %v2123
      %v2125 = vmul.f32 %v2120, 1.442695
      %v2126 = vpow.pop %v2125
      %v2127 = vmul.f32 %v2121, 1.442695
      %v2128 = vpow.pop %v2127
      %v2129 = vmul.f32 %v2122, 1.442695
      %v2130 = vpow.pop %v2129
      %v2131 = vmul.f32 %v2026, %v2112
      %v2132 = vmul.f32 %v2027, %v2114
      %v2133 = vmul.f32 %v2028, %v2116
      %v2134 = vmul.f32 %v2029, %v2118
      %v2135 = vadd.f32 %v2131, %v2124
      %v2136 = vadd.f32 %v2132, %v2126
      %v2137 = vadd.f32 %v2133, %v2128
      %v2138 = vadd.f32 %v2134, %v2130
      %v2139 = vmul.f32 %v2030, %v2112
      %v2140 = vmul.f32 %v2031, %v2114
      %v2141 = vmul.f32 %v2032, %v2116
      %v2142 = vmul.f32 %v2033, %v2118
      %v2143 = vmul.f32 %v2038, %v2112
      %v2144 = vmul.f32 %v2039, %v2114
      %v2145 = vmul.f32 %v2040, %v2116
      %v2146 = vmul.f32 %v2041, %v2118
      %v2147 = vadd.f32 %v2143, %v2124
      %v2148 = vadd.f32 %v2144, %v2126
      %v2149 = vadd.f32 %v2145, %v2128
      %v2150 = vadd.f32 %v2146, %v2130
      %v2151 = vmul.f32 %v2042, %v2112
      %v2152 = vmul.f32 %v2043, %v2114
      %v2153 = vmul.f32 %v2044, %v2116
      %v2154 = vmul.f32 %v2045, %v2118
      %v2155 = vadd.f32 %v2151, %v2124
      %v2156 = vadd.f32 %v2152, %v2126
      %v2157 = vadd.f32 %v2153, %v2128
      %v2158 = vadd.f32 %v2154, %v2130
      %v2159 = vcombine.low %v216, %v215
      %v2160 = vcombine.low %v214, %v217
      %v2163 = vmul.f32 %v193, %v2159
      %v2164 = vmul.f32 %v194, %v2160
      %v2167 = vcombine.high %v2163, %v2163
      %v2168 = vcombine.high %v2164, %v2164
      %v2171 = vsel %vm234, %v2163, 0.0
      %v2172 = vrot.slane %v2171, 4
      %v2173 = vadd.f32 %v2171, %v2172
      %v2174 = vrot.slane %v2173, 2
      %v2175 = vadd.f32 %v2173, %v2174
      %v2176 = vrot.slane %v2175, 1
      %v2177 = vadd.f32 %v2175, %v2176
      %v2178 = vsel %vm234, %v2167, 0.0
      %v2179 = vrot.slane %v2178, 4
      %v2180 = vadd.f32 %v2178, %v2179
      %v2181 = vrot.slane %v2180, 2
      %v2182 = vadd.f32 %v2180, %v2181
      %v2183 = vrot.slane %v2182, 1
      %v2184 = vadd.f32 %v2182, %v2183
      %v2185 = vsel %vm234, %v2164, 0.0
      %v2186 = vrot.slane %v2185, 4
      %v2187 = vadd.f32 %v2185, %v2186
      %v2188 = vrot.slane %v2187, 2
      %v2189 = vadd.f32 %v2187, %v2188
      %v2190 = vrot.slane %v2189, 1
      %v2191 = vadd.f32 %v2189, %v2190
      %v2192 = vsel %vm234, %v2168, 0.0
      %v2193 = vrot.slane %v2192, 4
      %v2194 = vadd.f32 %v2192, %v2193
      %v2195 = vrot.slane %v2194, 2
      %v2196 = vadd.f32 %v2194, %v2195
      %v2197 = vrot.slane %v2196, 1
      %v2198 = vadd.f32 %v2196, %v2197
      %v2199 = vmax.f32 %v2103, %v2177
      %v2200 = vmax.f32 %v2104, %v2184
      %v2201 = vmax.f32 %v2105, %v2191
      %v2202 = vmax.f32 %v2106, %v2198
      %v2203 = vsub.f32 %v2103, %v2199
      %v2204 = vsub.f32 %v2104, %v2200
      %v2205 = vsub.f32 %v2105, %v2201
      %v2206 = vsub.f32 %v2106, %v2202
      %v2207 = vmul.f32 %v2203, 1.442695
      %v2208 = vpow.pop %v2207
      %v2209 = vmul.f32 %v2204, 1.442695
      %v2210 = vpow.pop %v2209
      %v2211 = vmul.f32 %v2205, 1.442695
      %v2212 = vpow.pop %v2211
      %v2213 = vmul.f32 %v2206, 1.442695
      %v2214 = vpow.pop %v2213
      %v2215 = vsub.f32 %v2177, %v2199
      %v2216 = vsub.f32 %v2184, %v2200
      %v2217 = vsub.f32 %v2191, %v2201
      %v2218 = vsub.f32 %v2198, %v2202
      %v2219 = vmul.f32 %v2215, 1.442695
      %v2220 = vpow.pop %v2219
      %v2221 = vmul.f32 %v2216, 1.442695
      %v2222 = vpow.pop %v2221
      %v2223 = vmul.f32 %v2217, 1.442695
      %v2224 = vpow.pop %v2223
      %v2225 = vmul.f32 %v2218, 1.442695
      %v2226 = vpow.pop %v2225
      %v2227 = vmul.f32 %v2135, %v2208
      %v2228 = vmul.f32 %v2136, %v2210
      %v2229 = vmul.f32 %v2137, %v2212
      %v2230 = vmul.f32 %v2138, %v2214
      %v2231 = vadd.f32 %v2227, %v2220
      %v2232 = vadd.f32 %v2228, %v2222
      %v2233 = vadd.f32 %v2229, %v2224
      %v2234 = vadd.f32 %v2230, %v2226
      %v2235 = vmul.f32 %v2139, %v2208
      %v2236 = vmul.f32 %v2140, %v2210
      %v2237 = vmul.f32 %v2141, %v2212
      %v2238 = vmul.f32 %v2142, %v2214
      %v2239 = vadd.f32 %v2235, %v2220
      %v2240 = vadd.f32 %v2236, %v2222
      %v2241 = vadd.f32 %v2237, %v2224
      %v2242 = vadd.f32 %v2238, %v2226
      %v2243 = vmul.f32 %v2147, %v2208
      %v2244 = vmul.f32 %v2148, %v2210
      %v2245 = vmul.f32 %v2149, %v2212
      %v2246 = vmul.f32 %v2150, %v2214
      %v2247 = vsub.f32 %v2243, %v2220
      %v2248 = vsub.f32 %v2244, %v2222
      %v2249 = vsub.f32 %v2245, %v2224
      %v2250 = vsub.f32 %v2246, %v2226
      %v2251 = vmul.f32 %v2155, %v2208
      %v2252 = vmul.f32 %v2156, %v2210
      %v2253 = vmul.f32 %v2157, %v2212
      %v2254 = vmul.f32 %v2158, %v2214
      %v2255 = vsub.f32 %v2251, %v2220
      %v2256 = vsub.f32 %v2252, %v2222
      %v2257 = vsub.f32 %v2253, %v2224
      %v2258 = vsub.f32 %v2254, %v2226
      %v2259 = vcombine.low %v310, %v309
      %v2260 = vcombine.low %v308, %v311
      %v2263 = vmul.f32 %v193, %v2259
      %v2264 = vmul.f32 %v194, %v2260
      %v2267 = vcombine.high %v2263, %v2263
      %v2268 = vcombine.high %v2264, %v2264
      %v2271 = vsel %vm234, %v2263, 0.0
      %v2272 = vrot.slane %v2271, 4
      %v2273 = vadd.f32 %v2271, %v2272
      %v2274 = vrot.slane %v2273, 2
      %v2275 = vadd.f32 %v2273, %v2274
      %v2276 = vrot.slane %v2275, 1
      %v2277 = vadd.f32 %v2275, %v2276
      %v2278 = vsel %vm234, %v2267, 0.0
      %v2279 = vrot.slane %v2278, 4
      %v2280 = vadd.f32 %v2278, %v2279
      %v2281 = vrot.slane %v2280, 2
      %v2282 = vadd.f32 %v2280, %v2281
      %v2283 = vrot.slane %v2282, 1
      %v2284 = vadd.f32 %v2282, %v2283
      %v2285 = vsel %vm234, %v2264, 0.0
      %v2286 = vrot.slane %v2285, 4
      %v2287 = vadd.f32 %v2285, %v2286
      %v2288 = vrot.slane %v2287, 2
      %v2289 = vadd.f32 %v2287, %v2288
      %v2290 = vrot.slane %v2289, 1
      %v2291 = vadd.f32 %v2289, %v2290
      %v2292 = vsel %vm234, %v2268, 0.0
      %v2293 = vrot.slane %v2292, 4
      %v2294 = vadd.f32 %v2292, %v2293
      %v2295 = vrot.slane %v2294, 2
      %v2296 = vadd.f32 %v2294, %v2295
      %v2297 = vrot.slane %v2296, 1
      %v2298 = vadd.f32 %v2296, %v2297
      %v2299 = vmax.f32 %v2199, %v2277
      %v2300 = vmax.f32 %v2200, %v2284
      %v2301 = vmax.f32 %v2201, %v2291
      %v2302 = vmax.f32 %v2202, %v2298
      %v2303 = vsub.f32 %v2199, %v2299
      %v2304 = vsub.f32 %v2200, %v2300
      %v2305 = vsub.f32 %v2201, %v2301
      %v2306 = vsub.f32 %v2202, %v2302
      %v2307 = vmul.f32 %v2303, 1.442695
      %v2308 = vpow.pop %v2307
      %v2309 = vmul.f32 %v2304, 1.442695
      %v2310 = vpow.pop %v2309
      %v2311 = vmul.f32 %v2305, 1.442695
      %v2312 = vpow.pop %v2311
      %v2313 = vmul.f32 %v2306, 1.442695
      %v2314 = vpow.pop %v2313
      %v2315 = vsub.f32 %v2277, %v2299
      %v2316 = vsub.f32 %v2284, %v2300
      %v2317 = vsub.f32 %v2291, %v2301
      %v2318 = vsub.f32 %v2298, %v2302
      %v2319 = vmul.f32 %v2315, 1.442695
      %v2320 = vpow.pop %v2319
      %v2321 = vmul.f32 %v2316, 1.442695
      %v2322 = vpow.pop %v2321
      %v2323 = vmul.f32 %v2317, 1.442695
      %v2324 = vpow.pop %v2323
      %v2325 = vmul.f32 %v2318, 1.442695
      %v2326 = vpow.pop %v2325
      %v2327 = vmul.f32 %v2231, %v2308
      %v2328 = vmul.f32 %v2232, %v2310
      %v2329 = vmul.f32 %v2233, %v2312
      %v2330 = vmul.f32 %v2234, %v2314
      %v2331 = vadd.f32 %v2327, %v2320
      %v2332 = vadd.f32 %v2328, %v2322
      %v2333 = vadd.f32 %v2329, %v2324
      %v2334 = vadd.f32 %v2330, %v2326
      %v2335 = vmul.f32 %v2239, %v2308
      %v2336 = vmul.f32 %v2240, %v2310
      %v2337 = vmul.f32 %v2241, %v2312
      %v2338 = vmul.f32 %v2242, %v2314
      %v2339 = vadd.f32 %v2335, %v2320
      %v2340 = vadd.f32 %v2336, %v2322
      %v2341 = vadd.f32 %v2337, %v2324
      %v2342 = vadd.f32 %v2338, %v2326
      %v2343 = vmul.f32 %v2247, %v2308
      %v2344 = vmul.f32 %v2248, %v2310
      %v2345 = vmul.f32 %v2249, %v2312
      %v2346 = vmul.f32 %v2250, %v2314
      %v2347 = vsub.f32 %v2343, %v2320
      %v2348 = vsub.f32 %v2344, %v2322
      %v2349 = vsub.f32 %v2345, %v2324
      %v2350 = vsub.f32 %v2346, %v2326
      %v2351 = vmul.f32 %v2255, %v2308
      %v2352 = vmul.f32 %v2256, %v2310
      %v2353 = vmul.f32 %v2257, %v2312
      %v2354 = vmul.f32 %v2258, %v2314
      %v2355 = vcombine.low %v411, %v410
      %v2356 = vcombine.low %v409, %v412
      %v2359 = vmul.f32 %v193, %v2355
      %v2360 = vmul.f32 %v194, %v2356
      %v2363 = vcombine.high %v2359, %v2359
      %v2364 = vcombine.high %v2360, %v2360
      %v2367 = vsel %vm234, %v2359, 0.0
      %v2368 = vrot.slane %v2367, 4
      %v2369 = vadd.f32 %v2367, %v2368
      %v2370 = vrot.slane %v2369, 2
      %v2371 = vadd.f32 %v2369, %v2370
      %v2372 = vrot.slane %v2371, 1
      %v2373 = vadd.f32 %v2371, %v2372
      %v2374 = vsel %vm234, %v2363, 0.0
      %v2375 = vrot.slane %v2374, 4
      %v2376 = vadd.f32 %v2374, %v2375
      %v2377 = vrot.slane %v2376, 2
      %v2378 = vadd.f32 %v2376, %v2377
      %v2379 = vrot.slane %v2378, 1
      %v2380 = vadd.f32 %v2378, %v2379
      %v2381 = vsel %vm234, %v2360, 0.0
      %v2382 = vrot.slane %v2381, 4
      %v2383 = vadd.f32 %v2381, %v2382
      %v2384 = vrot.slane %v2383, 2
      %v2385 = vadd.f32 %v2383, %v2384
      %v2386 = vrot.slane %v2385, 1
      %v2387 = vadd.f32 %v2385, %v2386
      %v2388 = vsel %vm234, %v2364, 0.0
      %v2389 = vrot.slane %v2388, 4
      %v2390 = vadd.f32 %v2388, %v2389
      %v2391 = vrot.slane %v2390, 2
      %v2392 = vadd.f32 %v2390, %v2391
      %v2393 = vrot.slane %v2392, 1
      %v2394 = vadd.f32 %v2392, %v2393
      %v2395 = vmax.f32 %v2299, %v2373
      %v2396 = vmax.f32 %v2300, %v2380
      %v2397 = vmax.f32 %v2301, %v2387
      %v2398 = vmax.f32 %v2302, %v2394
      %v2399 = vsub.f32 %v2299, %v2395
      %v2400 = vsub.f32 %v2300, %v2396
      %v2401 = vsub.f32 %v2301, %v2397
      %v2402 = vsub.f32 %v2302, %v2398
      %v2403 = vmul.f32 %v2399, 1.442695
      %v2404 = vpow.pop %v2403
      %v2405 = vmul.f32 %v2400, 1.442695
      %v2406 = vpow.pop %v2405
      %v2407 = vmul.f32 %v2401, 1.442695
      %v2408 = vpow.pop %v2407
      %v2409 = vmul.f32 %v2402, 1.442695
      %v2410 = vpow.pop %v2409
      %v2411 = vsub.f32 %v2373, %v2395
      %v2412 = vsub.f32 %v2380, %v2396
      %v2413 = vsub.f32 %v2387, %v2397
      %v2414 = vsub.f32 %v2394, %v2398
      %v2415 = vmul.f32 %v2411, 1.442695
      %v2416 = vpow.pop %v2415
      %v2417 = vmul.f32 %v2412, 1.442695
      %v2418 = vpow.pop %v2417
      %v2419 = vmul.f32 %v2413, 1.442695
      %v2420 = vpow.pop %v2419
      %v2421 = vmul.f32 %v2414, 1.442695
      %v2422 = vpow.pop %v2421
      %v2423 = vmul.f32 %v2331, %v2404
      %v2424 = vmul.f32 %v2332, %v2406
      %v2425 = vmul.f32 %v2333, %v2408
      %v2426 = vmul.f32 %v2334, %v2410
      %v2427 = vadd.f32 %v2423, %v2416
      %v2428 = vadd.f32 %v2424, %v2418
      %v2429 = vadd.f32 %v2425, %v2420
      %v2430 = vadd.f32 %v2426, %v2422
      %v2431 = vmul.f32 %v2339, %v2404
      %v2432 = vmul.f32 %v2340, %v2406
      %v2433 = vmul.f32 %v2341, %v2408
      %v2434 = vmul.f32 %v2342, %v2410
      %v2435 = vadd.f32 %v2431, %v2416
      %v2436 = vadd.f32 %v2432, %v2418
      %v2437 = vadd.f32 %v2433, %v2420
      %v2438 = vadd.f32 %v2434, %v2422
      %v2439 = vmul.f32 %v2347, %v2404
      %v2440 = vmul.f32 %v2348, %v2406
      %v2441 = vmul.f32 %v2349, %v2408
      %v2442 = vmul.f32 %v2350, %v2410
      %v2443 = vsub.f32 %v2439, %v2416
      %v2444 = vsub.f32 %v2440, %v2418
      %v2445 = vsub.f32 %v2441, %v2420
      %v2446 = vsub.f32 %v2442, %v2422
      %v2447 = vmul.f32 %v2351, %v2404
      %v2448 = vmul.f32 %v2352, %v2406
      %v2449 = vmul.f32 %v2353, %v2408
      %v2450 = vmul.f32 %v2354, %v2410
      %v2451 = vadd.f32 %v2447, %v2416
      %v2452 = vadd.f32 %v2448, %v2418
      %v2453 = vadd.f32 %v2449, %v2420
      %v2454 = vadd.f32 %v2450, %v2422
      %v2455 = vcombine.low %v520, %v519
      %v2456 = vcombine.low %v518, %v521
      %v2459 = vmul.f32 %v193, %v2455
      %v2460 = vmul.f32 %v194, %v2456
      %v2463 = vcombine.high %v2459, %v2459
      %v2464 = vcombine.high %v2460, %v2460
      %v2467 = vsel %vm234, %v2459, 0.0
      %v2468 = vrot.slane %v2467, 4
      %v2469 = vadd.f32 %v2467, %v2468
      %v2470 = vrot.slane %v2469, 2
      %v2471 = vadd.f32 %v2469, %v2470
      %v2472 = vrot.slane %v2471, 1
      %v2473 = vadd.f32 %v2471, %v2472
      %v2474 = vsel %vm234, %v2463, 0.0
      %v2475 = vrot.slane %v2474, 4
      %v2476 = vadd.f32 %v2474, %v2475
      %v2477 = vrot.slane %v2476, 2
      %v2478 = vadd.f32 %v2476, %v2477
      %v2479 = vrot.slane %v2478, 1
      %v2480 = vadd.f32 %v2478, %v2479
      %v2481 = vsel %vm234, %v2460, 0.0
      %v2482 = vrot.slane %v2481, 4
      %v2483 = vadd.f32 %v2481, %v2482
      %v2484 = vrot.slane %v2483, 2
      %v2485 = vadd.f32 %v2483, %v2484
      %v2486 = vrot.slane %v2485, 1
      %v2487 = vadd.f32 %v2485, %v2486
      %v2488 = vsel %vm234, %v2464, 0.0
      %v2489 = vrot.slane %v2488, 4
      %v2490 = vadd.f32 %v2488, %v2489
      %v2491 = vrot.slane %v2490, 2
      %v2492 = vadd.f32 %v2490, %v2491
      %v2493 = vrot.slane %v2492, 1
      %v2494 = vadd.f32 %v2492, %v2493
      %v2495 = vmax.f32 %v2395, %v2473
      %v2496 = vmax.f32 %v2396, %v2480
      %v2497 = vmax.f32 %v2397, %v2487
      %v2498 = vmax.f32 %v2398, %v2494
      %v2499 = vsub.f32 %v2395, %v2495
      %v2500 = vsub.f32 %v2396, %v2496
      %v2501 = vsub.f32 %v2397, %v2497
      %v2502 = vsub.f32 %v2398, %v2498
      %v2503 = vmul.f32 %v2499, 1.442695
      %v2504 = vpow.pop %v2503
      %v2505 = vmul.f32 %v2500, 1.442695
      %v2506 = vpow.pop %v2505
      %v2507 = vmul.f32 %v2501, 1.442695
      %v2508 = vpow.pop %v2507
      %v2509 = vmul.f32 %v2502, 1.442695
      %v2510 = vpow.pop %v2509
      %v2511 = vsub.f32 %v2473, %v2495
      %v2512 = vsub.f32 %v2480, %v2496
      %v2513 = vsub.f32 %v2487, %v2497
      %v2514 = vsub.f32 %v2494, %v2498
      %v2515 = vmul.f32 %v2511, 1.442695
      %v2516 = vpow.pop %v2515
      %v2517 = vmul.f32 %v2512, 1.442695
      %v2518 = vpow.pop %v2517
      %v2519 = vmul.f32 %v2513, 1.442695
      %v2520 = vpow.pop %v2519
      %v2521 = vmul.f32 %v2514, 1.442695
      %v2522 = vpow.pop %v2521
      %v2523 = vmul.f32 %v2427, %v2504
      %v2524 = vmul.f32 %v2428, %v2506
      %v2525 = vmul.f32 %v2429, %v2508
      %v2526 = vmul.f32 %v2430, %v2510
      %v2527 = vadd.f32 %v2523, %v2516
      %v2528 = vadd.f32 %v2524, %v2518
      %v2529 = vadd.f32 %v2525, %v2520
      %v2530 = vadd.f32 %v2526, %v2522
      %v2531 = vmul.f32 %v2435, %v2504
      %v2532 = vmul.f32 %v2436, %v2506
      %v2533 = vmul.f32 %v2437, %v2508
      %v2534 = vmul.f32 %v2438, %v2510
      %v2535 = vadd.f32 %v2531, %v2516
      %v2536 = vadd.f32 %v2532, %v2518
      %v2537 = vadd.f32 %v2533, %v2520
      %v2538 = vadd.f32 %v2534, %v2522
      %v2539 = vmul.f32 %v2443, %v2504
      %v2540 = vmul.f32 %v2444, %v2506
      %v2541 = vmul.f32 %v2445, %v2508
      %v2542 = vmul.f32 %v2446, %v2510
      %v2543 = vmul.f32 %v2451, %v2504
      %v2544 = vmul.f32 %v2452, %v2506
      %v2545 = vmul.f32 %v2453, %v2508
      %v2546 = vmul.f32 %v2454, %v2510
      %v2547 = vsub.f32 %v2543, %v2516
      %v2548 = vsub.f32 %v2544, %v2518
      %v2549 = vsub.f32 %v2545, %v2520
      %v2550 = vsub.f32 %v2546, %v2522
      %v2551 = vcombine.low %v629, %v628
      %v2552 = vcombine.low %v627, %v630
      %v2555 = vmul.f32 %v193, %v2551
      %v2556 = vmul.f32 %v194, %v2552
      %v2559 = vcombine.high %v2555, %v2555
      %v2560 = vcombine.high %v2556, %v2556
      %v2563 = vsel %vm234, %v2555, 0.0
      %v2564 = vrot.slane %v2563, 4
      %v2565 = vadd.f32 %v2563, %v2564
      %v2566 = vrot.slane %v2565, 2
      %v2567 = vadd.f32 %v2565, %v2566
      %v2568 = vrot.slane %v2567, 1
      %v2569 = vadd.f32 %v2567, %v2568
      %v2570 = vsel %vm234, %v2559, 0.0
      %v2571 = vrot.slane %v2570, 4
      %v2572 = vadd.f32 %v2570, %v2571
      %v2573 = vrot.slane %v2572, 2
      %v2574 = vadd.f32 %v2572, %v2573
      %v2575 = vrot.slane %v2574, 1
      %v2576 = vadd.f32 %v2574, %v2575
      %v2577 = vsel %vm234, %v2556, 0.0
      %v2578 = vrot.slane %v2577, 4
      %v2579 = vadd.f32 %v2577, %v2578
      %v2580 = vrot.slane %v2579, 2
      %v2581 = vadd.f32 %v2579, %v2580
      %v2582 = vrot.slane %v2581, 1
      %v2583 = vadd.f32 %v2581, %v2582
      %v2584 = vsel %vm234, %v2560, 0.0
      %v2585 = vrot.slane %v2584, 4
      %v2586 = vadd.f32 %v2584, %v2585
      %v2587 = vrot.slane %v2586, 2
      %v2588 = vadd.f32 %v2586, %v2587
      %v2589 = vrot.slane %v2588, 1
      %v2590 = vadd.f32 %v2588, %v2589
      %v2591 = vmax.f32 %v2495, %v2569
      %v2592 = vmax.f32 %v2496, %v2576
      %v2593 = vmax.f32 %v2497, %v2583
      %v2594 = vmax.f32 %v2498, %v2590
      %v2595 = vsub.f32 %v2495, %v2591
      %v2596 = vsub.f32 %v2496, %v2592
      %v2597 = vsub.f32 %v2497, %v2593
      %v2598 = vsub.f32 %v2498, %v2594
      %v2599 = vmul.f32 %v2595, 1.442695
      %v2600 = vpow.pop %v2599
      %v2601 = vmul.f32 %v2596, 1.442695
      %v2602 = vpow.pop %v2601
      %v2603 = vmul.f32 %v2597, 1.442695
      %v2604 = vpow.pop %v2603
      %v2605 = vmul.f32 %v2598, 1.442695
      %v2606 = vpow.pop %v2605
      %v2607 = vsub.f32 %v2569, %v2591
      %v2608 = vsub.f32 %v2576, %v2592
      %v2609 = vsub.f32 %v2583, %v2593
      %v2610 = vsub.f32 %v2590, %v2594
      %v2611 = vmul.f32 %v2607, 1.442695
      %v2612 = vpow.pop %v2611
      %v2613 = vmul.f32 %v2608, 1.442695
      %v2614 = vpow.pop %v2613
      %v2615 = vmul.f32 %v2609, 1.442695
      %v2616 = vpow.pop %v2615
      %v2617 = vmul.f32 %v2610, 1.442695
      %v2618 = vpow.pop %v2617
      %v2619 = vmul.f32 %v2527, %v2600
      %v2620 = vmul.f32 %v2528, %v2602
      %v2621 = vmul.f32 %v2529, %v2604
      %v2622 = vmul.f32 %v2530, %v2606
      %v2623 = vadd.f32 %v2619, %v2612
      %v2624 = vadd.f32 %v2620, %v2614
      %v2625 = vadd.f32 %v2621, %v2616
      %v2626 = vadd.f32 %v2622, %v2618
      %v2627 = vmul.f32 %v2535, %v2600
      %v2628 = vmul.f32 %v2536, %v2602
      %v2629 = vmul.f32 %v2537, %v2604
      %v2630 = vmul.f32 %v2538, %v2606
      %v2631 = vadd.f32 %v2627, %v2612
      %v2632 = vadd.f32 %v2628, %v2614
      %v2633 = vadd.f32 %v2629, %v2616
      %v2634 = vadd.f32 %v2630, %v2618
      %v2635 = vmul.f32 %v2539, %v2600
      %v2636 = vmul.f32 %v2540, %v2602
      %v2637 = vmul.f32 %v2541, %v2604
      %v2638 = vmul.f32 %v2542, %v2606
      %v2639 = vmul.f32 %v2547, %v2600
      %v2640 = vmul.f32 %v2548, %v2602
      %v2641 = vmul.f32 %v2549, %v2604
      %v2642 = vmul.f32 %v2550, %v2606
      %v2643 = vcombine.low %v738, %v737
      %v2644 = vcombine.low %v736, %v739
      %v2647 = vmul.f32 %v193, %v2643
      %v2648 = vmul.f32 %v194, %v2644
      %v2651 = vcombine.high %v2647, %v2647
      %v2652 = vcombine.high %v2648, %v2648
      %v2655 = vsel %vm234, %v2647, 0.0
      %v2656 = vrot.slane %v2655, 4
      %v2657 = vadd.f32 %v2655, %v2656
      %v2658 = vrot.slane %v2657, 2
      %v2659 = vadd.f32 %v2657, %v2658
      %v2660 = vrot.slane %v2659, 1
      %v2661 = vadd.f32 %v2659, %v2660
      %v2662 = vsel %vm234, %v2651, 0.0
      %v2663 = vrot.slane %v2662, 4
      %v2664 = vadd.f32 %v2662, %v2663
      %v2665 = vrot.slane %v2664, 2
      %v2666 = vadd.f32 %v2664, %v2665
      %v2667 = vrot.slane %v2666, 1
      %v2668 = vadd.f32 %v2666, %v2667
      %v2669 = vsel %vm234, %v2648, 0.0
      %v2670 = vrot.slane %v2669, 4
      %v2671 = vadd.f32 %v2669, %v2670
      %v2672 = vrot.slane %v2671, 2
      %v2673 = vadd.f32 %v2671, %v2672
      %v2674 = vrot.slane %v2673, 1
      %v2675 = vadd.f32 %v2673, %v2674
      %v2676 = vsel %vm234, %v2652, 0.0
      %v2677 = vrot.slane %v2676, 4
      %v2678 = vadd.f32 %v2676, %v2677
      %v2679 = vrot.slane %v2678, 2
      %v2680 = vadd.f32 %v2678, %v2679
      %v2681 = vrot.slane %v2680, 1
      %v2682 = vadd.f32 %v2680, %v2681
      %v2683 = vmax.f32 %v2591, %v2661
      %v2684 = vmax.f32 %v2592, %v2668
      %v2685 = vmax.f32 %v2593, %v2675
      %v2686 = vmax.f32 %v2594, %v2682
      %v2687 = vsub.f32 %v2591, %v2683
      %v2688 = vsub.f32 %v2592, %v2684
      %v2689 = vsub.f32 %v2593, %v2685
      %v2690 = vsub.f32 %v2594, %v2686
      %v2691 = vmul.f32 %v2687, 1.442695
      %v2692 = vpow.pop %v2691
      %v2693 = vmul.f32 %v2688, 1.442695
      %v2694 = vpow.pop %v2693
      %v2695 = vmul.f32 %v2689, 1.442695
      %v2696 = vpow.pop %v2695
      %v2697 = vmul.f32 %v2690, 1.442695
      %v2698 = vpow.pop %v2697
      %v2699 = vsub.f32 %v2661, %v2683
      %v2700 = vsub.f32 %v2668, %v2684
      %v2701 = vsub.f32 %v2675, %v2685
      %v2702 = vsub.f32 %v2682, %v2686
      %v2703 = vmul.f32 %v2699, 1.442695
      %v2704 = vpow.pop %v2703
      %v2705 = vmul.f32 %v2700, 1.442695
      %v2706 = vpow.pop %v2705
      %v2707 = vmul.f32 %v2701, 1.442695
      %v2708 = vpow.pop %v2707
      %v2709 = vmul.f32 %v2702, 1.442695
      %v2710 = vpow.pop %v2709
      %v2711 = vmul.f32 %v2623, %v2692
      %v2712 = vmul.f32 %v2624, %v2694
      %v2713 = vmul.f32 %v2625, %v2696
      %v2714 = vmul.f32 %v2626, %v2698
      %v2715 = vadd.f32 %v2711, %v2704
      %v2716 = vadd.f32 %v2712, %v2706
      %v2717 = vadd.f32 %v2713, %v2708
      %v2718 = vadd.f32 %v2714, %v2710
      %v2719 = vmul.f32 %v2631, %v2692
      %v2720 = vmul.f32 %v2632, %v2694
      %v2721 = vmul.f32 %v2633, %v2696
      %v2722 = vmul.f32 %v2634, %v2698
      %v2723 = vadd.f32 %v2719, %v2704
      %v2724 = vadd.f32 %v2720, %v2706
      %v2725 = vadd.f32 %v2721, %v2708
      %v2726 = vadd.f32 %v2722, %v2710
      %v2727 = vmul.f32 %v2635, %v2692
      %v2728 = vmul.f32 %v2636, %v2694
      %v2729 = vmul.f32 %v2637, %v2696
      %v2730 = vmul.f32 %v2638, %v2698
      %v2731 = vmul.f32 %v2639, %v2692
      %v2732 = vmul.f32 %v2640, %v2694
      %v2733 = vmul.f32 %v2641, %v2696
      %v2734 = vmul.f32 %v2642, %v2698
      %v2735 = vadd.f32 %v2731, %v2704
      %v2736 = vadd.f32 %v2732, %v2706
      %v2737 = vadd.f32 %v2733, %v2708
      %v2738 = vadd.f32 %v2734, %v2710
      %v2739 = vcombine.low %v851, %v850
      %v2740 = vcombine.low %v849, %v852
      %v2743 = vmul.f32 %v193, %v2739
      %v2744 = vmul.f32 %v194, %v2740
      %v2747 = vcombine.high %v2743, %v2743
      %v2748 = vcombine.high %v2744, %v2744
      %v2751 = vsel %vm234, %v2743, 0.0
      %v2752 = vrot.slane %v2751, 4
      %v2753 = vadd.f32 %v2751, %v2752
      %v2754 = vrot.slane %v2753, 2
      %v2755 = vadd.f32 %v2753, %v2754
      %v2756 = vrot.slane %v2755, 1
      %v2757 = vadd.f32 %v2755, %v2756
      %v2758 = vsel %vm234, %v2747, 0.0
      %v2759 = vrot.slane %v2758, 4
      %v2760 = vadd.f32 %v2758, %v2759
      %v2761 = vrot.slane %v2760, 2
      %v2762 = vadd.f32 %v2760, %v2761
      %v2763 = vrot.slane %v2762, 1
      %v2764 = vadd.f32 %v2762, %v2763
      %v2765 = vsel %vm234, %v2744, 0.0
      %v2766 = vrot.slane %v2765, 4
      %v2767 = vadd.f32 %v2765, %v2766
      %v2768 = vrot.slane %v2767, 2
      %v2769 = vadd.f32 %v2767, %v2768
      %v2770 = vrot.slane %v2769, 1
      %v2771 = vadd.f32 %v2769, %v2770
      %v2772 = vsel %vm234, %v2748, 0.0
      %v2773 = vrot.slane %v2772, 4
      %v2774 = vadd.f32 %v2772, %v2773
      %v2775 = vrot.slane %v2774, 2
      %v2776 = vadd.f32 %v2774, %v2775
      %v2777 = vrot.slane %v2776, 1
      %v2778 = vadd.f32 %v2776, %v2777
      %v2779 = vmax.f32 %v2683, %v2757
      %v2780 = vmax.f32 %v2684, %v2764
      %v2781 = vmax.f32 %v2685, %v2771
      %v2782 = vmax.f32 %v2686, %v2778
      %v2783 = vsub.f32 %v2683, %v2779
      %v2784 = vsub.f32 %v2684, %v2780
      %v2785 = vsub.f32 %v2685, %v2781
      %v2786 = vsub.f32 %v2686, %v2782
      %v2787 = vmul.f32 %v2783, 1.442695
      %v2788 = vpow.pop %v2787
      %v2789 = vmul.f32 %v2784, 1.442695
      %v2790 = vpow.pop %v2789
      %v2791 = vmul.f32 %v2785, 1.442695
      %v2792 = vpow.pop %v2791
      %v2793 = vmul.f32 %v2786, 1.442695
      %v2794 = vpow.pop %v2793
      %v2795 = vsub.f32 %v2757, %v2779
      %v2796 = vsub.f32 %v2764, %v2780
      %v2797 = vsub.f32 %v2771, %v2781
      %v2798 = vsub.f32 %v2778, %v2782
      %v2799 = vmul.f32 %v2795, 1.442695
      %v2800 = vpow.pop %v2799
      %v2801 = vmul.f32 %v2796, 1.442695
      %v2802 = vpow.pop %v2801
      %v2803 = vmul.f32 %v2797, 1.442695
      %v2804 = vpow.pop %v2803
      %v2805 = vmul.f32 %v2798, 1.442695
      %v2806 = vpow.pop %v2805
      %v2807 = vmul.f32 %v2715, %v2788
      %v2808 = vmul.f32 %v2716, %v2790
      %v2809 = vmul.f32 %v2717, %v2792
      %v2810 = vmul.f32 %v2718, %v2794
      %v2811 = vadd.f32 %v2807, %v2800
      %v2812 = vadd.f32 %v2808, %v2802
      %v2813 = vadd.f32 %v2809, %v2804
      %v2814 = vadd.f32 %v2810, %v2806
      %v2815 = vmul.f32 %v2723, %v2788
      %v2816 = vmul.f32 %v2724, %v2790
      %v2817 = vmul.f32 %v2725, %v2792
      %v2818 = vmul.f32 %v2726, %v2794
      %v2819 = vadd.f32 %v2815, %v2800
      %v2820 = vadd.f32 %v2816, %v2802
      %v2821 = vadd.f32 %v2817, %v2804
      %v2822 = vadd.f32 %v2818, %v2806
      %v2823 = vmul.f32 %v2727, %v2788
      %v2824 = vmul.f32 %v2728, %v2790
      %v2825 = vmul.f32 %v2729, %v2792
      %v2826 = vmul.f32 %v2730, %v2794
      %v2827 = vadd.f32 %v2823, %v2800
      %v2828 = vadd.f32 %v2824, %v2802
      %v2829 = vadd.f32 %v2825, %v2804
      %v2830 = vadd.f32 %v2826, %v2806
      %v2831 = vmul.f32 %v2735, %v2788
      %v2832 = vmul.f32 %v2736, %v2790
      %v2833 = vmul.f32 %v2737, %v2792
      %v2834 = vmul.f32 %v2738, %v2794
      %v2835 = vsub.f32 %v2831, %v2800
      %v2836 = vsub.f32 %v2832, %v2802
      %v2837 = vsub.f32 %v2833, %v2804
      %v2838 = vsub.f32 %v2834, %v2806
      %v2839 = vcombine.low %v968, %v967
      %v2840 = vcombine.low %v966, %v969
      %v2843 = vmul.f32 %v193, %v2839
      %v2844 = vmul.f32 %v194, %v2840
      %v2847 = vcombine.high %v2843, %v2843
      %v2848 = vcombine.high %v2844, %v2844
      %v2851 = vsel %vm234, %v2843, 0.0
      %v2852 = vrot.slane %v2851, 4
      %v2853 = vadd.f32 %v2851, %v2852
      %v2854 = vrot.slane %v2853, 2
      %v2855 = vadd.f32 %v2853, %v2854
      %v2856 = vrot.slane %v2855, 1
      %v2857 = vadd.f32 %v2855, %v2856
      %v2858 = vsel %vm234, %v2847, 0.0
      %v2859 = vrot.slane %v2858, 4
      %v2860 = vadd.f32 %v2858, %v2859
      %v2861 = vrot.slane %v2860, 2
      %v2862 = vadd.f32 %v2860, %v2861
      %v2863 = vrot.slane %v2862, 1
      %v2864 = vadd.f32 %v2862, %v2863
      %v2865 = vsel %vm234, %v2844, 0.0
      %v2866 = vrot.slane %v2865, 4
      %v2867 = vadd.f32 %v2865, %v2866
      %v2868 = vrot.slane %v2867, 2
      %v2869 = vadd.f32 %v2867, %v2868
      %v2870 = vrot.slane %v2869, 1
      %v2871 = vadd.f32 %v2869, %v2870
      %v2872 = vsel %vm234, %v2848, 0.0
      %v2873 = vrot.slane %v2872, 4
      %v2874 = vadd.f32 %v2872, %v2873
      %v2875 = vrot.slane %v2874, 2
      %v2876 = vadd.f32 %v2874, %v2875
      %v2877 = vrot.slane %v2876, 1
      %v2878 = vadd.f32 %v2876, %v2877
      %v2879 = vmax.f32 %v2779, %v2857
      %v2880 = vmax.f32 %v2780, %v2864
      %v2881 = vmax.f32 %v2781, %v2871
      %v2882 = vmax.f32 %v2782, %v2878
      %v2883 = vsub.f32 %v2779, %v2879
      %v2884 = vsub.f32 %v2780, %v2880
      %v2885 = vsub.f32 %v2781, %v2881
      %v2886 = vsub.f32 %v2782, %v2882
      %v2887 = vmul.f32 %v2883, 1.442695
      %v2888 = vpow.pop %v2887
      %v2889 = vmul.f32 %v2884, 1.442695
      %v2890 = vpow.pop %v2889
      %v2891 = vmul.f32 %v2885, 1.442695
      %v2892 = vpow.pop %v2891
      %v2893 = vmul.f32 %v2886, 1.442695
      %v2894 = vpow.pop %v2893
      %v2895 = vsub.f32 %v2857, %v2879
      %v2896 = vsub.f32 %v2864, %v2880
      %v2897 = vsub.f32 %v2871, %v2881
      %v2898 = vsub.f32 %v2878, %v2882
      %v2899 = vmul.f32 %v2895, 1.442695
      %v2900 = vpow.pop %v2899
      %v2901 = vmul.f32 %v2896, 1.442695
      %v2902 = vpow.pop %v2901
      %v2903 = vmul.f32 %v2897, 1.442695
      %v2904 = vpow.pop %v2903
      %v2905 = vmul.f32 %v2898, 1.442695
      %v2906 = vpow.pop %v2905
      %v2907 = vmul.f32 %v2811, %v2888
      %v2908 = vmul.f32 %v2812, %v2890
      %v2909 = vmul.f32 %v2813, %v2892
      %v2910 = vmul.f32 %v2814, %v2894
      %v2911 = vadd.f32 %v2907, %v2900
      %v2912 = vadd.f32 %v2908, %v2902
      %v2913 = vadd.f32 %v2909, %v2904
      %v2914 = vadd.f32 %v2910, %v2906
      %v2915 = vmul.f32 %v2819, %v2888
      %v2916 = vmul.f32 %v2820, %v2890
      %v2917 = vmul.f32 %v2821, %v2892
      %v2918 = vmul.f32 %v2822, %v2894
      %v2919 = vadd.f32 %v2915, %v2900
      %v2920 = vadd.f32 %v2916, %v2902
      %v2921 = vadd.f32 %v2917, %v2904
      %v2922 = vadd.f32 %v2918, %v2906
      %v2923 = vmul.f32 %v2827, %v2888
      %v2924 = vmul.f32 %v2828, %v2890
      %v2925 = vmul.f32 %v2829, %v2892
      %v2926 = vmul.f32 %v2830, %v2894
      %v2927 = vadd.f32 %v2923, %v2900
      %v2928 = vadd.f32 %v2924, %v2902
      %v2929 = vadd.f32 %v2925, %v2904
      %v2930 = vadd.f32 %v2926, %v2906
      %v2931 = vmul.f32 %v2835, %v2888
      %v2932 = vmul.f32 %v2836, %v2890
      %v2933 = vmul.f32 %v2837, %v2892
      %v2934 = vmul.f32 %v2838, %v2894
      %v2935 = vcombine.low %v1081, %v1080
      %v2936 = vcombine.low %v1079, %v1082
      %v2939 = vmul.f32 %v193, %v2935
      %v2940 = vmul.f32 %v194, %v2936
      %v2943 = vcombine.high %v2939, %v2939
      %v2944 = vcombine.high %v2940, %v2940
      %v2947 = vsel %vm234, %v2939, 0.0
      %v2948 = vrot.slane %v2947, 4
      %v2949 = vadd.f32 %v2947, %v2948
      %v2950 = vrot.slane %v2949, 2
      %v2951 = vadd.f32 %v2949, %v2950
      %v2952 = vrot.slane %v2951, 1
      %v2953 = vadd.f32 %v2951, %v2952
      %v2954 = vsel %vm234, %v2943, 0.0
      %v2955 = vrot.slane %v2954, 4
      %v2956 = vadd.f32 %v2954, %v2955
      %v2957 = vrot.slane %v2956, 2
      %v2958 = vadd.f32 %v2956, %v2957
      %v2959 = vrot.slane %v2958, 1
      %v2960 = vadd.f32 %v2958, %v2959
      %v2961 = vsel %vm234, %v2940, 0.0
      %v2962 = vrot.slane %v2961, 4
      %v2963 = vadd.f32 %v2961, %v2962
      %v2964 = vrot.slane %v2963, 2
      %v2965 = vadd.f32 %v2963, %v2964
      %v2966 = vrot.slane %v2965, 1
      %v2967 = vadd.f32 %v2965, %v2966
      %v2968 = vsel %vm234, %v2944, 0.0
      %v2969 = vrot.slane %v2968, 4
      %v2970 = vadd.f32 %v2968, %v2969
      %v2971 = vrot.slane %v2970, 2
      %v2972 = vadd.f32 %v2970, %v2971
      %v2973 = vrot.slane %v2972, 1
      %v2974 = vadd.f32 %v2972, %v2973
      %v2975 = vmax.f32 %v2879, %v2953
      %v2976 = vmax.f32 %v2880, %v2960
      %v2977 = vmax.f32 %v2881, %v2967
      %v2978 = vmax.f32 %v2882, %v2974
      %v2979 = vsub.f32 %v2879, %v2975
      %v2980 = vsub.f32 %v2880, %v2976
      %v2981 = vsub.f32 %v2881, %v2977
      %v2982 = vsub.f32 %v2882, %v2978
      %v2983 = vmul.f32 %v2979, 1.442695
      %v2984 = vpow.pop %v2983
      %v2985 = vmul.f32 %v2980, 1.442695
      %v2986 = vpow.pop %v2985
      %v2987 = vmul.f32 %v2981, 1.442695
      %v2988 = vpow.pop %v2987
      %v2989 = vmul.f32 %v2982, 1.442695
      %v2990 = vpow.pop %v2989
      %v2991 = vsub.f32 %v2953, %v2975
      %v2992 = vsub.f32 %v2960, %v2976
      %v2993 = vsub.f32 %v2967, %v2977
      %v2994 = vsub.f32 %v2974, %v2978
      %v2995 = vmul.f32 %v2991, 1.442695
      %v2996 = vpow.pop %v2995
      %v2997 = vmul.f32 %v2992, 1.442695
      %v2998 = vpow.pop %v2997
      %v2999 = vmul.f32 %v2993, 1.442695
      %v3000 = vpow.pop %v2999
      %v3001 = vmul.f32 %v2994, 1.442695
      %v3002 = vpow.pop %v3001
      %v3003 = vmul.f32 %v2911, %v2984
      %v3004 = vmul.f32 %v2912, %v2986
      %v3005 = vmul.f32 %v2913, %v2988
      %v3006 = vmul.f32 %v2914, %v2990
      %v3007 = vadd.f32 %v3003, %v2996
      %v3008 = vadd.f32 %v3004, %v2998
      %v3009 = vadd.f32 %v3005, %v3000
      %v3010 = vadd.f32 %v3006, %v3002
      %v3011 = vmul.f32 %v2919, %v2984
      %v3012 = vmul.f32 %v2920, %v2986
      %v3013 = vmul.f32 %v2921, %v2988
      %v3014 = vmul.f32 %v2922, %v2990
      %v3015 = vadd.f32 %v3011, %v2996
      %v3016 = vadd.f32 %v3012, %v2998
      %v3017 = vadd.f32 %v3013, %v3000
      %v3018 = vadd.f32 %v3014, %v3002
      %v3019 = vmul.f32 %v2927, %v2984
      %v3020 = vmul.f32 %v2928, %v2986
      %v3021 = vmul.f32 %v2929, %v2988
      %v3022 = vmul.f32 %v2930, %v2990
      %v3023 = vadd.f32 %v3019, %v2996
      %v3024 = vadd.f32 %v3020, %v2998
      %v3025 = vadd.f32 %v3021, %v3000
      %v3026 = vadd.f32 %v3022, %v3002
      %v3027 = vmul.f32 %v2931, %v2984
      %v3028 = vmul.f32 %v2932, %v2986
      %v3029 = vmul.f32 %v2933, %v2988
      %v3030 = vmul.f32 %v2934, %v2990
      %v3031 = vadd.f32 %v3027, %v2996
      %v3032 = vadd.f32 %v3028, %v2998
      %v3033 = vadd.f32 %v3029, %v3000
      %v3034 = vadd.f32 %v3030, %v3002
      %v3035 = vrcp.pop %v3007
      %v3036 = vrcp.pop %v3008
      %v3037 = vrcp.pop %v3009
      %v3038 = vrcp.pop %v3010
      %v3039 = vld [vmem:[%s2] sm:$0xf]
      %v3041 = vlaneseq
      %v3042 = vshrl.u32 %v3041, 7
      %v3043 = vsub.s32 0, %v3042
      %v3044 = vrot.slane %v3039, %v3043
      %v3045 = vlaneseq
      %v3046 = vshrl.u32 %v3045, 7
      %v3047 = vsub.s32 1, %v3046
      %v3048 = vrot.slane %v3039, %v3047
      %v3049 = vlaneseq
      %v3050 = vshrl.u32 %v3049, 7
      %v3051 = vsub.s32 2, %v3050
      %v3052 = vrot.slane %v3039, %v3051
      %v3053 = vlaneseq
      %v3054 = vshrl.u32 %v3053, 7
      %v3055 = vsub.s32 3, %v3054
      %v3056 = vrot.slane %v3039, %v3055
      %v3061 = vmul.f32 %v3035, %v3044
      %v3062 = vmul.f32 %v3036, %v3048
      %v3063 = vmul.f32 %v3037, %v3052
      %v3064 = vmul.f32 %v3038, %v3056
      %v3065 = vmul.f32 %v3015, %v3061
      %v3066 = vmul.f32 %v3016, %v3062
      %v3067 = vmul.f32 %v3017, %v3063
      %v3068 = vmul.f32 %v3018, %v3064
      %v3073 = vcombine.low %v3065, %v3066
      %v3074 = vcombine.low %v3067, %v3068
      %v3076 = vunpack.c.l.s4 1966171168
      %v3077 = vunpack.c.0.s8 %v3076
      %v3078 = vlaneseq
      %v3079 = vshrl.u32 %v3078, 7
      %v3080 = vsub.s32 %v3077, %v3079
      %v3081 = vrot.slane %v3073, %v3080
      %v3083 = vunpack.c.l.s4 1966171168
      %v3084 = vunpack.c.0.s8 %v3083
      %v3085 = vlaneseq
      %v3086 = vshrl.u32 %v3085, 7
      %v3087 = vsub.s32 %v3084, %v3086
      %v3088 = vrot.slane %v3074, %v3087
      %v3089 = vcombine.low %v3081, %v3088
      %v3091 = vunpack.c.l.s4 1966171168
      %v3092 = vunpack.c.0.s8 %v3091
      %v3093 = vlaneseq
      %v3094 = vshrl.u32 %v3093, 7
      %v3095 = vsub.s32 %v3092, %v3094
      %v3096 = vrot.slane %v3089, %v3095
      %v3098 = vlaneseq
      %vm3099 = vcmp.ge.s32.totalorder %v3098, 0
      %vm3100 = vcmp.lt.s32.totalorder %v3098, 512
      %vm3101 = vmand %vm3099, %vm3100
      %3102 = vst.msk [vmem:[%s190] ss:$4 sm:$0xf] %vm3101, %v3096
      %v3103 = vmul.f32 %v3023, %v3061
      %v3104 = vmul.f32 %v3024, %v3062
      %v3105 = vmul.f32 %v3025, %v3063
      %v3106 = vmul.f32 %v3026, %v3064
      %v3111 = vcombine.low %v3103, %v3104
      %v3112 = vcombine.low %v3105, %v3106
      %v3114 = vunpack.c.l.s4 1966171168
      %v3115 = vunpack.c.0.s8 %v3114
      %v3116 = vlaneseq
      %v3117 = vshrl.u32 %v3116, 7
      %v3118 = vsub.s32 %v3115, %v3117
      %v3119 = vrot.slane %v3111, %v3118
      %v3121 = vunpack.c.l.s4 1966171168
      %v3122 = vunpack.c.0.s8 %v3121
      %v3123 = vlaneseq
      %v3124 = vshrl.u32 %v3123, 7
      %v3125 = vsub.s32 %v3122, %v3124
      %v3126 = vrot.slane %v3112, %v3125
      %v3127 = vcombine.low %v3119, %v3126
      %v3129 = vunpack.c.l.s4 1966171168
      %v3130 = vunpack.c.0.s8 %v3129
      %v3131 = vlaneseq
      %v3132 = vshrl.u32 %v3131, 7
      %v3133 = vsub.s32 %v3130, %v3132
      %v3134 = vrot.slane %v3127, %v3133
      %s3136 = scalar_lea.vmem %s190, 1
      %3137 = vst.msk [vmem:[%s3136] ss:$4 sm:$0xf] %vm3101, %v3134
      %v3138 = vmul.f32 %v3031, %v3061
      %v3139 = vmul.f32 %v3032, %v3062
      %v3140 = vmul.f32 %v3033, %v3063
      %v3141 = vmul.f32 %v3034, %v3064
      %v3146 = vcombine.low %v3138, %v3139
      %v3147 = vcombine.low %v3140, %v3141
      %v3149 = vunpack.c.l.s4 1966171168
      %v3150 = vunpack.c.0.s8 %v3149
      %v3151 = vlaneseq
      %v3152 = vshrl.u32 %v3151, 7
      %v3153 = vsub.s32 %v3150, %v3152
      %v3154 = vrot.slane %v3146, %v3153
      %v3156 = vunpack.c.l.s4 1966171168
      %v3157 = vunpack.c.0.s8 %v3156
      %v3158 = vlaneseq
      %v3159 = vshrl.u32 %v3158, 7
      %v3160 = vsub.s32 %v3157, %v3159
      %v3161 = vrot.slane %v3147, %v3160
      %v3162 = vcombine.low %v3154, %v3161
      %v3164 = vunpack.c.l.s4 1966171168
      %v3165 = vunpack.c.0.s8 %v3164
      %v3166 = vlaneseq
      %v3167 = vshrl.u32 %v3166, 7
      %v3168 = vsub.s32 %v3165, %v3167
      %v3169 = vrot.slane %v3162, %v3168
      %s3171 = scalar_lea.vmem %s190, 2
      %3172 = vst.msk [vmem:[%s3171] ss:$4 sm:$0xf] %vm3101, %v3169
      %p3173 = scmp.lt.s32.totalorder %s14, 1
      %s3174 = scalar_select %p3173, %s14, 1
      %s3175 = smul.addr %s3174, 4
      %s3176 = smul.addr %s3175, 4
      %s3177 = scalar_lea.vmem %s3, %s3176
      // Predicated region
      $region33: #{flownet_forward.1} parent=31 // pred_check
        %p3178 = pneg %p105
      $region34: #{flownet_forward.1} parent=31 // pred_check_branch
        %3180 = sbr.rel (%p3178) target = $region36
      $region35: #{flownet_forward.1} parent=31 // pred_region
        _
      $region36: #{flownet_forward.1} parent=31 // pred_fallthru
        _
    $region32: #{flownet_forward.1} parent=5 // pred_fallthru
      _
    %p3181 = scmp.le.s32.totalorder 2, %s9
    // Predicated region
    $region37: #{flownet_forward.1} parent=5 // pred_check
      %p3182 = pneg %p3181
    $region38: #{flownet_forward.1} parent=5 // pred_check_branch
      %3184 = sbr.rel (%p3182) target = $region40
    $region39: #{flownet_forward.1} parent=5 // pred_region
      %s3185 = ssub.s32 %s9, 2
      // Predicated region
      $region41: #{flownet_forward.1} parent=39 // pred_check
        %p3186 = pneg %p111
      $region42: #{flownet_forward.1} parent=39 // pred_check_branch
        %3188 = sbr.rel (%p3186) target = $region44
      $region43: #{flownet_forward.1} parent=39 // pred_region
        %p3189 = scmp.lt.s32.totalorder %s15, 1
        %s3190 = scalar_select %p3189, %s15, 1
        %s3191 = smul.addr %s3190, 4
        %s3192 = smul.addr %s3191, 4
        %s3193 = scalar_lea.vmem %s3, %s3192
      $region44: #{flownet_forward.1} parent=39 // pred_fallthru
        _
    $region40: #{flownet_forward.1} parent=5 // pred_fallthru
      _
  $region6: #{flownet_forward.1} parent=0 // loop_footer
    %s13 = sadd.s32 1, %s9
  $region7: #{flownet_forward.1} parent=0 // loop_footer_branch
    %8 = sbr.rel target = $region3
  $region8: #{flownet_forward.1} parent=0 // loop_exit
    _

</llo_original>
